<compile_context>
chip_gen: v7x
topology: tpu7x:2x2x1
jax: 0.10.0
libtpu: 0.0.40
codegen_flags: <defaults>
</compile_context>

<pallas_src>
import numpy as np

import jax
import jax.numpy as jnp
from jax.experimental import pallas as pl
from jax.experimental.pallas import tpu as pltpu

KERNEL_SIZE = 5
LAYERS_NEURONS = [120, 84, 10]
PADDING_VALUE = 2
STRIDE_VALUE = 1

TB_MAX = 32  # max images per grid step (keeps VMEM ~7 MiB/step on every gen)


# ---------------------------------------------------------------------------
# The fused kernel (built per batch-tile size tb).
# Activation lane layouts:
#   conv1 / pool1-col : lane = w*6  + c   (168 / 84 lanes)
#   conv2 / pool2-col : lane = w*16 + c   (160 / 80 lanes)
# ---------------------------------------------------------------------------
def _make_kernel(tb):
    r1 = tb * 32          # stacked padded-image rows == conv1 / pool1-col rows
    r2 = tb * 16          # conv2 / pool2-col rows
    f32 = jnp.float32
    bf16 = jnp.bfloat16

    def kernel(x_ref, t1_ref, b1_ref, t2_ref, b2_ref, p1c_ref, p2c_ref,
               w1_ref, fb1_ref, w2_ref, fb2_ref, w3_ref, fb3_ref,
               o_ref, xs_ref, rs1_ref, rs2_ref):
        # Stage the (tb*32, 32) padded image stack into a scratch with 8 rows
        # of zero slack so every dy-shifted window stays in bounds.
        xs_ref[pl.ds(0, r1), :] = x_ref[...]
        xs_ref[pl.ds(r1, 8), :] = jnp.zeros((8, 32), f32)

        # conv1 (+bias, ReLU): 5 row-shifted MXU matmuls, batched over images.
        acc1 = jnp.zeros((r1, 168), f32)
        for dy in range(KERNEL_SIZE):
            lhs = xs_ref[pl.ds(dy, r1), :].astype(bf16)
            acc1 = acc1 + jnp.dot(lhs, t1_ref[dy], preferred_element_type=f32)
        a1 = jnp.maximum(acc1 + b1_ref[...], 0.0).astype(bf16)       # (r1, 168)

        # pool1, column half: exact 0/1 selection matmuls + elementwise max.
        cp = jnp.maximum(jnp.dot(a1, p1c_ref[0], preferred_element_type=f32),
                         jnp.dot(a1, p1c_ref[1], preferred_element_type=f32))
        rs1_ref[pl.ds(0, r1), :] = cp                                 # (r1, 84)
        rs1_ref[pl.ds(r1, 8), :] = jnp.zeros((8, 84), f32)

        # conv2 (+bias, ReLU); pool1's row half is folded into the strided LHS
        # reads (max over even/odd conv1 rows, stride-2 along sublanes).
        acc2 = jnp.zeros((r2, 160), f32)
        for dy in range(KERNEL_SIZE):
            even = rs1_ref[pl.ds(2 * dy, r2, stride=2), :]
            odd = rs1_ref[pl.ds(2 * dy + 1, r2, stride=2), :]
            lhs = jnp.maximum(even, odd).astype(bf16)
            acc2 = acc2 + jnp.dot(lhs, t2_ref[dy], preferred_element_type=f32)
        a2 = jnp.maximum(acc2 + b2_ref[...], 0.0).astype(bf16)       # (r2, 160)

        # pool2, column half.
        cq = jnp.maximum(jnp.dot(a2, p2c_ref[0], preferred_element_type=f32),
                         jnp.dot(a2, p2c_ref[1], preferred_element_type=f32))
        rs2_ref[...] = cq                                             # (r2, 80)

        # pool2 row half + NCHW flatten + fc1, fused: for each of the 5 valid
        # spatial rows, a stride-16 sublane read gathers one (tb, 80) slab
        # (one row per image) which hits the matching pre-permuted fc1 block.
        h = jnp.zeros((tb, 128), f32)
        for i in range(KERNEL_SIZE):
            even = rs2_ref[pl.ds(2 * i, tb, stride=16), :]
            odd = rs2_ref[pl.ds(2 * i + 1, tb, stride=16), :]
            slab = jnp.maximum(even, odd).astype(bf16)                # (tb, 80)
            h = h + jnp.dot(slab, w1_ref[i], preferred_element_type=f32)
        h = jnp.maximum(h + fb1_ref[...], 0.0)

        # fc2 / fc3: bf16 operands, f32 accumulation, lane-dense N = 128.
        h = jnp.maximum(jnp.dot(h.astype(bf16), w2_ref[...],
                                preferred_element_type=f32) + fb2_ref[...], 0.0)
        h = jnp.dot(h.astype(bf16), w3_ref[...],
                    preferred_element_type=f32) + fb3_ref[...]
        o_ref[...] = h.astype(o_ref.dtype)

    return kernel


# ---------------------------------------------------------------------------
# One-time parameter preparation: banded conv matrices, pool selection
# matrices, per-row fc1 blocks (flatten permutation absorbed), padded fc2/fc3.
# All MXU operands are bf16; biases stay f32.
# ---------------------------------------------------------------------------
def prepare_kernel_params(params):
    f32, bf16 = jnp.float32, jnp.bfloat16
    w1 = np.asarray(params['conv1_w'], np.float32)          # (6, 1, 5, 5)
    w2 = np.asarray(params['conv2_w'], np.float32)          # (16, 6, 5, 5)

    # conv1 banded weights: t1[dy][x, w*6 + co] = w1[co, 0, dy, x - w].
    t1 = np.zeros((KERNEL_SIZE, 32, 28 * 6), np.float32)
    for dy in range(KERNEL_SIZE):
        for w in range(28):
            for dx in range(KERNEL_SIZE):
                t1[dy, w + dx, w * 6:(w + 1) * 6] = w1[:, 0, dy, dx]

    # conv2 banded weights: t2[dy][w*6 + ci, wo*16 + co] = w2[co, ci, dy, w-wo].
    t2 = np.zeros((KERNEL_SIZE, 14 * 6, 10 * 16), np.float32)
    for dy in range(KERNEL_SIZE):
        for wo in range(10):
            for dx in range(KERNEL_SIZE):
                w = wo + dx
                t2[dy, w * 6:(w + 1) * 6, wo * 16:(wo + 1) * 16] = w2[:, :, dy, dx].T

    # Per-lane conv biases (lane layout w*C + c).
    b1row = np.tile(np.asarray(params['conv1_b'], np.float32), 28).reshape(1, 168)
    b2row = np.tile(np.asarray(params['conv2_b'], np.float32), 10).reshape(1, 160)

    # Exact 0/1 selection matrices for the column half of each 2x2 max pool.
    def col_sel(w_out, c):
        sel = np.zeros((2, 2 * w_out * c, w_out * c), np.float32)
        for par in range(2):
            for w in range(w_out):
                for ch in range(c):
                    sel[par, (2 * w + par) * c + ch, w * c + ch] = 1.0
        return sel

    p1c = col_sel(14, 6)                                     # (2, 168, 84)
    p2c = col_sel(5, 16)                                     # (2, 160, 80)

    # fc1 split into 5 per-spatial-row blocks matching the pooled (w*16 + c)
    # lane layout (torch flatten index = c*25 + i*5 + j); N padded to 128.
    fc1 = np.asarray(params['fc1_w'], np.float32)            # (120, 400)
    w1blk = np.zeros((KERNEL_SIZE, 80, 128), np.float32)
    for i in range(KERNEL_SIZE):
        for j in range(KERNEL_SIZE):
            for c in range(16):
                w1blk[i, j * 16 + c, :120] = fc1[:, c * 25 + i * 5 + j]
    fb1 = np.zeros((1, 128), np.float32)
    fb1[0, :120] = np.asarray(params['fc1_b'], np.float32)

    # fc2 / fc3: pre-transposed, zero-padded to a lane-dense 128x128.
    w2p = np.zeros((128, 128), np.float32)
    w2p[:120, :84] = np.asarray(params['fc2_w'], np.float32).T
    fb2 = np.zeros((1, 128), np.float32)
    fb2[0, :84] = np.asarray(params['fc2_b'], np.float32)
    w3p = np.zeros((128, 128), np.float32)
    w3p[:84, :10] = np.asarray(params['fc3_w'], np.float32).T
    fb3 = np.zeros((1, 128), np.float32)
    fb3[0, :10] = np.asarray(params['fc3_b'], np.float32)

    return (jnp.asarray(t1, bf16), jnp.asarray(b1row, f32),
            jnp.asarray(t2, bf16), jnp.asarray(b2row, f32),
            jnp.asarray(p1c, bf16), jnp.asarray(p2c, bf16),
            jnp.asarray(w1blk, bf16), jnp.asarray(fb1, f32),
            jnp.asarray(w2p, bf16), jnp.asarray(fb2, f32),
            jnp.asarray(w3p, bf16), jnp.asarray(fb3, f32))


# ---------------------------------------------------------------------------
# Forward wrapper: one pallas_call over batch tiles.
# ---------------------------------------------------------------------------
def _pick_tb(batch):
    bp8 = ((batch + 7) // 8) * 8
    tb = min(TB_MAX, bp8)
    if tb == bp8 and bp8 >= 16:       # keep >= 2 grid steps for v7x's 2 cores
        tb = ((bp8 // 2 + 7) // 8) * 8
    return tb


def cnn_forward(consts, x_nchw):
    B = x_nchw.shape[0]
    tb = _pick_tb(B)
    bp = ((B + tb - 1) // tb) * tb
    r1 = tb * 32

    # Pad batch to a tile multiple and the image to 32x32 (conv1 padding=2),
    # then view it as a lane-dense (bp*32, 32) stack of padded image rows.
    x = x_nchw[:, 0].astype(jnp.float32)                      # Cin = 1
    x = jnp.pad(x, ((0, bp - B), (PADDING_VALUE, PADDING_VALUE),
                    (PADDING_VALUE, PADDING_VALUE)))
    x = x.reshape(bp * 32, 32)
    # TODO(synk): the spatial zero-pad could be done in-kernel from the raw
    # (tb, 28, 28) block to save one small HBM round trip of the input.

    def const_spec(a):
        n = a.ndim
        return pl.BlockSpec(a.shape, lambda i, n=n: (0,) * n)

    out = pl.pallas_call(
        _make_kernel(tb),
        out_shape=jax.ShapeDtypeStruct((bp, 128), jnp.float32),
        grid=(bp // tb,),
        in_specs=[pl.BlockSpec((r1, 32), lambda i: (i, 0))] +
                 [const_spec(a) for a in consts],
        out_specs=pl.BlockSpec((tb, 128), lambda i: (i, 0)),
        scratch_shapes=[pltpu.VMEM((r1 + 8, 32), jnp.float32),   # padded images
                        pltpu.VMEM((r1 + 8, 84), jnp.float32),   # pool1-col out
                        pltpu.VMEM((tb * 16, 80), jnp.float32)], # pool2-col out
        compiler_params=pltpu.CompilerParams(
            dimension_semantics=("parallel",)),
    )(x, *consts)
    return out[:B, :LAYERS_NEURONS[2]]


# ---------------------------------------------------------------------------
# Deterministic parameter init (PyTorch shapes, uniform(+-1/sqrt(fan_in)))
# ---------------------------------------------------------------------------
def init_params(key):
    def uinit(k, shape, fan_in):
        bound = 1.0 / float(fan_in) ** 0.5
        return jax.random.uniform(k, shape, jnp.float32, -bound, bound)

    keys = jax.random.split(key, 10)
    fc_in = 16 * KERNEL_SIZE * KERNEL_SIZE
    return {
        'conv1_w': uinit(keys[0], (6, 1, KERNEL_SIZE, KERNEL_SIZE), KERNEL_SIZE * KERNEL_SIZE),
        'conv1_b': uinit(keys[1], (6,), KERNEL_SIZE * KERNEL_SIZE),
        'conv2_w': uinit(keys[2], (16, 6, KERNEL_SIZE, KERNEL_SIZE), 6 * KERNEL_SIZE * KERNEL_SIZE),
        'conv2_b': uinit(keys[3], (16,), 6 * KERNEL_SIZE * KERNEL_SIZE),
        'fc1_w': uinit(keys[4], (LAYERS_NEURONS[0], fc_in), fc_in),
        'fc1_b': uinit(keys[5], (LAYERS_NEURONS[0],), fc_in),
        'fc2_w': uinit(keys[6], (LAYERS_NEURONS[1], LAYERS_NEURONS[0]), LAYERS_NEURONS[0]),
        'fc2_b': uinit(keys[7], (LAYERS_NEURONS[1],), LAYERS_NEURONS[0]),
        'fc3_w': uinit(keys[8], (LAYERS_NEURONS[2], LAYERS_NEURONS[1]), LAYERS_NEURONS[1]),
        'fc3_b': uinit(keys[9], (LAYERS_NEURONS[2],), LAYERS_NEURONS[1]),
    }


# ---------------------------------------------------------------------------
# Pure-JAX reference (correctness check only)
# ---------------------------------------------------------------------------
def cnn_reference(params, x_nchw):
    def conv(x, w, b, pad):
        y = jax.lax.conv_general_dilated(
            x, w, (STRIDE_VALUE, STRIDE_VALUE), [(pad, pad), (pad, pad)],
            dimension_numbers=('NCHW', 'OIHW', 'NCHW'))
        return jax.nn.relu(y + b[None, :, None, None])

    def pool(x):
        return jax.lax.reduce_window(x, -jnp.inf, jax.lax.max,
                                     (1, 1, 2, 2), (1, 1, 2, 2), 'VALID')

    x = pool(conv(x_nchw, params['conv1_w'], params['conv1_b'], PADDING_VALUE))
    x = pool(conv(x, params['conv2_w'], params['conv2_b'], 0))
    x = x.reshape(x.shape[0], -1)
    x = jax.nn.relu(x @ params['fc1_w'].T + params['fc1_b'])
    x = jax.nn.relu(x @ params['fc2_w'].T + params['fc2_b'])
    return x @ params['fc3_w'].T + params['fc3_b']


if __name__ == "__main__":
    key = jax.random.PRNGKey(0)
    pkey, xkey = jax.random.split(key)
    params = init_params(pkey)
    consts = prepare_kernel_params(params)
    # Input must be 28x28 single-channel so the flatten to 16*5*5 = 400 holds.
    x = jax.random.normal(xkey, (2, 1, 28, 28), jnp.float32)  # NCHW

    fwd = jax.jit(cnn_forward)
    out = jax.block_until_ready(fwd(consts, x))
    assert out.shape == (2, LAYERS_NEURONS[2])

    ref = cnn_reference(params, x)
    # bf16 MXU operands throughout -> compare to the f32 reference with a
    # correspondingly loose tolerance.
    if not bool(jnp.allclose(out, ref, atol=2e-2, rtol=2e-2)):
        raise AssertionError("Pallas CNN output mismatches JAX reference")

    print("KERNEL_OK")
</pallas_src>

<mosaic_0001>
module attributes {stable_mosaic.version = 11 : i64} {
  func.func @kernel(%arg0: i32, %arg1: memref<256x32xf32, #tpu.memory_space<vmem>>, %arg2: memref<5x32x168xbf16, #tpu.memory_space<vmem>>, %arg3: memref<1x168xf32, #tpu.memory_space<vmem>>, %arg4: memref<5x84x160xbf16, #tpu.memory_space<vmem>>, %arg5: memref<1x160xf32, #tpu.memory_space<vmem>>, %arg6: memref<2x168x84xbf16, #tpu.memory_space<vmem>>, %arg7: memref<2x160x80xbf16, #tpu.memory_space<vmem>>, %arg8: memref<5x80x128xbf16, #tpu.memory_space<vmem>>, %arg9: memref<1x128xf32, #tpu.memory_space<vmem>>, %arg10: memref<128x128xbf16, #tpu.memory_space<vmem>>, %arg11: memref<1x128xf32, #tpu.memory_space<vmem>>, %arg12: memref<128x128xbf16, #tpu.memory_space<vmem>>, %arg13: memref<1x128xf32, #tpu.memory_space<vmem>>, %arg14: memref<8x128xf32, #tpu.memory_space<vmem>>, %arg15: memref<264x32xf32, #tpu.memory_space<vmem>>, %arg16: memref<264x84xf32, #tpu.memory_space<vmem>>, %arg17: memref<128x80xf32, #tpu.memory_space<vmem>>) attributes {dimension_semantics = [#tpu.dimension_semantics<parallel>], iteration_bounds = array<i64: 1>, scalar_prefetch = 0 : i64, scratch_operands = 3 : i64, tpu.core_type = #tpu.core_type<tc>, window_params = [{transform_indices = @transform_0, window_bounds = array<i64: 256, 32>}, {pipeline_mode = #tpu.pipeline_mode<synchronous>, transform_indices = @transform_1, window_bounds = array<i64: 5, 32, 168>}, {pipeline_mode = #tpu.pipeline_mode<synchronous>, transform_indices = @transform_2, window_bounds = array<i64: 1, 168>}, {pipeline_mode = #tpu.pipeline_mode<synchronous>, transform_indices = @transform_3, window_bounds = array<i64: 5, 84, 160>}, {pipeline_mode = #tpu.pipeline_mode<synchronous>, transform_indices = @transform_4, window_bounds = array<i64: 1, 160>}, {pipeline_mode = #tpu.pipeline_mode<synchronous>, transform_indices = @transform_5, window_bounds = array<i64: 2, 168, 84>}, {pipeline_mode = #tpu.pipeline_mode<synchronous>, transform_indices = @transform_6, window_bounds = array<i64: 2, 160, 80>}, {pipeline_mode = #tpu.pipeline_mode<synchronous>, transform_indices = @transform_7, window_bounds = array<i64: 5, 80, 128>}, {pipeline_mode = #tpu.pipeline_mode<synchronous>, transform_indices = @transform_8, window_bounds = array<i64: 1, 128>}, {pipeline_mode = #tpu.pipeline_mode<synchronous>, transform_indices = @transform_9, window_bounds = array<i64: 128, 128>}, {pipeline_mode = #tpu.pipeline_mode<synchronous>, transform_indices = @transform_10, window_bounds = array<i64: 1, 128>}, {pipeline_mode = #tpu.pipeline_mode<synchronous>, transform_indices = @transform_11, window_bounds = array<i64: 128, 128>}, {pipeline_mode = #tpu.pipeline_mode<synchronous>, transform_indices = @transform_12, window_bounds = array<i64: 1, 128>}, {transform_indices = @transform_13, window_bounds = array<i64: 8, 128>}]} {
    %c0 = arith.constant 0 : index
    %c0_0 = arith.constant 0 : index
    %0 = vector.load %arg1[%c0, %c0_0] : memref<256x32xf32, #tpu.memory_space<vmem>>, vector<256x32xf32>
    %c0_1 = arith.constant 0 : index
    %c0_2 = arith.constant 0 : index
    %1 = vector.load %arg15[%c0_1, %c0_2] : memref<264x32xf32, #tpu.memory_space<vmem>>, vector<256x32xf32>
    tpu.vector_store %arg15[%c0_1, %c0_2], %0 {strides = array<i32>} : memref<264x32xf32, #tpu.memory_space<vmem>>, vector<256x32xf32>,
    %cst = arith.constant 0.000000e+00 : f32
    %2 = vector.broadcast %cst : f32 to vector<8x32xf32>
    %c256 = arith.constant 256 : index
    %c0_3 = arith.constant 0 : index
    %3 = vector.load %arg15[%c256, %c0_3] : memref<264x32xf32, #tpu.memory_space<vmem>>, vector<8x32xf32>
    tpu.vector_store %arg15[%c256, %c0_3], %2 {strides = array<i32>} : memref<264x32xf32, #tpu.memory_space<vmem>>, vector<8x32xf32>,
    %cst_4 = arith.constant 0.000000e+00 : f32
    %4 = vector.broadcast %cst_4 : f32 to vector<256x168xf32>
    %c0_5 = arith.constant 0 : index
    %c0_6 = arith.constant 0 : index
    %5 = vector.load %arg15[%c0_5, %c0_6] : memref<264x32xf32, #tpu.memory_space<vmem>>, vector<256x32xf32>
    %6 = arith.truncf %5 : vector<256x32xf32> to vector<256x32xbf16>
    %c0_7 = arith.constant 0 : index
    %c0_8 = arith.constant 0 : index
    %c0_9 = arith.constant 0 : index
    %7 = vector.load %arg2[%c0_7, %c0_8, %c0_9] : memref<5x32x168xbf16, #tpu.memory_space<vmem>>, vector<1x32x168xbf16>
    %8 = vector.shape_cast %7 : vector<1x32x168xbf16> to vector<32x168xbf16>
    %cst_10 = arith.constant dense<0.000000e+00> : vector<256x168xf32>
    %9 = tpu.matmul %6, %8, %cst_10 {dimension_numbers = #tpu.dot_dimension_numbers<[1], [0], [0], [1], [0, 0, 1, 1], [], []>} : vector<256x32xbf16>, vector<32x168xbf16>, vector<256x168xf32> -> vector<256x168xf32>
    %10 = arith.addf %4, %9 : vector<256x168xf32>
    %c1 = arith.constant 1 : index
    %c0_11 = arith.constant 0 : index
    %11 = vector.load %arg15[%c1, %c0_11] : memref<264x32xf32, #tpu.memory_space<vmem>>, vector<256x32xf32>
    %12 = arith.truncf %11 : vector<256x32xf32> to vector<256x32xbf16>
    %c1_12 = arith.constant 1 : index
    %c0_13 = arith.constant 0 : index
    %c0_14 = arith.constant 0 : index
    %13 = vector.load %arg2[%c1_12, %c0_13, %c0_14] : memref<5x32x168xbf16, #tpu.memory_space<vmem>>, vector<1x32x168xbf16>
    %14 = vector.shape_cast %13 : vector<1x32x168xbf16> to vector<32x168xbf16>
    %cst_15 = arith.constant dense<0.000000e+00> : vector<256x168xf32>
    %15 = tpu.matmul %12, %14, %cst_15 {dimension_numbers = #tpu.dot_dimension_numbers<[1], [0], [0], [1], [0, 0, 1, 1], [], []>} : vector<256x32xbf16>, vector<32x168xbf16>, vector<256x168xf32> -> vector<256x168xf32>
    %16 = arith.addf %10, %15 : vector<256x168xf32>
    %c2 = arith.constant 2 : index
    %c0_16 = arith.constant 0 : index
    %17 = vector.load %arg15[%c2, %c0_16] : memref<264x32xf32, #tpu.memory_space<vmem>>, vector<256x32xf32>
    %18 = arith.truncf %17 : vector<256x32xf32> to vector<256x32xbf16>
    %c2_17 = arith.constant 2 : index
    %c0_18 = arith.constant 0 : index
    %c0_19 = arith.constant 0 : index
    %19 = vector.load %arg2[%c2_17, %c0_18, %c0_19] : memref<5x32x168xbf16, #tpu.memory_space<vmem>>, vector<1x32x168xbf16>
    %20 = vector.shape_cast %19 : vector<1x32x168xbf16> to vector<32x168xbf16>
    %cst_20 = arith.constant dense<0.000000e+00> : vector<256x168xf32>
    %21 = tpu.matmul %18, %20, %cst_20 {dimension_numbers = #tpu.dot_dimension_numbers<[1], [0], [0], [1], [0, 0, 1, 1], [], []>} : vector<256x32xbf16>, vector<32x168xbf16>, vector<256x168xf32> -> vector<256x168xf32>
    %22 = arith.addf %16, %21 : vector<256x168xf32>
    %c3 = arith.constant 3 : index
    %c0_21 = arith.constant 0 : index
    %23 = vector.load %arg15[%c3, %c0_21] : memref<264x32xf32, #tpu.memory_space<vmem>>, vector<256x32xf32>
    %24 = arith.truncf %23 : vector<256x32xf32> to vector<256x32xbf16>
    %c3_22 = arith.constant 3 : index
    %c0_23 = arith.constant 0 : index
    %c0_24 = arith.constant 0 : index
    %25 = vector.load %arg2[%c3_22, %c0_23, %c0_24] : memref<5x32x168xbf16, #tpu.memory_space<vmem>>, vector<1x32x168xbf16>
    %26 = vector.shape_cast %25 : vector<1x32x168xbf16> to vector<32x168xbf16>
    %cst_25 = arith.constant dense<0.000000e+00> : vector<256x168xf32>
    %27 = tpu.matmul %24, %26, %cst_25 {dimension_numbers = #tpu.dot_dimension_numbers<[1], [0], [0], [1], [0, 0, 1, 1], [], []>} : vector<256x32xbf16>, vector<32x168xbf16>, vector<256x168xf32> -> vector<256x168xf32>
    %28 = arith.addf %22, %27 : vector<256x168xf32>
    %c4 = arith.constant 4 : index
    %c0_26 = arith.constant 0 : index
    %29 = vector.load %arg15[%c4, %c0_26] : memref<264x32xf32, #tpu.memory_space<vmem>>, vector<256x32xf32>
    %30 = arith.truncf %29 : vector<256x32xf32> to vector<256x32xbf16>
    %c4_27 = arith.constant 4 : index
    %c0_28 = arith.constant 0 : index
    %c0_29 = arith.constant 0 : index
    %31 = vector.load %arg2[%c4_27, %c0_28, %c0_29] : memref<5x32x168xbf16, #tpu.memory_space<vmem>>, vector<1x32x168xbf16>
    %32 = vector.shape_cast %31 : vector<1x32x168xbf16> to vector<32x168xbf16>
    %cst_30 = arith.constant dense<0.000000e+00> : vector<256x168xf32>
    %33 = tpu.matmul %30, %32, %cst_30 {dimension_numbers = #tpu.dot_dimension_numbers<[1], [0], [0], [1], [0, 0, 1, 1], [], []>} : vector<256x32xbf16>, vector<32x168xbf16>, vector<256x168xf32> -> vector<256x168xf32>
    %34 = arith.addf %28, %33 : vector<256x168xf32>
    %c0_31 = arith.constant 0 : index
    %c0_32 = arith.constant 0 : index
    %35 = vector.load %arg3[%c0_31, %c0_32] : memref<1x168xf32, #tpu.memory_space<vmem>>, vector<1x168xf32>
    %36 = vector.broadcast %35 : vector<1x168xf32> to vector<256x168xf32>
    %37 = arith.addf %34, %36 : vector<256x168xf32>
    %cst_33 = arith.constant 0.000000e+00 : f32
    %38 = vector.broadcast %cst_33 : f32 to vector<256x168xf32>
    %39 = arith.maximumf %37, %38 : vector<256x168xf32>
    %40 = arith.truncf %39 : vector<256x168xf32> to vector<256x168xbf16>
    %c0_34 = arith.constant 0 : index
    %c0_35 = arith.constant 0 : index
    %c0_36 = arith.constant 0 : index
    %41 = vector.load %arg6[%c0_34, %c0_35, %c0_36] : memref<2x168x84xbf16, #tpu.memory_space<vmem>>, vector<1x168x84xbf16>
    %42 = vector.shape_cast %41 : vector<1x168x84xbf16> to vector<168x84xbf16>
    %cst_37 = arith.constant dense<0.000000e+00> : vector<256x84xf32>
    %43 = tpu.matmul %40, %42, %cst_37 {dimension_numbers = #tpu.dot_dimension_numbers<[1], [0], [0], [1], [0, 0, 1, 1], [], []>} : vector<256x168xbf16>, vector<168x84xbf16>, vector<256x84xf32> -> vector<256x84xf32>
    %c1_38 = arith.constant 1 : index
    %c0_39 = arith.constant 0 : index
    %c0_40 = arith.constant 0 : index
    %44 = vector.load %arg6[%c1_38, %c0_39, %c0_40] : memref<2x168x84xbf16, #tpu.memory_space<vmem>>, vector<1x168x84xbf16>
    %45 = vector.shape_cast %44 : vector<1x168x84xbf16> to vector<168x84xbf16>
    %cst_41 = arith.constant dense<0.000000e+00> : vector<256x84xf32>
    %46 = tpu.matmul %40, %45, %cst_41 {dimension_numbers = #tpu.dot_dimension_numbers<[1], [0], [0], [1], [0, 0, 1, 1], [], []>} : vector<256x168xbf16>, vector<168x84xbf16>, vector<256x84xf32> -> vector<256x84xf32>
    %47 = arith.maximumf %43, %46 : vector<256x84xf32>
    %c0_42 = arith.constant 0 : index
    %c0_43 = arith.constant 0 : index
    %48 = vector.load %arg16[%c0_42, %c0_43] : memref<264x84xf32, #tpu.memory_space<vmem>>, vector<256x84xf32>
    tpu.vector_store %arg16[%c0_42, %c0_43], %47 {strides = array<i32>} : memref<264x84xf32, #tpu.memory_space<vmem>>, vector<256x84xf32>,
    %cst_44 = arith.constant 0.000000e+00 : f32
    %49 = vector.broadcast %cst_44 : f32 to vector<8x84xf32>
    %c256_45 = arith.constant 256 : index
    %c0_46 = arith.constant 0 : index
    %50 = vector.load %arg16[%c256_45, %c0_46] : memref<264x84xf32, #tpu.memory_space<vmem>>, vector<8x84xf32>
    tpu.vector_store %arg16[%c256_45, %c0_46], %49 {strides = array<i32>} : memref<264x84xf32, #tpu.memory_space<vmem>>, vector<8x84xf32>,
    %cst_47 = arith.constant 0.000000e+00 : f32
    %51 = vector.broadcast %cst_47 : f32 to vector<128x160xf32>
    %c0_48 = arith.constant 0 : index
    %c0_49 = arith.constant 0 : index
    %52 = tpu.strided_load %arg16[%c0_48, %c0_49] {strides = array<i32: 2, 1>} : memref<264x84xf32, #tpu.memory_space<vmem>>, vector<128x84xf32>
    %c1_50 = arith.constant 1 : index
    %c0_51 = arith.constant 0 : index
    %53 = tpu.strided_load %arg16[%c1_50, %c0_51] {strides = array<i32: 2, 1>} : memref<264x84xf32, #tpu.memory_space<vmem>>, vector<128x84xf32>
    %54 = arith.maximumf %52, %53 : vector<128x84xf32>
    %55 = arith.truncf %54 : vector<128x84xf32> to vector<128x84xbf16>
    %c0_52 = arith.constant 0 : index
    %c0_53 = arith.constant 0 : index
    %c0_54 = arith.constant 0 : index
    %56 = vector.load %arg4[%c0_52, %c0_53, %c0_54] : memref<5x84x160xbf16, #tpu.memory_space<vmem>>, vector<1x84x160xbf16>
    %57 = vector.shape_cast %56 : vector<1x84x160xbf16> to vector<84x160xbf16>
    %cst_55 = arith.constant dense<0.000000e+00> : vector<128x160xf32>
    %58 = tpu.matmul %55, %57, %cst_55 {dimension_numbers = #tpu.dot_dimension_numbers<[1], [0], [0], [1], [0, 0, 1, 1], [], []>} : vector<128x84xbf16>, vector<84x160xbf16>, vector<128x160xf32> -> vector<128x160xf32>
    %59 = arith.addf %51, %58 : vector<128x160xf32>
    %c2_56 = arith.constant 2 : index
    %c0_57 = arith.constant 0 : index
    %60 = tpu.strided_load %arg16[%c2_56, %c0_57] {strides = array<i32: 2, 1>} : memref<264x84xf32, #tpu.memory_space<vmem>>, vector<128x84xf32>
    %c3_58 = arith.constant 3 : index
    %c0_59 = arith.constant 0 : index
    %61 = tpu.strided_load %arg16[%c3_58, %c0_59] {strides = array<i32: 2, 1>} : memref<264x84xf32, #tpu.memory_space<vmem>>, vector<128x84xf32>
    %62 = arith.maximumf %60, %61 : vector<128x84xf32>
    %63 = arith.truncf %62 : vector<128x84xf32> to vector<128x84xbf16>
    %c1_60 = arith.constant 1 : index
    %c0_61 = arith.constant 0 : index
    %c0_62 = arith.constant 0 : index
    %64 = vector.load %arg4[%c1_60, %c0_61, %c0_62] : memref<5x84x160xbf16, #tpu.memory_space<vmem>>, vector<1x84x160xbf16>
    %65 = vector.shape_cast %64 : vector<1x84x160xbf16> to vector<84x160xbf16>
    %cst_63 = arith.constant dense<0.000000e+00> : vector<128x160xf32>
    %66 = tpu.matmul %63, %65, %cst_63 {dimension_numbers = #tpu.dot_dimension_numbers<[1], [0], [0], [1], [0, 0, 1, 1], [], []>} : vector<128x84xbf16>, vector<84x160xbf16>, vector<128x160xf32> -> vector<128x160xf32>
    %67 = arith.addf %59, %66 : vector<128x160xf32>
    %c4_64 = arith.constant 4 : index
    %c0_65 = arith.constant 0 : index
    %68 = tpu.strided_load %arg16[%c4_64, %c0_65] {strides = array<i32: 2, 1>} : memref<264x84xf32, #tpu.memory_space<vmem>>, vector<128x84xf32>
    %c5 = arith.constant 5 : index
    %c0_66 = arith.constant 0 : index
    %69 = tpu.strided_load %arg16[%c5, %c0_66] {strides = array<i32: 2, 1>} : memref<264x84xf32, #tpu.memory_space<vmem>>, vector<128x84xf32>
    %70 = arith.maximumf %68, %69 : vector<128x84xf32>
    %71 = arith.truncf %70 : vector<128x84xf32> to vector<128x84xbf16>
    %c2_67 = arith.constant 2 : index
    %c0_68 = arith.constant 0 : index
    %c0_69 = arith.constant 0 : index
    %72 = vector.load %arg4[%c2_67, %c0_68, %c0_69] : memref<5x84x160xbf16, #tpu.memory_space<vmem>>, vector<1x84x160xbf16>
    %73 = vector.shape_cast %72 : vector<1x84x160xbf16> to vector<84x160xbf16>
    %cst_70 = arith.constant dense<0.000000e+00> : vector<128x160xf32>
    %74 = tpu.matmul %71, %73, %cst_70 {dimension_numbers = #tpu.dot_dimension_numbers<[1], [0], [0], [1], [0, 0, 1, 1], [], []>} : vector<128x84xbf16>, vector<84x160xbf16>, vector<128x160xf32> -> vector<128x160xf32>
    %75 = arith.addf %67, %74 : vector<128x160xf32>
    %c6 = arith.constant 6 : index
    %c0_71 = arith.constant 0 : index
    %76 = tpu.strided_load %arg16[%c6, %c0_71] {strides = array<i32: 2, 1>} : memref<264x84xf32, #tpu.memory_space<vmem>>, vector<128x84xf32>
    %c7 = arith.constant 7 : index
    %c0_72 = arith.constant 0 : index
    %77 = tpu.strided_load %arg16[%c7, %c0_72] {strides = array<i32: 2, 1>} : memref<264x84xf32, #tpu.memory_space<vmem>>, vector<128x84xf32>
    %78 = arith.maximumf %76, %77 : vector<128x84xf32>
    %79 = arith.truncf %78 : vector<128x84xf32> to vector<128x84xbf16>
    %c3_73 = arith.constant 3 : index
    %c0_74 = arith.constant 0 : index
    %c0_75 = arith.constant 0 : index
    %80 = vector.load %arg4[%c3_73, %c0_74, %c0_75] : memref<5x84x160xbf16, #tpu.memory_space<vmem>>, vector<1x84x160xbf16>
    %81 = vector.shape_cast %80 : vector<1x84x160xbf16> to vector<84x160xbf16>
    %cst_76 = arith.constant dense<0.000000e+00> : vector<128x160xf32>
    %82 = tpu.matmul %79, %81, %cst_76 {dimension_numbers = #tpu.dot_dimension_numbers<[1], [0], [0], [1], [0, 0, 1, 1], [], []>} : vector<128x84xbf16>, vector<84x160xbf16>, vector<128x160xf32> -> vector<128x160xf32>
    %83 = arith.addf %75, %82 : vector<128x160xf32>
    %c8 = arith.constant 8 : index
    %c0_77 = arith.constant 0 : index
    %84 = tpu.strided_load %arg16[%c8, %c0_77] {strides = array<i32: 2, 1>} : memref<264x84xf32, #tpu.memory_space<vmem>>, vector<128x84xf32>
    %c9 = arith.constant 9 : index
    %c0_78 = arith.constant 0 : index
    %85 = tpu.strided_load %arg16[%c9, %c0_78] {strides = array<i32: 2, 1>} : memref<264x84xf32, #tpu.memory_space<vmem>>, vector<128x84xf32>
    %86 = arith.maximumf %84, %85 : vector<128x84xf32>
    %87 = arith.truncf %86 : vector<128x84xf32> to vector<128x84xbf16>
    %c4_79 = arith.constant 4 : index
    %c0_80 = arith.constant 0 : index
    %c0_81 = arith.constant 0 : index
    %88 = vector.load %arg4[%c4_79, %c0_80, %c0_81] : memref<5x84x160xbf16, #tpu.memory_space<vmem>>, vector<1x84x160xbf16>
    %89 = vector.shape_cast %88 : vector<1x84x160xbf16> to vector<84x160xbf16>
    %cst_82 = arith.constant dense<0.000000e+00> : vector<128x160xf32>
    %90 = tpu.matmul %87, %89, %cst_82 {dimension_numbers = #tpu.dot_dimension_numbers<[1], [0], [0], [1], [0, 0, 1, 1], [], []>} : vector<128x84xbf16>, vector<84x160xbf16>, vector<128x160xf32> -> vector<128x160xf32>
    %91 = arith.addf %83, %90 : vector<128x160xf32>
    %c0_83 = arith.constant 0 : index
    %c0_84 = arith.constant 0 : index
    %92 = vector.load %arg5[%c0_83, %c0_84] : memref<1x160xf32, #tpu.memory_space<vmem>>, vector<1x160xf32>
    %93 = vector.broadcast %92 : vector<1x160xf32> to vector<128x160xf32>
    %94 = arith.addf %91, %93 : vector<128x160xf32>
    %cst_85 = arith.constant 0.000000e+00 : f32
    %95 = vector.broadcast %cst_85 : f32 to vector<128x160xf32>
    %96 = arith.maximumf %94, %95 : vector<128x160xf32>
    %97 = arith.truncf %96 : vector<128x160xf32> to vector<128x160xbf16>
    %c0_86 = arith.constant 0 : index
    %c0_87 = arith.constant 0 : index
    %c0_88 = arith.constant 0 : index
    %98 = vector.load %arg7[%c0_86, %c0_87, %c0_88] : memref<2x160x80xbf16, #tpu.memory_space<vmem>>, vector<1x160x80xbf16>
    %99 = vector.shape_cast %98 : vector<1x160x80xbf16> to vector<160x80xbf16>
    %cst_89 = arith.constant dense<0.000000e+00> : vector<128x80xf32>
    %100 = tpu.matmul %97, %99, %cst_89 {dimension_numbers = #tpu.dot_dimension_numbers<[1], [0], [0], [1], [0, 0, 1, 1], [], []>} : vector<128x160xbf16>, vector<160x80xbf16>, vector<128x80xf32> -> vector<128x80xf32>
    %c1_90 = arith.constant 1 : index
    %c0_91 = arith.constant 0 : index
    %c0_92 = arith.constant 0 : index
    %101 = vector.load %arg7[%c1_90, %c0_91, %c0_92] : memref<2x160x80xbf16, #tpu.memory_space<vmem>>, vector<1x160x80xbf16>
    %102 = vector.shape_cast %101 : vector<1x160x80xbf16> to vector<160x80xbf16>
    %cst_93 = arith.constant dense<0.000000e+00> : vector<128x80xf32>
    %103 = tpu.matmul %97, %102, %cst_93 {dimension_numbers = #tpu.dot_dimension_numbers<[1], [0], [0], [1], [0, 0, 1, 1], [], []>} : vector<128x160xbf16>, vector<160x80xbf16>, vector<128x80xf32> -> vector<128x80xf32>
    %104 = arith.maximumf %100, %103 : vector<128x80xf32>
    %c0_94 = arith.constant 0 : index
    %c0_95 = arith.constant 0 : index
    %105 = vector.load %arg17[%c0_94, %c0_95] : memref<128x80xf32, #tpu.memory_space<vmem>>, vector<128x80xf32>
    tpu.vector_store %arg17[%c0_94, %c0_95], %104 {strides = array<i32>} : memref<128x80xf32, #tpu.memory_space<vmem>>, vector<128x80xf32>,
    %cst_96 = arith.constant 0.000000e+00 : f32
    %106 = vector.broadcast %cst_96 : f32 to vector<8x128xf32>
    %c0_97 = arith.constant 0 : index
    %c0_98 = arith.constant 0 : index
    %107 = tpu.strided_load %arg17[%c0_97, %c0_98] {strides = array<i32: 16, 1>} : memref<128x80xf32, #tpu.memory_space<vmem>>, vector<8x80xf32>
    %c1_99 = arith.constant 1 : index
    %c0_100 = arith.constant 0 : index
    %108 = tpu.strided_load %arg17[%c1_99, %c0_100] {strides = array<i32: 16, 1>} : memref<128x80xf32, #tpu.memory_space<vmem>>, vector<8x80xf32>
    %109 = arith.maximumf %107, %108 : vector<8x80xf32>
    %110 = arith.truncf %109 : vector<8x80xf32> to vector<8x80xbf16>
    %c0_101 = arith.constant 0 : index
    %c0_102 = arith.constant 0 : index
    %c0_103 = arith.constant 0 : index
    %111 = vector.load %arg8[%c0_101, %c0_102, %c0_103] : memref<5x80x128xbf16, #tpu.memory_space<vmem>>, vector<1x80x128xbf16>
    %112 = vector.shape_cast %111 : vector<1x80x128xbf16> to vector<80x128xbf16>
    %cst_104 = arith.constant dense<0.000000e+00> : vector<8x128xf32>
    %113 = tpu.matmul %110, %112, %cst_104 {dimension_numbers = #tpu.dot_dimension_numbers<[1], [0], [0], [1], [0, 0, 1, 1], [], []>} : vector<8x80xbf16>, vector<80x128xbf16>, vector<8x128xf32> -> vector<8x128xf32>
    %114 = arith.addf %106, %113 : vector<8x128xf32>
    %c2_105 = arith.constant 2 : index
    %c0_106 = arith.constant 0 : index
    %115 = tpu.strided_load %arg17[%c2_105, %c0_106] {strides = array<i32: 16, 1>} : memref<128x80xf32, #tpu.memory_space<vmem>>, vector<8x80xf32>
    %c3_107 = arith.constant 3 : index
    %c0_108 = arith.constant 0 : index
    %116 = tpu.strided_load %arg17[%c3_107, %c0_108] {strides = array<i32: 16, 1>} : memref<128x80xf32, #tpu.memory_space<vmem>>, vector<8x80xf32>
    %117 = arith.maximumf %115, %116 : vector<8x80xf32>
    %118 = arith.truncf %117 : vector<8x80xf32> to vector<8x80xbf16>
    %c1_109 = arith.constant 1 : index
    %c0_110 = arith.constant 0 : index
    %c0_111 = arith.constant 0 : index
    %119 = vector.load %arg8[%c1_109, %c0_110, %c0_111] : memref<5x80x128xbf16, #tpu.memory_space<vmem>>, vector<1x80x128xbf16>
    %120 = vector.shape_cast %119 : vector<1x80x128xbf16> to vector<80x128xbf16>
    %cst_112 = arith.constant dense<0.000000e+00> : vector<8x128xf32>
    %121 = tpu.matmul %118, %120, %cst_112 {dimension_numbers = #tpu.dot_dimension_numbers<[1], [0], [0], [1], [0, 0, 1, 1], [], []>} : vector<8x80xbf16>, vector<80x128xbf16>, vector<8x128xf32> -> vector<8x128xf32>
    %122 = arith.addf %114, %121 : vector<8x128xf32>
    %c4_113 = arith.constant 4 : index
    %c0_114 = arith.constant 0 : index
    %123 = tpu.strided_load %arg17[%c4_113, %c0_114] {strides = array<i32: 16, 1>} : memref<128x80xf32, #tpu.memory_space<vmem>>, vector<8x80xf32>
    %c5_115 = arith.constant 5 : index
    %c0_116 = arith.constant 0 : index
    %124 = tpu.strided_load %arg17[%c5_115, %c0_116] {strides = array<i32: 16, 1>} : memref<128x80xf32, #tpu.memory_space<vmem>>, vector<8x80xf32>
    %125 = arith.maximumf %123, %124 : vector<8x80xf32>
    %126 = arith.truncf %125 : vector<8x80xf32> to vector<8x80xbf16>
    %c2_117 = arith.constant 2 : index
    %c0_118 = arith.constant 0 : index
    %c0_119 = arith.constant 0 : index
    %127 = vector.load %arg8[%c2_117, %c0_118, %c0_119] : memref<5x80x128xbf16, #tpu.memory_space<vmem>>, vector<1x80x128xbf16>
    %128 = vector.shape_cast %127 : vector<1x80x128xbf16> to vector<80x128xbf16>
    %cst_120 = arith.constant dense<0.000000e+00> : vector<8x128xf32>
    %129 = tpu.matmul %126, %128, %cst_120 {dimension_numbers = #tpu.dot_dimension_numbers<[1], [0], [0], [1], [0, 0, 1, 1], [], []>} : vector<8x80xbf16>, vector<80x128xbf16>, vector<8x128xf32> -> vector<8x128xf32>
    %130 = arith.addf %122, %129 : vector<8x128xf32>
    %c6_121 = arith.constant 6 : index
    %c0_122 = arith.constant 0 : index
    %131 = tpu.strided_load %arg17[%c6_121, %c0_122] {strides = array<i32: 16, 1>} : memref<128x80xf32, #tpu.memory_space<vmem>>, vector<8x80xf32>
    %c7_123 = arith.constant 7 : index
    %c0_124 = arith.constant 0 : index
    %132 = tpu.strided_load %arg17[%c7_123, %c0_124] {strides = array<i32: 16, 1>} : memref<128x80xf32, #tpu.memory_space<vmem>>, vector<8x80xf32>
    %133 = arith.maximumf %131, %132 : vector<8x80xf32>
    %134 = arith.truncf %133 : vector<8x80xf32> to vector<8x80xbf16>
    %c3_125 = arith.constant 3 : index
    %c0_126 = arith.constant 0 : index
    %c0_127 = arith.constant 0 : index
    %135 = vector.load %arg8[%c3_125, %c0_126, %c0_127] : memref<5x80x128xbf16, #tpu.memory_space<vmem>>, vector<1x80x128xbf16>
    %136 = vector.shape_cast %135 : vector<1x80x128xbf16> to vector<80x128xbf16>
    %cst_128 = arith.constant dense<0.000000e+00> : vector<8x128xf32>
    %137 = tpu.matmul %134, %136, %cst_128 {dimension_numbers = #tpu.dot_dimension_numbers<[1], [0], [0], [1], [0, 0, 1, 1], [], []>} : vector<8x80xbf16>, vector<80x128xbf16>, vector<8x128xf32> -> vector<8x128xf32>
    %138 = arith.addf %130, %137 : vector<8x128xf32>
    %c8_129 = arith.constant 8 : index
    %c0_130 = arith.constant 0 : index
    %139 = tpu.strided_load %arg17[%c8_129, %c0_130] {strides = array<i32: 16, 1>} : memref<128x80xf32, #tpu.memory_space<vmem>>, vector<8x80xf32>
    %c9_131 = arith.constant 9 : index
    %c0_132 = arith.constant 0 : index
    %140 = tpu.strided_load %arg17[%c9_131, %c0_132] {strides = array<i32: 16, 1>} : memref<128x80xf32, #tpu.memory_space<vmem>>, vector<8x80xf32>
    %141 = arith.maximumf %139, %140 : vector<8x80xf32>
    %142 = arith.truncf %141 : vector<8x80xf32> to vector<8x80xbf16>
    %c4_133 = arith.constant 4 : index
    %c0_134 = arith.constant 0 : index
    %c0_135 = arith.constant 0 : index
    %143 = vector.load %arg8[%c4_133, %c0_134, %c0_135] : memref<5x80x128xbf16, #tpu.memory_space<vmem>>, vector<1x80x128xbf16>
    %144 = vector.shape_cast %143 : vector<1x80x128xbf16> to vector<80x128xbf16>
    %cst_136 = arith.constant dense<0.000000e+00> : vector<8x128xf32>
    %145 = tpu.matmul %142, %144, %cst_136 {dimension_numbers = #tpu.dot_dimension_numbers<[1], [0], [0], [1], [0, 0, 1, 1], [], []>} : vector<8x80xbf16>, vector<80x128xbf16>, vector<8x128xf32> -> vector<8x128xf32>
    %146 = arith.addf %138, %145 : vector<8x128xf32>
    %c0_137 = arith.constant 0 : index
    %c0_138 = arith.constant 0 : index
    %147 = vector.load %arg9[%c0_137, %c0_138] : memref<1x128xf32, #tpu.memory_space<vmem>>, vector<1x128xf32>
    %148 = vector.broadcast %147 : vector<1x128xf32> to vector<8x128xf32>
    %149 = arith.addf %146, %148 : vector<8x128xf32>
    %cst_139 = arith.constant 0.000000e+00 : f32
    %150 = vector.broadcast %cst_139 : f32 to vector<8x128xf32>
    %151 = arith.maximumf %149, %150 : vector<8x128xf32>
    %152 = arith.truncf %151 : vector<8x128xf32> to vector<8x128xbf16>
    %c0_140 = arith.constant 0 : index
    %c0_141 = arith.constant 0 : index
    %153 = vector.load %arg10[%c0_140, %c0_141] : memref<128x128xbf16, #tpu.memory_space<vmem>>, vector<128x128xbf16>
    %cst_142 = arith.constant dense<0.000000e+00> : vector<8x128xf32>
    %154 = tpu.matmul %152, %153, %cst_142 {dimension_numbers = #tpu.dot_dimension_numbers<[1], [0], [0], [1], [0, 0, 1, 1], [], []>} : vector<8x128xbf16>, vector<128x128xbf16>, vector<8x128xf32> -> vector<8x128xf32>
    %c0_143 = arith.constant 0 : index
    %c0_144 = arith.constant 0 : index
    %155 = vector.load %arg11[%c0_143, %c0_144] : memref<1x128xf32, #tpu.memory_space<vmem>>, vector<1x128xf32>
    %156 = vector.broadcast %155 : vector<1x128xf32> to vector<8x128xf32>
    %157 = arith.addf %154, %156 : vector<8x128xf32>
    %cst_145 = arith.constant 0.000000e+00 : f32
    %158 = vector.broadcast %cst_145 : f32 to vector<8x128xf32>
    %159 = arith.maximumf %157, %158 : vector<8x128xf32>
    %160 = arith.truncf %159 : vector<8x128xf32> to vector<8x128xbf16>
    %c0_146 = arith.constant 0 : index
    %c0_147 = arith.constant 0 : index
    %161 = vector.load %arg12[%c0_146, %c0_147] : memref<128x128xbf16, #tpu.memory_space<vmem>>, vector<128x128xbf16>
    %cst_148 = arith.constant dense<0.000000e+00> : vector<8x128xf32>
    %162 = tpu.matmul %160, %161, %cst_148 {dimension_numbers = #tpu.dot_dimension_numbers<[1], [0], [0], [1], [0, 0, 1, 1], [], []>} : vector<8x128xbf16>, vector<128x128xbf16>, vector<8x128xf32> -> vector<8x128xf32>
    %c0_149 = arith.constant 0 : index
    %c0_150 = arith.constant 0 : index
    %163 = vector.load %arg13[%c0_149, %c0_150] : memref<1x128xf32, #tpu.memory_space<vmem>>, vector<1x128xf32>
    %164 = vector.broadcast %163 : vector<1x128xf32> to vector<8x128xf32>
    %165 = arith.addf %162, %164 : vector<8x128xf32>
    %c0_151 = arith.constant 0 : index
    %c0_152 = arith.constant 0 : index
    %166 = vector.load %arg14[%c0_151, %c0_152] : memref<8x128xf32, #tpu.memory_space<vmem>>, vector<8x128xf32>
    tpu.vector_store %arg14[%c0_151, %c0_152], %165 {strides = array<i32>} : memref<8x128xf32, #tpu.memory_space<vmem>>, vector<8x128xf32>,
    return
  }
  func.func @transform_0(%arg0: i32) -> (i32, i32) {
    %c0_i32 = arith.constant 0 : i32
    %c0_i32_0 = arith.constant 0 : i32
    return %arg0, %c0_i32 : i32, i32
  }
  func.func @transform_1(%arg0: i32) -> (i32, i32, i32) {
    %c0_i32 = arith.constant 0 : i32
    %c0_i32_0 = arith.constant 0 : i32
    %c0_i32_1 = arith.constant 0 : i32
    %c0_i32_2 = arith.constant 0 : i32
    return %c0_i32, %c0_i32_0, %c0_i32_1 : i32, i32, i32
  }
  func.func @transform_2(%arg0: i32) -> (i32, i32) {
    %c0_i32 = arith.constant 0 : i32
    %c0_i32_0 = arith.constant 0 : i32
    %c0_i32_1 = arith.constant 0 : i32
    return %c0_i32, %c0_i32_0 : i32, i32
  }
  func.func @transform_3(%arg0: i32) -> (i32, i32, i32) {
    %c0_i32 = arith.constant 0 : i32
    %c0_i32_0 = arith.constant 0 : i32
    %c0_i32_1 = arith.constant 0 : i32
    %c0_i32_2 = arith.constant 0 : i32
    return %c0_i32, %c0_i32_0, %c0_i32_1 : i32, i32, i32
  }
  func.func @transform_4(%arg0: i32) -> (i32, i32) {
    %c0_i32 = arith.constant 0 : i32
    %c0_i32_0 = arith.constant 0 : i32
    %c0_i32_1 = arith.constant 0 : i32
    return %c0_i32, %c0_i32_0 : i32, i32
  }
  func.func @transform_5(%arg0: i32) -> (i32, i32, i32) {
    %c0_i32 = arith.constant 0 : i32
    %c0_i32_0 = arith.constant 0 : i32
    %c0_i32_1 = arith.constant 0 : i32
    %c0_i32_2 = arith.constant 0 : i32
    return %c0_i32, %c0_i32_0, %c0_i32_1 : i32, i32, i32
  }
  func.func @transform_6(%arg0: i32) -> (i32, i32, i32) {
    %c0_i32 = arith.constant 0 : i32
    %c0_i32_0 = arith.constant 0 : i32
    %c0_i32_1 = arith.constant 0 : i32
    %c0_i32_2 = arith.constant 0 : i32
    return %c0_i32, %c0_i32_0, %c0_i32_1 : i32, i32, i32
  }
  func.func @transform_7(%arg0: i32) -> (i32, i32, i32) {
    %c0_i32 = arith.constant 0 : i32
    %c0_i32_0 = arith.constant 0 : i32
    %c0_i32_1 = arith.constant 0 : i32
    %c0_i32_2 = arith.constant 0 : i32
    return %c0_i32, %c0_i32_0, %c0_i32_1 : i32, i32, i32
  }
  func.func @transform_8(%arg0: i32) -> (i32, i32) {
    %c0_i32 = arith.constant 0 : i32
    %c0_i32_0 = arith.constant 0 : i32
    %c0_i32_1 = arith.constant 0 : i32
    return %c0_i32, %c0_i32_0 : i32, i32
  }
  func.func @transform_9(%arg0: i32) -> (i32, i32) {
    %c0_i32 = arith.constant 0 : i32
    %c0_i32_0 = arith.constant 0 : i32
    %c0_i32_1 = arith.constant 0 : i32
    return %c0_i32, %c0_i32_0 : i32, i32
  }
  func.func @transform_10(%arg0: i32) -> (i32, i32) {
    %c0_i32 = arith.constant 0 : i32
    %c0_i32_0 = arith.constant 0 : i32
    %c0_i32_1 = arith.constant 0 : i32
    return %c0_i32, %c0_i32_0 : i32, i32
  }
  func.func @transform_11(%arg0: i32) -> (i32, i32) {
    %c0_i32 = arith.constant 0 : i32
    %c0_i32_0 = arith.constant 0 : i32
    %c0_i32_1 = arith.constant 0 : i32
    return %c0_i32, %c0_i32_0 : i32, i32
  }
  func.func @transform_12(%arg0: i32) -> (i32, i32) {
    %c0_i32 = arith.constant 0 : i32
    %c0_i32_0 = arith.constant 0 : i32
    %c0_i32_1 = arith.constant 0 : i32
    return %c0_i32, %c0_i32_0 : i32, i32
  }
  func.func @transform_13(%arg0: i32) -> (i32, i32) {
    %c0_i32 = arith.constant 0 : i32
    %c0_i32_0 = arith.constant 0 : i32
    return %arg0, %c0_i32 : i32, i32
  }
}

</mosaic_0001>

<llo_original>
// kernel: cnn_forward.1
$region0: #{cnn_forward.1}
  #allocation0 [shape = 'u32[]', space=smem, size = 0x4, offset = 0x4, fixed_abs, tag = 'smem constant byte address 0x4 - core index']
  #allocation1 [shape = 'u32[144,128]{1,0:T(1,128)}', space=vmem, size = 0x12000, scoped, tag = 'internal scratch']
  #allocation2 [shape = 'f32[264,32]{1,0:T(8,128)}', space=vmem, size = 0x21000, scoped, tag = 'scratch operand']
  #allocation3 [shape = 'f32[264,84]{1,0:T(8,128)}', space=vmem, size = 0x21000, scoped, tag = 'scratch operand']
  #allocation4 [shape = 'f32[128,80]{1,0:T(8,128)}', space=vmem, size = 0x10000, scoped, tag = 'scratch operand']
  %s0 = inlined_call_operand.vmem [shape: f32[256,32], index: 0, kind: input, shape index: {}]
  %s1 = inlined_call_operand.vmem [shape: bf16[5,32,168], index: 1, kind: input, shape index: {}]
  %s2 = inlined_call_operand.vmem [shape: f32[1,168], index: 2, kind: input, shape index: {}]
  %s3 = inlined_call_operand.vmem [shape: bf16[5,84,160], index: 3, kind: input, shape index: {}]
  %s4 = inlined_call_operand.vmem [shape: f32[1,160], index: 4, kind: input, shape index: {}]
  %s5 = inlined_call_operand.vmem [shape: bf16[2,168,84], index: 5, kind: input, shape index: {}]
  %s6 = inlined_call_operand.vmem [shape: bf16[2,160,80], index: 6, kind: input, shape index: {}]
  %s7 = inlined_call_operand.vmem [shape: bf16[5,80,128], index: 7, kind: input, shape index: {}]
  %s8 = inlined_call_operand.vmem [shape: f32[1,128], index: 8, kind: input, shape index: {}]
  %s9 = inlined_call_operand.vmem [shape: bf16[128,128], index: 9, kind: input, shape index: {}]
  %s10 = inlined_call_operand.vmem [shape: f32[1,128], index: 10, kind: input, shape index: {}]
  %s11 = inlined_call_operand.vmem [shape: bf16[128,128], index: 11, kind: input, shape index: {}]
  %s12 = inlined_call_operand.vmem [shape: f32[1,128], index: 12, kind: input, shape index: {}]
  %s13 = inlined_call_operand.vmem [shape: f32[8,128], index: 13, kind: output, shape index: {}]
  %s14 = sld [smem:[#allocation0]]
  $region62: #{cnn_forward.1} parent=0
    _
  %s16 = ssub.s32 1, %s14
  %s17 = scalar_select 0, %s16, %s14
  // Predicated region
  $region2: #{cnn_forward.1} parent=0 // pred_check
    _
  $region3: #{cnn_forward.1} parent=0 // pred_check_branch
    %19 = sbr.rel (0) target = $region5
  $region4: #{cnn_forward.1} parent=0 // pred_region
    _
  $region5: #{cnn_forward.1} parent=0 // pred_fallthru
    _
  // Predicated region
  $region6: #{cnn_forward.1} parent=0 // pred_check
    _
  $region7: #{cnn_forward.1} parent=0 // pred_check_branch
    %21 = sbr.rel (0) target = $region9
  $region8: #{cnn_forward.1} parent=0 // pred_region
    _
  $region9: #{cnn_forward.1} parent=0 // pred_fallthru
    _
  // Predicated region
  $region10: #{cnn_forward.1} parent=0 // pred_check
    _
  $region11: #{cnn_forward.1} parent=0 // pred_check_branch
    %23 = sbr.rel (0) target = $region13
  $region12: #{cnn_forward.1} parent=0 // pred_region
    _
  $region13: #{cnn_forward.1} parent=0 // pred_fallthru
    _
  // Predicated region
  $region14: #{cnn_forward.1} parent=0 // pred_check
    _
  $region15: #{cnn_forward.1} parent=0 // pred_check_branch
    %25 = sbr.rel (0) target = $region17
  $region16: #{cnn_forward.1} parent=0 // pred_region
    _
  $region17: #{cnn_forward.1} parent=0 // pred_fallthru
    _
  // Predicated region
  $region18: #{cnn_forward.1} parent=0 // pred_check
    _
  $region19: #{cnn_forward.1} parent=0 // pred_check_branch
    %27 = sbr.rel (0) target = $region21
  $region20: #{cnn_forward.1} parent=0 // pred_region
    _
  $region21: #{cnn_forward.1} parent=0 // pred_fallthru
    _
  // Predicated region
  $region22: #{cnn_forward.1} parent=0 // pred_check
    _
  $region23: #{cnn_forward.1} parent=0 // pred_check_branch
    %29 = sbr.rel (0) target = $region25
  $region24: #{cnn_forward.1} parent=0 // pred_region
    _
  $region25: #{cnn_forward.1} parent=0 // pred_fallthru
    _
  // Predicated region
  $region26: #{cnn_forward.1} parent=0 // pred_check
    _
  $region27: #{cnn_forward.1} parent=0 // pred_check_branch
    %31 = sbr.rel (0) target = $region29
  $region28: #{cnn_forward.1} parent=0 // pred_region
    _
  $region29: #{cnn_forward.1} parent=0 // pred_fallthru
    _
  // Predicated region
  $region30: #{cnn_forward.1} parent=0 // pred_check
    _
  $region31: #{cnn_forward.1} parent=0 // pred_check_branch
    %33 = sbr.rel (0) target = $region33
  $region32: #{cnn_forward.1} parent=0 // pred_region
    _
  $region33: #{cnn_forward.1} parent=0 // pred_fallthru
    _
  // Predicated region
  $region34: #{cnn_forward.1} parent=0 // pred_check
    _
  $region35: #{cnn_forward.1} parent=0 // pred_check_branch
    %35 = sbr.rel (0) target = $region37
  $region36: #{cnn_forward.1} parent=0 // pred_region
    _
  $region37: #{cnn_forward.1} parent=0 // pred_fallthru
    _
  // Predicated region
  $region38: #{cnn_forward.1} parent=0 // pred_check
    _
  $region39: #{cnn_forward.1} parent=0 // pred_check_branch
    %37 = sbr.rel (0) target = $region41
  $region40: #{cnn_forward.1} parent=0 // pred_region
    _
  $region41: #{cnn_forward.1} parent=0 // pred_fallthru
    _
  // Predicated region
  $region42: #{cnn_forward.1} parent=0 // pred_check
    _
  $region43: #{cnn_forward.1} parent=0 // pred_check_branch
    %39 = sbr.rel (0) target = $region45
  $region44: #{cnn_forward.1} parent=0 // pred_region
    _
  $region45: #{cnn_forward.1} parent=0 // pred_fallthru
    _
  // Predicated region
  $region46: #{cnn_forward.1} parent=0 // pred_check
    _
  $region47: #{cnn_forward.1} parent=0 // pred_check_branch
    %41 = sbr.rel (0) target = $region49
  $region48: #{cnn_forward.1} parent=0 // pred_region
    _
  $region49: #{cnn_forward.1} parent=0 // pred_fallthru
    _
  // Predicated region
  $region50: #{cnn_forward.1} parent=0 // pred_check
    _
  $region51: #{cnn_forward.1} parent=0 // pred_check_branch
    %43 = sbr.rel (0) target = $region53
  $region52: #{cnn_forward.1} parent=0 // pred_region
    _
  $region53: #{cnn_forward.1} parent=0 // pred_fallthru
    _
  %v45 = vld [vmem:[%s0] sm:$0xff]
  %v46 = vld [vmem:[%s0 + $0x8] sm:$0xff]
  %v47 = vld [vmem:[%s0 + $0x10] sm:$0xff]
  %v48 = vld [vmem:[%s0 + $0x18] sm:$0xff]
  %v49 = vld [vmem:[%s0 + $0x20] sm:$0xff]
  %v50 = vld [vmem:[%s0 + $0x28] sm:$0xff]
  %v51 = vld [vmem:[%s0 + $0x30] sm:$0xff]
  %v52 = vld [vmem:[%s0 + $0x38] sm:$0xff]
  %v53 = vld [vmem:[%s0 + $0x40] sm:$0xff]
  %v54 = vld [vmem:[%s0 + $0x48] sm:$0xff]
  %v55 = vld [vmem:[%s0 + $0x50] sm:$0xff]
  %v56 = vld [vmem:[%s0 + $0x58] sm:$0xff]
  %v57 = vld [vmem:[%s0 + $0x60] sm:$0xff]
  %v58 = vld [vmem:[%s0 + $0x68] sm:$0xff]
  %v59 = vld [vmem:[%s0 + $0x70] sm:$0xff]
  %v60 = vld [vmem:[%s0 + $0x78] sm:$0xff]
  %v61 = vld [vmem:[%s0 + $0x80] sm:$0xff]
  %v62 = vld [vmem:[%s0 + $0x88] sm:$0xff]
  %v63 = vld [vmem:[%s0 + $0x90] sm:$0xff]
  %v64 = vld [vmem:[%s0 + $0x98] sm:$0xff]
  %v65 = vld [vmem:[%s0 + $0xa0] sm:$0xff]
  %v66 = vld [vmem:[%s0 + $0xa8] sm:$0xff]
  %v67 = vld [vmem:[%s0 + $0xb0] sm:$0xff]
  %v68 = vld [vmem:[%s0 + $0xb8] sm:$0xff]
  %v69 = vld [vmem:[%s0 + $0xc0] sm:$0xff]
  %v70 = vld [vmem:[%s0 + $0xc8] sm:$0xff]
  %v71 = vld [vmem:[%s0 + $0xd0] sm:$0xff]
  %v72 = vld [vmem:[%s0 + $0xd8] sm:$0xff]
  %v73 = vld [vmem:[%s0 + $0xe0] sm:$0xff]
  %v74 = vld [vmem:[%s0 + $0xe8] sm:$0xff]
  %v75 = vld [vmem:[%s0 + $0xf0] sm:$0xff]
  %v76 = vld [vmem:[%s0 + $0xf8] sm:$0xff]
  %vm77 = vcmask 261120
  %78 = vst.msk [vmem:[#allocation2] sm:$0xff] %vm77, %v45
  %79 = vst.msk [vmem:[#allocation2 + $0x8] sm:$0xff] %vm77, %v46
  %80 = vst.msk [vmem:[#allocation2 + $0x10] sm:$0xff] %vm77, %v47
  %81 = vst.msk [vmem:[#allocation2 + $0x18] sm:$0xff] %vm77, %v48
  %82 = vst.msk [vmem:[#allocation2 + $0x20] sm:$0xff] %vm77, %v49
  %83 = vst.msk [vmem:[#allocation2 + $0x28] sm:$0xff] %vm77, %v50
  %84 = vst.msk [vmem:[#allocation2 + $0x30] sm:$0xff] %vm77, %v51
  %85 = vst.msk [vmem:[#allocation2 + $0x38] sm:$0xff] %vm77, %v52
  %86 = vst.msk [vmem:[#allocation2 + $0x40] sm:$0xff] %vm77, %v53
  %87 = vst.msk [vmem:[#allocation2 + $0x48] sm:$0xff] %vm77, %v54
  %88 = vst.msk [vmem:[#allocation2 + $0x50] sm:$0xff] %vm77, %v55
  %89 = vst.msk [vmem:[#allocation2 + $0x58] sm:$0xff] %vm77, %v56
  %90 = vst.msk [vmem:[#allocation2 + $0x60] sm:$0xff] %vm77, %v57
  %91 = vst.msk [vmem:[#allocation2 + $0x68] sm:$0xff] %vm77, %v58
  %92 = vst.msk [vmem:[#allocation2 + $0x70] sm:$0xff] %vm77, %v59
  %93 = vst.msk [vmem:[#allocation2 + $0x78] sm:$0xff] %vm77, %v60
  %94 = vst.msk [vmem:[#allocation2 + $0x80] sm:$0xff] %vm77, %v61
  %95 = vst.msk [vmem:[#allocation2 + $0x88] sm:$0xff] %vm77, %v62
  %96 = vst.msk [vmem:[#allocation2 + $0x90] sm:$0xff] %vm77, %v63
  %97 = vst.msk [vmem:[#allocation2 + $0x98] sm:$0xff] %vm77, %v64
  %98 = vst.msk [vmem:[#allocation2 + $0xa0] sm:$0xff] %vm77, %v65
  %99 = vst.msk [vmem:[#allocation2 + $0xa8] sm:$0xff] %vm77, %v66
  %100 = vst.msk [vmem:[#allocation2 + $0xb0] sm:$0xff] %vm77, %v67
  %101 = vst.msk [vmem:[#allocation2 + $0xb8] sm:$0xff] %vm77, %v68
  %102 = vst.msk [vmem:[#allocation2 + $0xc0] sm:$0xff] %vm77, %v69
  %103 = vst.msk [vmem:[#allocation2 + $0xc8] sm:$0xff] %vm77, %v70
  %104 = vst.msk [vmem:[#allocation2 + $0xd0] sm:$0xff] %vm77, %v71
  %105 = vst.msk [vmem:[#allocation2 + $0xd8] sm:$0xff] %vm77, %v72
  %106 = vst.msk [vmem:[#allocation2 + $0xe0] sm:$0xff] %vm77, %v73
  %107 = vst.msk [vmem:[#allocation2 + $0xe8] sm:$0xff] %vm77, %v74
  %108 = vst.msk [vmem:[#allocation2 + $0xf0] sm:$0xff] %vm77, %v75
  %109 = vst.msk [vmem:[#allocation2 + $0xf8] sm:$0xff] %vm77, %v76
  %110 = vst.msk [vmem:[#allocation2 + $0x100] sm:$0xff] %vm77, 0.0
  %v111 = vld [vmem:[#allocation2] sm:$0xff]
  %v112 = vld [vmem:[#allocation2 + $0x8] sm:$0xff]
  %v113 = vld [vmem:[#allocation2 + $0x10] sm:$0xff]
  %v114 = vld [vmem:[#allocation2 + $0x18] sm:$0xff]
  %v115 = vld [vmem:[#allocation2 + $0x20] sm:$0xff]
  %v116 = vld [vmem:[#allocation2 + $0x28] sm:$0xff]
  %v117 = vld [vmem:[#allocation2 + $0x30] sm:$0xff]
  %v118 = vld [vmem:[#allocation2 + $0x38] sm:$0xff]
  %v119 = vld [vmem:[#allocation2 + $0x40] sm:$0xff]
  %v120 = vld [vmem:[#allocation2 + $0x48] sm:$0xff]
  %v121 = vld [vmem:[#allocation2 + $0x50] sm:$0xff]
  %v122 = vld [vmem:[#allocation2 + $0x58] sm:$0xff]
  %v123 = vld [vmem:[#allocation2 + $0x60] sm:$0xff]
  %v124 = vld [vmem:[#allocation2 + $0x68] sm:$0xff]
  %v125 = vld [vmem:[#allocation2 + $0x70] sm:$0xff]
  %v126 = vld [vmem:[#allocation2 + $0x78] sm:$0xff]
  %v127 = vld [vmem:[#allocation2 + $0x80] sm:$0xff]
  %v128 = vld [vmem:[#allocation2 + $0x88] sm:$0xff]
  %v129 = vld [vmem:[#allocation2 + $0x90] sm:$0xff]
  %v130 = vld [vmem:[#allocation2 + $0x98] sm:$0xff]
  %v131 = vld [vmem:[#allocation2 + $0xa0] sm:$0xff]
  %v132 = vld [vmem:[#allocation2 + $0xa8] sm:$0xff]
  %v133 = vld [vmem:[#allocation2 + $0xb0] sm:$0xff]
  %v134 = vld [vmem:[#allocation2 + $0xb8] sm:$0xff]
  %v135 = vld [vmem:[#allocation2 + $0xc0] sm:$0xff]
  %v136 = vld [vmem:[#allocation2 + $0xc8] sm:$0xff]
  %v137 = vld [vmem:[#allocation2 + $0xd0] sm:$0xff]
  %v138 = vld [vmem:[#allocation2 + $0xd8] sm:$0xff]
  %v139 = vld [vmem:[#allocation2 + $0xe0] sm:$0xff]
  %v140 = vld [vmem:[#allocation2 + $0xe8] sm:$0xff]
  %v141 = vld [vmem:[#allocation2 + $0xf0] sm:$0xff]
  %v142 = vld [vmem:[#allocation2 + $0xf8] sm:$0xff]
  %v143 = vpack.c.bf16 %v112, %v111
  %v144 = vpack.c.bf16 %v114, %v113
  %v145 = vpack.c.bf16 %v116, %v115
  %v146 = vpack.c.bf16 %v118, %v117
  %v147 = vpack.c.bf16 %v120, %v119
  %v148 = vpack.c.bf16 %v122, %v121
  %v149 = vpack.c.bf16 %v124, %v123
  %v150 = vpack.c.bf16 %v126, %v125
  %v151 = vpack.c.bf16 %v128, %v127
  %v152 = vpack.c.bf16 %v130, %v129
  %v153 = vpack.c.bf16 %v132, %v131
  %v154 = vpack.c.bf16 %v134, %v133
  %v155 = vpack.c.bf16 %v136, %v135
  %v156 = vpack.c.bf16 %v138, %v137
  %v157 = vpack.c.bf16 %v140, %v139
  %v158 = vpack.c.bf16 %v142, %v141
  %v159 = vld [vmem:[%s1] sm:$0xff]
  %v160 = vld [vmem:[%s1 + $0x8] sm:$0xff]
  %v161 = vld [vmem:[%s1 + $0x10] sm:$0xff]
  %v162 = vld [vmem:[%s1 + $0x18] sm:$0xff]
  %v163 = vld [vmem:[#allocation2 + $0x1] sm:$0xff]
  %v164 = vld [vmem:[#allocation2 + $0x9] sm:$0xff]
  %v165 = vld [vmem:[#allocation2 + $0x11] sm:$0xff]
  %v166 = vld [vmem:[#allocation2 + $0x19] sm:$0xff]
  %v167 = vld [vmem:[#allocation2 + $0x21] sm:$0xff]
  %v168 = vld [vmem:[#allocation2 + $0x29] sm:$0xff]
  %v169 = vld [vmem:[#allocation2 + $0x31] sm:$0xff]
  %v170 = vld [vmem:[#allocation2 + $0x39] sm:$0xff]
  %v171 = vld [vmem:[#allocation2 + $0x41] sm:$0xff]
  %v172 = vld [vmem:[#allocation2 + $0x49] sm:$0xff]
  %v173 = vld [vmem:[#allocation2 + $0x51] sm:$0xff]
  %v174 = vld [vmem:[#allocation2 + $0x59] sm:$0xff]
  %v175 = vld [vmem:[#allocation2 + $0x61] sm:$0xff]
  %v176 = vld [vmem:[#allocation2 + $0x69] sm:$0xff]
  %v177 = vld [vmem:[#allocation2 + $0x71] sm:$0xff]
  %v178 = vld [vmem:[#allocation2 + $0x79] sm:$0xff]
  %v179 = vld [vmem:[#allocation2 + $0x81] sm:$0xff]
  %v180 = vld [vmem:[#allocation2 + $0x89] sm:$0xff]
  %v181 = vld [vmem:[#allocation2 + $0x91] sm:$0xff]
  %v182 = vld [vmem:[#allocation2 + $0x99] sm:$0xff]
  %v183 = vld [vmem:[#allocation2 + $0xa1] sm:$0xff]
  %v184 = vld [vmem:[#allocation2 + $0xa9] sm:$0xff]
  %v185 = vld [vmem:[#allocation2 + $0xb1] sm:$0xff]
  %v186 = vld [vmem:[#allocation2 + $0xb9] sm:$0xff]
  %v187 = vld [vmem:[#allocation2 + $0xc1] sm:$0xff]
  %v188 = vld [vmem:[#allocation2 + $0xc9] sm:$0xff]
  %v189 = vld [vmem:[#allocation2 + $0xd1] sm:$0xff]
  %v190 = vld [vmem:[#allocation2 + $0xd9] sm:$0xff]
  %v191 = vld [vmem:[#allocation2 + $0xe1] sm:$0xff]
  %v192 = vld [vmem:[#allocation2 + $0xe9] sm:$0xff]
  %v193 = vld [vmem:[#allocation2 + $0xf1] sm:$0xff]
  %v194 = vld [vmem:[#allocation2 + $0xf9] sm:$0xff]
  %v195 = vpack.c.bf16 %v164, %v163
  %v196 = vpack.c.bf16 %v166, %v165
  %v197 = vpack.c.bf16 %v168, %v167
  %v198 = vpack.c.bf16 %v170, %v169
  %v199 = vpack.c.bf16 %v172, %v171
  %v200 = vpack.c.bf16 %v174, %v173
  %v201 = vpack.c.bf16 %v176, %v175
  %v202 = vpack.c.bf16 %v178, %v177
  %v203 = vpack.c.bf16 %v180, %v179
  %v204 = vpack.c.bf16 %v182, %v181
  %v205 = vpack.c.bf16 %v184, %v183
  %v206 = vpack.c.bf16 %v186, %v185
  %v207 = vpack.c.bf16 %v188, %v187
  %v208 = vpack.c.bf16 %v190, %v189
  %v209 = vpack.c.bf16 %v192, %v191
  %v210 = vpack.c.bf16 %v194, %v193
  %s211 = scalar_lea.vmem %s1, 32
  %v212 = vld [vmem:[%s211] sm:$0xff]
  %v213 = vld [vmem:[%s211 + $0x8] sm:$0xff]
  %v214 = vld [vmem:[%s211 + $0x10] sm:$0xff]
  %v215 = vld [vmem:[%s211 + $0x18] sm:$0xff]
  %v220 = vunpack.c.l.b16 %v212
  %v221 = vunpack.c.h.b16 %v212
  %v222 = vunpack.c.l.b16 %v213
  %v223 = vunpack.c.h.b16 %v213
  %v224 = vunpack.c.l.b16 %v214
  %v225 = vunpack.c.h.b16 %v214
  %v226 = vunpack.c.l.b16 %v215
  %v227 = vunpack.c.h.b16 %v215
  %v228 = vpack.c.b16 %v222, %v220
  %v229 = vpack.c.b16 %v223, %v221
  %v230 = vpack.c.b16 %v226, %v224
  %v231 = vpack.c.b16 %v227, %v225
  %v237 = vsel %vm77, %v195, 0
  %v240 = vsel %vm77, %v196, 0
  %v243 = vsel %vm77, %v197, 0
  %v246 = vsel %vm77, %v198, 0
  %v249 = vsel %vm77, %v199, 0
  %v252 = vsel %vm77, %v200, 0
  %v255 = vsel %vm77, %v201, 0
  %v258 = vsel %vm77, %v202, 0
  %v261 = vsel %vm77, %v203, 0
  %v264 = vsel %vm77, %v204, 0
  %v267 = vsel %vm77, %v205, 0
  %v270 = vsel %vm77, %v206, 0
  %v273 = vsel %vm77, %v207, 0
  %v276 = vsel %vm77, %v208, 0
  %v279 = vsel %vm77, %v209, 0
  %v282 = vsel %vm77, %v210, 0
  %284 = vmatprep.subr.bf16.mxu0 %v229
  %285 = vmatpush1.bf16.msra.mxu0 %v228
  %286 = vmatprep.subr.bf16.mxu0 %v231
  %287 = vmatpush1.bf16.msra.mxu0 %v230
  %288 = vmatprep.subr.bf16.mxu0 0
  %289 = vmatpush1.bf16.msra.mxu0 0
  %290 = vmatprep.subr.bf16.mxu0 0
  %291 = vmatpush1.bf16.msra.mxu0 0
  %292 = vmatprep.subr.bf16.mxu0 0
  %293 = vmatpush1.bf16.msra.mxu0 0
  %294 = vmatprep.subr.bf16.mxu0 0
  %295 = vmatpush1.bf16.msra.mxu0 0
  %296 = vmatprep.subr.bf16.mxu0 0
  %297 = vmatpush1.bf16.msra.mxu0 0
  %298 = vmatprep.subr.bf16.mxu0 0
  %299 = vmatpush1.bf16.msra.mxu0 0
  %300 = vmatprep.subr.bf16.mxu0 0
  %301 = vmatpush1.bf16.msra.mxu0 0
  %302 = vmatprep.subr.bf16.mxu0 0
  %303 = vmatpush1.bf16.msra.mxu0 0
  %304 = vmatprep.subr.bf16.mxu0 0
  %305 = vmatpush1.bf16.msra.mxu0 0
  %306 = vmatprep.subr.bf16.mxu0 0
  %307 = vmatpush1.bf16.msra.mxu0 0
  %308 = vmatprep.subr.bf16.mxu0 0
  %309 = vmatpush1.bf16.msra.mxu0 0
  %310 = vmatprep.subr.bf16.mxu0 0
  %311 = vmatpush1.bf16.msra.mxu0 0
  %312 = vmatprep.subr.bf16.mxu0 0
  %313 = vmatpush1.bf16.msra.mxu0 0
  %314 = vmatprep.subr.bf16.mxu0 0
  %315 = vmatpush1.bf16.msra.mxu0 0
  %316 = vmatprep.mubr.bf16.mxu0 0
  %317 = vmatmul.mubr.bf16.gmra.mrb[0].mxu0 %v237
  %v318 = vpop.f32.mrb[0].mxu0
  %v319 = vadd.f32 0.0, %v318
  %v320 = vpop.f32.mrb[0].mxu0
  %v321 = vadd.f32 0.0, %v320
  %v322 = vpop.f32.mrb[0].mxu0
  %v323 = vadd.f32 0.0, %v322
  %v324 = vpop.f32.mrb[0].mxu0
  %v325 = vadd.f32 0.0, %v324
  %326 = vmatprep.mubr.bf16.mxu0 0
  %327 = vmatmul.mubr.bf16.gmra.mrb[0].mxu0 %v240
  %v328 = vpop.f32.mrb[0].mxu0
  %v329 = vadd.f32 0.0, %v328
  %v330 = vpop.f32.mrb[0].mxu0
  %v331 = vadd.f32 0.0, %v330
  %v332 = vpop.f32.mrb[0].mxu0
  %v333 = vadd.f32 0.0, %v332
  %v334 = vpop.f32.mrb[0].mxu0
  %v335 = vadd.f32 0.0, %v334
  %336 = vmatprep.mubr.bf16.mxu0 0
  %337 = vmatmul.mubr.bf16.gmra.mrb[0].mxu0 %v243
  %v338 = vpop.f32.mrb[0].mxu0
  %v339 = vadd.f32 0.0, %v338
  %v340 = vpop.f32.mrb[0].mxu0
  %v341 = vadd.f32 0.0, %v340
  %v342 = vpop.f32.mrb[0].mxu0
  %v343 = vadd.f32 0.0, %v342
  %v344 = vpop.f32.mrb[0].mxu0
  %v345 = vadd.f32 0.0, %v344
  %346 = vmatprep.mubr.bf16.mxu0 0
  %347 = vmatmul.mubr.bf16.gmra.mrb[0].mxu0 %v246
  %v348 = vpop.f32.mrb[0].mxu0
  %v349 = vadd.f32 0.0, %v348
  %v350 = vpop.f32.mrb[0].mxu0
  %v351 = vadd.f32 0.0, %v350
  %v352 = vpop.f32.mrb[0].mxu0
  %v353 = vadd.f32 0.0, %v352
  %v354 = vpop.f32.mrb[0].mxu0
  %v355 = vadd.f32 0.0, %v354
  %356 = vmatprep.mubr.bf16.mxu0 0
  %357 = vmatmul.mubr.bf16.gmra.mrb[0].mxu0 %v249
  %v358 = vpop.f32.mrb[0].mxu0
  %v359 = vadd.f32 0.0, %v358
  %v360 = vpop.f32.mrb[0].mxu0
  %v361 = vadd.f32 0.0, %v360
  %v362 = vpop.f32.mrb[0].mxu0
  %v363 = vadd.f32 0.0, %v362
  %v364 = vpop.f32.mrb[0].mxu0
  %v365 = vadd.f32 0.0, %v364
  %366 = vmatprep.mubr.bf16.mxu0 0
  %367 = vmatmul.mubr.bf16.gmra.mrb[0].mxu0 %v252
  %v368 = vpop.f32.mrb[0].mxu0
  %v369 = vadd.f32 0.0, %v368
  %v370 = vpop.f32.mrb[0].mxu0
  %v371 = vadd.f32 0.0, %v370
  %v372 = vpop.f32.mrb[0].mxu0
  %v373 = vadd.f32 0.0, %v372
  %v374 = vpop.f32.mrb[0].mxu0
  %v375 = vadd.f32 0.0, %v374
  %376 = vmatprep.mubr.bf16.mxu0 0
  %377 = vmatmul.mubr.bf16.gmra.mrb[0].mxu0 %v255
  %v378 = vpop.f32.mrb[0].mxu0
  %v379 = vadd.f32 0.0, %v378
  %v380 = vpop.f32.mrb[0].mxu0
  %v381 = vadd.f32 0.0, %v380
  %v382 = vpop.f32.mrb[0].mxu0
  %v383 = vadd.f32 0.0, %v382
  %v384 = vpop.f32.mrb[0].mxu0
  %v385 = vadd.f32 0.0, %v384
  %386 = vmatprep.mubr.bf16.mxu0 0
  %387 = vmatmul.mubr.bf16.gmra.mrb[0].mxu0 %v258
  %v388 = vpop.f32.mrb[0].mxu0
  %v389 = vadd.f32 0.0, %v388
  %v390 = vpop.f32.mrb[0].mxu0
  %v391 = vadd.f32 0.0, %v390
  %v392 = vpop.f32.mrb[0].mxu0
  %v393 = vadd.f32 0.0, %v392
  %v394 = vpop.f32.mrb[0].mxu0
  %v395 = vadd.f32 0.0, %v394
  %396 = vmatprep.mubr.bf16.mxu0 0
  %397 = vmatmul.mubr.bf16.gmra.mrb[0].mxu0 %v261
  %v398 = vpop.f32.mrb[0].mxu0
  %v399 = vadd.f32 0.0, %v398
  %v400 = vpop.f32.mrb[0].mxu0
  %v401 = vadd.f32 0.0, %v400
  %v402 = vpop.f32.mrb[0].mxu0
  %v403 = vadd.f32 0.0, %v402
  %v404 = vpop.f32.mrb[0].mxu0
  %v405 = vadd.f32 0.0, %v404
  %406 = vmatprep.mubr.bf16.mxu0 0
  %407 = vmatmul.mubr.bf16.gmra.mrb[0].mxu0 %v264
  %v408 = vpop.f32.mrb[0].mxu0
  %v409 = vadd.f32 0.0, %v408
  %v410 = vpop.f32.mrb[0].mxu0
  %v411 = vadd.f32 0.0, %v410
  %v412 = vpop.f32.mrb[0].mxu0
  %v413 = vadd.f32 0.0, %v412
  %v414 = vpop.f32.mrb[0].mxu0
  %v415 = vadd.f32 0.0, %v414
  %416 = vmatprep.mubr.bf16.mxu0 0
  %417 = vmatmul.mubr.bf16.gmra.mrb[0].mxu0 %v267
  %v418 = vpop.f32.mrb[0].mxu0
  %v419 = vadd.f32 0.0, %v418
  %v420 = vpop.f32.mrb[0].mxu0
  %v421 = vadd.f32 0.0, %v420
  %v422 = vpop.f32.mrb[0].mxu0
  %v423 = vadd.f32 0.0, %v422
  %v424 = vpop.f32.mrb[0].mxu0
  %v425 = vadd.f32 0.0, %v424
  %426 = vmatprep.mubr.bf16.mxu0 0
  %427 = vmatmul.mubr.bf16.gmra.mrb[0].mxu0 %v270
  %v428 = vpop.f32.mrb[0].mxu0
  %v429 = vadd.f32 0.0, %v428
  %v430 = vpop.f32.mrb[0].mxu0
  %v431 = vadd.f32 0.0, %v430
  %v432 = vpop.f32.mrb[0].mxu0
  %v433 = vadd.f32 0.0, %v432
  %v434 = vpop.f32.mrb[0].mxu0
  %v435 = vadd.f32 0.0, %v434
  %436 = vmatprep.mubr.bf16.mxu0 0
  %437 = vmatmul.mubr.bf16.gmra.mrb[0].mxu0 %v273
  %v438 = vpop.f32.mrb[0].mxu0
  %v439 = vadd.f32 0.0, %v438
  %v440 = vpop.f32.mrb[0].mxu0
  %v441 = vadd.f32 0.0, %v440
  %v442 = vpop.f32.mrb[0].mxu0
  %v443 = vadd.f32 0.0, %v442
  %v444 = vpop.f32.mrb[0].mxu0
  %v445 = vadd.f32 0.0, %v444
  %446 = vmatprep.mubr.bf16.mxu0 0
  %447 = vmatmul.mubr.bf16.gmra.mrb[0].mxu0 %v276
  %v448 = vpop.f32.mrb[0].mxu0
  %v449 = vadd.f32 0.0, %v448
  %v450 = vpop.f32.mrb[0].mxu0
  %v451 = vadd.f32 0.0, %v450
  %v452 = vpop.f32.mrb[0].mxu0
  %v453 = vadd.f32 0.0, %v452
  %v454 = vpop.f32.mrb[0].mxu0
  %v455 = vadd.f32 0.0, %v454
  %456 = vmatprep.mubr.bf16.mxu0 0
  %457 = vmatmul.mubr.bf16.gmra.mrb[0].mxu0 %v279
  %v458 = vpop.f32.mrb[0].mxu0
  %v459 = vadd.f32 0.0, %v458
  %v460 = vpop.f32.mrb[0].mxu0
  %v461 = vadd.f32 0.0, %v460
  %v462 = vpop.f32.mrb[0].mxu0
  %v463 = vadd.f32 0.0, %v462
  %v464 = vpop.f32.mrb[0].mxu0
  %v465 = vadd.f32 0.0, %v464
  %466 = vmatprep.mubr.bf16.mxu0 0
  %467 = vmatmul.mubr.bf16.gmra.mrb[0].mxu0 %v282
  %v468 = vpop.f32.mrb[0].mxu0
  %v469 = vadd.f32 0.0, %v468
  %v470 = vpop.f32.mrb[0].mxu0
  %v471 = vadd.f32 0.0, %v470
  %v472 = vpop.f32.mrb[0].mxu0
  %v473 = vadd.f32 0.0, %v472
  %v474 = vpop.f32.mrb[0].mxu0
  %v475 = vadd.f32 0.0, %v474
  %476 = vdwg.mxu0
  %v481 = vunpack.c.l.b16 %v159
  %v482 = vunpack.c.h.b16 %v159
  %v483 = vunpack.c.l.b16 %v160
  %v484 = vunpack.c.h.b16 %v160
  %v485 = vunpack.c.l.b16 %v161
  %v486 = vunpack.c.h.b16 %v161
  %v487 = vunpack.c.l.b16 %v162
  %v488 = vunpack.c.h.b16 %v162
  %v489 = vpack.c.b16 %v483, %v481
  %v490 = vpack.c.b16 %v484, %v482
  %v491 = vpack.c.b16 %v487, %v485
  %v492 = vpack.c.b16 %v488, %v486
  %v498 = vsel %vm77, %v143, 0
  %v501 = vsel %vm77, %v144, 0
  %v504 = vsel %vm77, %v145, 0
  %v507 = vsel %vm77, %v146, 0
  %v510 = vsel %vm77, %v147, 0
  %v513 = vsel %vm77, %v148, 0
  %v516 = vsel %vm77, %v149, 0
  %v519 = vsel %vm77, %v150, 0
  %v522 = vsel %vm77, %v151, 0
  %v525 = vsel %vm77, %v152, 0
  %v528 = vsel %vm77, %v153, 0
  %v531 = vsel %vm77, %v154, 0
  %v534 = vsel %vm77, %v155, 0
  %v537 = vsel %vm77, %v156, 0
  %v540 = vsel %vm77, %v157, 0
  %v543 = vsel %vm77, %v158, 0
  %545 = vmatprep.subr.bf16.mxu0 %v490
  %546 = vmatpush1.bf16.msra.mxu0 %v489
  %547 = vmatprep.subr.bf16.mxu0 %v492
  %548 = vmatpush1.bf16.msra.mxu0 %v491
  %549 = vmatprep.subr.bf16.mxu0 0
  %550 = vmatpush1.bf16.msra.mxu0 0
  %551 = vmatprep.subr.bf16.mxu0 0
  %552 = vmatpush1.bf16.msra.mxu0 0
  %553 = vmatprep.subr.bf16.mxu0 0
  %554 = vmatpush1.bf16.msra.mxu0 0
  %555 = vmatprep.subr.bf16.mxu0 0
  %556 = vmatpush1.bf16.msra.mxu0 0
  %557 = vmatprep.subr.bf16.mxu0 0
  %558 = vmatpush1.bf16.msra.mxu0 0
  %559 = vmatprep.subr.bf16.mxu0 0
  %560 = vmatpush1.bf16.msra.mxu0 0
  %561 = vmatprep.subr.bf16.mxu0 0
  %562 = vmatpush1.bf16.msra.mxu0 0
  %563 = vmatprep.subr.bf16.mxu0 0
  %564 = vmatpush1.bf16.msra.mxu0 0
  %565 = vmatprep.subr.bf16.mxu0 0
  %566 = vmatpush1.bf16.msra.mxu0 0
  %567 = vmatprep.subr.bf16.mxu0 0
  %568 = vmatpush1.bf16.msra.mxu0 0
  %569 = vmatprep.subr.bf16.mxu0 0
  %570 = vmatpush1.bf16.msra.mxu0 0
  %571 = vmatprep.subr.bf16.mxu0 0
  %572 = vmatpush1.bf16.msra.mxu0 0
  %573 = vmatprep.subr.bf16.mxu0 0
  %574 = vmatpush1.bf16.msra.mxu0 0
  %575 = vmatprep.subr.bf16.mxu0 0
  %576 = vmatpush1.bf16.msra.mxu0 0
  %577 = vmatprep.mubr.bf16.mxu0 0
  %578 = vmatmul.mubr.bf16.gmra.mrb[0].mxu0 %v498
  %v579 = vpop.f32.mrb[0].mxu0
  %v580 = vadd.f32 %v319, %v579
  %v581 = vpop.f32.mrb[0].mxu0
  %v582 = vadd.f32 %v321, %v581
  %v583 = vpop.f32.mrb[0].mxu0
  %v584 = vadd.f32 %v323, %v583
  %v585 = vpop.f32.mrb[0].mxu0
  %v586 = vadd.f32 %v325, %v585
  %587 = vmatprep.mubr.bf16.mxu0 0
  %588 = vmatmul.mubr.bf16.gmra.mrb[0].mxu0 %v501
  %v589 = vpop.f32.mrb[0].mxu0
  %v590 = vadd.f32 %v329, %v589
  %v591 = vpop.f32.mrb[0].mxu0
  %v592 = vadd.f32 %v331, %v591
  %v593 = vpop.f32.mrb[0].mxu0
  %v594 = vadd.f32 %v333, %v593
  %v595 = vpop.f32.mrb[0].mxu0
  %v596 = vadd.f32 %v335, %v595
  %597 = vmatprep.mubr.bf16.mxu0 0
  %598 = vmatmul.mubr.bf16.gmra.mrb[0].mxu0 %v504
  %v599 = vpop.f32.mrb[0].mxu0
  %v600 = vadd.f32 %v339, %v599
  %v601 = vpop.f32.mrb[0].mxu0
  %v602 = vadd.f32 %v341, %v601
  %v603 = vpop.f32.mrb[0].mxu0
  %v604 = vadd.f32 %v343, %v603
  %v605 = vpop.f32.mrb[0].mxu0
  %v606 = vadd.f32 %v345, %v605
  %607 = vmatprep.mubr.bf16.mxu0 0
  %608 = vmatmul.mubr.bf16.gmra.mrb[0].mxu0 %v507
  %v609 = vpop.f32.mrb[0].mxu0
  %v610 = vadd.f32 %v349, %v609
  %v611 = vpop.f32.mrb[0].mxu0
  %v612 = vadd.f32 %v351, %v611
  %v613 = vpop.f32.mrb[0].mxu0
  %v614 = vadd.f32 %v353, %v613
  %v615 = vpop.f32.mrb[0].mxu0
  %v616 = vadd.f32 %v355, %v615
  %617 = vmatprep.mubr.bf16.mxu0 0
  %618 = vmatmul.mubr.bf16.gmra.mrb[0].mxu0 %v510
  %v619 = vpop.f32.mrb[0].mxu0
  %v620 = vadd.f32 %v359, %v619
  %v621 = vpop.f32.mrb[0].mxu0
  %v622 = vadd.f32 %v361, %v621
  %v623 = vpop.f32.mrb[0].mxu0
  %v624 = vadd.f32 %v363, %v623
  %v625 = vpop.f32.mrb[0].mxu0
  %v626 = vadd.f32 %v365, %v625
  %627 = vmatprep.mubr.bf16.mxu0 0
  %628 = vmatmul.mubr.bf16.gmra.mrb[0].mxu0 %v513
  %v629 = vpop.f32.mrb[0].mxu0
  %v630 = vadd.f32 %v369, %v629
  %v631 = vpop.f32.mrb[0].mxu0
  %v632 = vadd.f32 %v371, %v631
  %v633 = vpop.f32.mrb[0].mxu0
  %v634 = vadd.f32 %v373, %v633
  %v635 = vpop.f32.mrb[0].mxu0
  %v636 = vadd.f32 %v375, %v635
  %637 = vmatprep.mubr.bf16.mxu0 0
  %638 = vmatmul.mubr.bf16.gmra.mrb[0].mxu0 %v516
  %v639 = vpop.f32.mrb[0].mxu0
  %v640 = vadd.f32 %v379, %v639
  %v641 = vpop.f32.mrb[0].mxu0
  %v642 = vadd.f32 %v381, %v641
  %v643 = vpop.f32.mrb[0].mxu0
  %v644 = vadd.f32 %v383, %v643
  %v645 = vpop.f32.mrb[0].mxu0
  %v646 = vadd.f32 %v385, %v645
  %647 = vmatprep.mubr.bf16.mxu0 0
  %648 = vmatmul.mubr.bf16.gmra.mrb[0].mxu0 %v519
  %v649 = vpop.f32.mrb[0].mxu0
  %v650 = vadd.f32 %v389, %v649
  %v651 = vpop.f32.mrb[0].mxu0
  %v652 = vadd.f32 %v391, %v651
  %v653 = vpop.f32.mrb[0].mxu0
  %v654 = vadd.f32 %v393, %v653
  %v655 = vpop.f32.mrb[0].mxu0
  %v656 = vadd.f32 %v395, %v655
  %657 = vmatprep.mubr.bf16.mxu0 0
  %658 = vmatmul.mubr.bf16.gmra.mrb[0].mxu0 %v522
  %v659 = vpop.f32.mrb[0].mxu0
  %v660 = vadd.f32 %v399, %v659
  %v661 = vpop.f32.mrb[0].mxu0
  %v662 = vadd.f32 %v401, %v661
  %v663 = vpop.f32.mrb[0].mxu0
  %v664 = vadd.f32 %v403, %v663
  %v665 = vpop.f32.mrb[0].mxu0
  %v666 = vadd.f32 %v405, %v665
  %667 = vmatprep.mubr.bf16.mxu0 0
  %668 = vmatmul.mubr.bf16.gmra.mrb[0].mxu0 %v525
  %v669 = vpop.f32.mrb[0].mxu0
  %v670 = vadd.f32 %v409, %v669
  %v671 = vpop.f32.mrb[0].mxu0
  %v672 = vadd.f32 %v411, %v671
  %v673 = vpop.f32.mrb[0].mxu0
  %v674 = vadd.f32 %v413, %v673
  %v675 = vpop.f32.mrb[0].mxu0
  %v676 = vadd.f32 %v415, %v675
  %677 = vmatprep.mubr.bf16.mxu0 0
  %678 = vmatmul.mubr.bf16.gmra.mrb[0].mxu0 %v528
  %v679 = vpop.f32.mrb[0].mxu0
  %v680 = vadd.f32 %v419, %v679
  %v681 = vpop.f32.mrb[0].mxu0
  %v682 = vadd.f32 %v421, %v681
  %v683 = vpop.f32.mrb[0].mxu0
  %v684 = vadd.f32 %v423, %v683
  %v685 = vpop.f32.mrb[0].mxu0
  %v686 = vadd.f32 %v425, %v685
  %687 = vmatprep.mubr.bf16.mxu0 0
  %688 = vmatmul.mubr.bf16.gmra.mrb[0].mxu0 %v531
  %v689 = vpop.f32.mrb[0].mxu0
  %v690 = vadd.f32 %v429, %v689
  %v691 = vpop.f32.mrb[0].mxu0
  %v692 = vadd.f32 %v431, %v691
  %v693 = vpop.f32.mrb[0].mxu0
  %v694 = vadd.f32 %v433, %v693
  %v695 = vpop.f32.mrb[0].mxu0
  %v696 = vadd.f32 %v435, %v695
  %697 = vmatprep.mubr.bf16.mxu0 0
  %698 = vmatmul.mubr.bf16.gmra.mrb[0].mxu0 %v534
  %v699 = vpop.f32.mrb[0].mxu0
  %v700 = vadd.f32 %v439, %v699
  %v701 = vpop.f32.mrb[0].mxu0
  %v702 = vadd.f32 %v441, %v701
  %v703 = vpop.f32.mrb[0].mxu0
  %v704 = vadd.f32 %v443, %v703
  %v705 = vpop.f32.mrb[0].mxu0
  %v706 = vadd.f32 %v445, %v705
  %707 = vmatprep.mubr.bf16.mxu0 0
  %708 = vmatmul.mubr.bf16.gmra.mrb[0].mxu0 %v537
  %v709 = vpop.f32.mrb[0].mxu0
  %v710 = vadd.f32 %v449, %v709
  %v711 = vpop.f32.mrb[0].mxu0
  %v712 = vadd.f32 %v451, %v711
  %v713 = vpop.f32.mrb[0].mxu0
  %v714 = vadd.f32 %v453, %v713
  %v715 = vpop.f32.mrb[0].mxu0
  %v716 = vadd.f32 %v455, %v715
  %717 = vmatprep.mubr.bf16.mxu0 0
  %718 = vmatmul.mubr.bf16.gmra.mrb[0].mxu0 %v540
  %v719 = vpop.f32.mrb[0].mxu0
  %v720 = vadd.f32 %v459, %v719
  %v721 = vpop.f32.mrb[0].mxu0
  %v722 = vadd.f32 %v461, %v721
  %v723 = vpop.f32.mrb[0].mxu0
  %v724 = vadd.f32 %v463, %v723
  %v725 = vpop.f32.mrb[0].mxu0
  %v726 = vadd.f32 %v465, %v725
  %727 = vmatprep.mubr.bf16.mxu0 0
  %728 = vmatmul.mubr.bf16.gmra.mrb[0].mxu0 %v543
  %v729 = vpop.f32.mrb[0].mxu0
  %v730 = vadd.f32 %v469, %v729
  %v731 = vpop.f32.mrb[0].mxu0
  %v732 = vadd.f32 %v471, %v731
  %v733 = vpop.f32.mrb[0].mxu0
  %v734 = vadd.f32 %v473, %v733
  %v735 = vpop.f32.mrb[0].mxu0
  %v736 = vadd.f32 %v475, %v735
  %737 = vdwg.mxu0
  %v738 = vld [vmem:[#allocation2 + $0x2] sm:$0xff]
  %v739 = vld [vmem:[#allocation2 + $0xa] sm:$0xff]
  %v740 = vld [vmem:[#allocation2 + $0x12] sm:$0xff]
  %v741 = vld [vmem:[#allocation2 + $0x1a] sm:$0xff]
  %v742 = vld [vmem:[#allocation2 + $0x22] sm:$0xff]
  %v743 = vld [vmem:[#allocation2 + $0x2a] sm:$0xff]
  %v744 = vld [vmem:[#allocation2 + $0x32] sm:$0xff]
  %v745 = vld [vmem:[#allocation2 + $0x3a] sm:$0xff]
  %v746 = vld [vmem:[#allocation2 + $0x42] sm:$0xff]
  %v747 = vld [vmem:[#allocation2 + $0x4a] sm:$0xff]
  %v748 = vld [vmem:[#allocation2 + $0x52] sm:$0xff]
  %v749 = vld [vmem:[#allocation2 + $0x5a] sm:$0xff]
  %v750 = vld [vmem:[#allocation2 + $0x62] sm:$0xff]
  %v751 = vld [vmem:[#allocation2 + $0x6a] sm:$0xff]
  %v752 = vld [vmem:[#allocation2 + $0x72] sm:$0xff]
  %v753 = vld [vmem:[#allocation2 + $0x7a] sm:$0xff]
  %v754 = vld [vmem:[#allocation2 + $0x82] sm:$0xff]
  %v755 = vld [vmem:[#allocation2 + $0x8a] sm:$0xff]
  %v756 = vld [vmem:[#allocation2 + $0x92] sm:$0xff]
  %v757 = vld [vmem:[#allocation2 + $0x9a] sm:$0xff]
  %v758 = vld [vmem:[#allocation2 + $0xa2] sm:$0xff]
  %v759 = vld [vmem:[#allocation2 + $0xaa] sm:$0xff]
  %v760 = vld [vmem:[#allocation2 + $0xb2] sm:$0xff]
  %v761 = vld [vmem:[#allocation2 + $0xba] sm:$0xff]
  %v762 = vld [vmem:[#allocation2 + $0xc2] sm:$0xff]
  %v763 = vld [vmem:[#allocation2 + $0xca] sm:$0xff]
  %v764 = vld [vmem:[#allocation2 + $0xd2] sm:$0xff]
  %v765 = vld [vmem:[#allocation2 + $0xda] sm:$0xff]
  %v766 = vld [vmem:[#allocation2 + $0xe2] sm:$0xff]
  %v767 = vld [vmem:[#allocation2 + $0xea] sm:$0xff]
  %v768 = vld [vmem:[#allocation2 + $0xf2] sm:$0xff]
  %v769 = vld [vmem:[#allocation2 + $0xfa] sm:$0xff]
  %v770 = vpack.c.bf16 %v739, %v738
  %v771 = vpack.c.bf16 %v741, %v740
  %v772 = vpack.c.bf16 %v743, %v742
  %v773 = vpack.c.bf16 %v745, %v744
  %v774 = vpack.c.bf16 %v747, %v746
  %v775 = vpack.c.bf16 %v749, %v748
  %v776 = vpack.c.bf16 %v751, %v750
  %v777 = vpack.c.bf16 %v753, %v752
  %v778 = vpack.c.bf16 %v755, %v754
  %v779 = vpack.c.bf16 %v757, %v756
  %v780 = vpack.c.bf16 %v759, %v758
  %v781 = vpack.c.bf16 %v761, %v760
  %v782 = vpack.c.bf16 %v763, %v762
  %v783 = vpack.c.bf16 %v765, %v764
  %v784 = vpack.c.bf16 %v767, %v766
  %v785 = vpack.c.bf16 %v769, %v768
  %s786 = scalar_lea.vmem %s1, 64
  %v787 = vld [vmem:[%s786] sm:$0xff]
  %v788 = vld [vmem:[%s786 + $0x8] sm:$0xff]
  %v789 = vld [vmem:[%s786 + $0x10] sm:$0xff]
  %v790 = vld [vmem:[%s786 + $0x18] sm:$0xff]
  %v795 = vunpack.c.l.b16 %v787
  %v796 = vunpack.c.h.b16 %v787
  %v797 = vunpack.c.l.b16 %v788
  %v798 = vunpack.c.h.b16 %v788
  %v799 = vunpack.c.l.b16 %v789
  %v800 = vunpack.c.h.b16 %v789
  %v801 = vunpack.c.l.b16 %v790
  %v802 = vunpack.c.h.b16 %v790
  %v803 = vpack.c.b16 %v797, %v795
  %v804 = vpack.c.b16 %v798, %v796
  %v805 = vpack.c.b16 %v801, %v799
  %v806 = vpack.c.b16 %v802, %v800
  %v812 = vsel %vm77, %v770, 0
  %v815 = vsel %vm77, %v771, 0
  %v818 = vsel %vm77, %v772, 0
  %v821 = vsel %vm77, %v773, 0
  %v824 = vsel %vm77, %v774, 0
  %v827 = vsel %vm77, %v775, 0
  %v830 = vsel %vm77, %v776, 0
  %v833 = vsel %vm77, %v777, 0
  %v836 = vsel %vm77, %v778, 0
  %v839 = vsel %vm77, %v779, 0
  %v842 = vsel %vm77, %v780, 0
  %v845 = vsel %vm77, %v781, 0
  %v848 = vsel %vm77, %v782, 0
  %v851 = vsel %vm77, %v783, 0
  %v854 = vsel %vm77, %v784, 0
  %v857 = vsel %vm77, %v785, 0
  %859 = vmatprep.subr.bf16.mxu0 %v804
  %860 = vmatpush1.bf16.msra.mxu0 %v803
  %861 = vmatprep.subr.bf16.mxu0 %v806
  %862 = vmatpush1.bf16.msra.mxu0 %v805
  %863 = vmatprep.subr.bf16.mxu0 0
  %864 = vmatpush1.bf16.msra.mxu0 0
  %865 = vmatprep.subr.bf16.mxu0 0
  %866 = vmatpush1.bf16.msra.mxu0 0
  %867 = vmatprep.subr.bf16.mxu0 0
  %868 = vmatpush1.bf16.msra.mxu0 0
  %869 = vmatprep.subr.bf16.mxu0 0
  %870 = vmatpush1.bf16.msra.mxu0 0
  %871 = vmatprep.subr.bf16.mxu0 0
  %872 = vmatpush1.bf16.msra.mxu0 0
  %873 = vmatprep.subr.bf16.mxu0 0
  %874 = vmatpush1.bf16.msra.mxu0 0
  %875 = vmatprep.subr.bf16.mxu0 0
  %876 = vmatpush1.bf16.msra.mxu0 0
  %877 = vmatprep.subr.bf16.mxu0 0
  %878 = vmatpush1.bf16.msra.mxu0 0
  %879 = vmatprep.subr.bf16.mxu0 0
  %880 = vmatpush1.bf16.msra.mxu0 0
  %881 = vmatprep.subr.bf16.mxu0 0
  %882 = vmatpush1.bf16.msra.mxu0 0
  %883 = vmatprep.subr.bf16.mxu0 0
  %884 = vmatpush1.bf16.msra.mxu0 0
  %885 = vmatprep.subr.bf16.mxu0 0
  %886 = vmatpush1.bf16.msra.mxu0 0
  %887 = vmatprep.subr.bf16.mxu0 0
  %888 = vmatpush1.bf16.msra.mxu0 0
  %889 = vmatprep.subr.bf16.mxu0 0
  %890 = vmatpush1.bf16.msra.mxu0 0
  %891 = vmatprep.mubr.bf16.mxu0 0
  %892 = vmatmul.mubr.bf16.gmra.mrb[0].mxu0 %v812
  %v893 = vpop.f32.mrb[0].mxu0
  %v894 = vadd.f32 0.0, %v893
  %v895 = vpop.f32.mrb[0].mxu0
  %v896 = vadd.f32 0.0, %v895
  %v897 = vpop.f32.mrb[0].mxu0
  %v898 = vadd.f32 0.0, %v897
  %v899 = vpop.f32.mrb[0].mxu0
  %v900 = vadd.f32 0.0, %v899
  %901 = vmatprep.mubr.bf16.mxu0 0
  %902 = vmatmul.mubr.bf16.gmra.mrb[0].mxu0 %v815
  %v903 = vpop.f32.mrb[0].mxu0
  %v904 = vadd.f32 0.0, %v903
  %v905 = vpop.f32.mrb[0].mxu0
  %v906 = vadd.f32 0.0, %v905
  %v907 = vpop.f32.mrb[0].mxu0
  %v908 = vadd.f32 0.0, %v907
  %v909 = vpop.f32.mrb[0].mxu0
  %v910 = vadd.f32 0.0, %v909
  %911 = vmatprep.mubr.bf16.mxu0 0
  %912 = vmatmul.mubr.bf16.gmra.mrb[0].mxu0 %v818
  %v913 = vpop.f32.mrb[0].mxu0
  %v914 = vadd.f32 0.0, %v913
  %v915 = vpop.f32.mrb[0].mxu0
  %v916 = vadd.f32 0.0, %v915
  %v917 = vpop.f32.mrb[0].mxu0
  %v918 = vadd.f32 0.0, %v917
  %v919 = vpop.f32.mrb[0].mxu0
  %v920 = vadd.f32 0.0, %v919
  %921 = vmatprep.mubr.bf16.mxu0 0
  %922 = vmatmul.mubr.bf16.gmra.mrb[0].mxu0 %v821
  %v923 = vpop.f32.mrb[0].mxu0
  %v924 = vadd.f32 0.0, %v923
  %v925 = vpop.f32.mrb[0].mxu0
  %v926 = vadd.f32 0.0, %v925
  %v927 = vpop.f32.mrb[0].mxu0
  %v928 = vadd.f32 0.0, %v927
  %v929 = vpop.f32.mrb[0].mxu0
  %v930 = vadd.f32 0.0, %v929
  %931 = vmatprep.mubr.bf16.mxu0 0
  %932 = vmatmul.mubr.bf16.gmra.mrb[0].mxu0 %v824
  %v933 = vpop.f32.mrb[0].mxu0
  %v934 = vadd.f32 0.0, %v933
  %v935 = vpop.f32.mrb[0].mxu0
  %v936 = vadd.f32 0.0, %v935
  %v937 = vpop.f32.mrb[0].mxu0
  %v938 = vadd.f32 0.0, %v937
  %v939 = vpop.f32.mrb[0].mxu0
  %v940 = vadd.f32 0.0, %v939
  %941 = vmatprep.mubr.bf16.mxu0 0
  %942 = vmatmul.mubr.bf16.gmra.mrb[0].mxu0 %v827
  %v943 = vpop.f32.mrb[0].mxu0
  %v944 = vadd.f32 0.0, %v943
  %v945 = vpop.f32.mrb[0].mxu0
  %v946 = vadd.f32 0.0, %v945
  %v947 = vpop.f32.mrb[0].mxu0
  %v948 = vadd.f32 0.0, %v947
  %v949 = vpop.f32.mrb[0].mxu0
  %v950 = vadd.f32 0.0, %v949
  %951 = vmatprep.mubr.bf16.mxu0 0
  %952 = vmatmul.mubr.bf16.gmra.mrb[0].mxu0 %v830
  %v953 = vpop.f32.mrb[0].mxu0
  %v954 = vadd.f32 0.0, %v953
  %v955 = vpop.f32.mrb[0].mxu0
  %v956 = vadd.f32 0.0, %v955
  %v957 = vpop.f32.mrb[0].mxu0
  %v958 = vadd.f32 0.0, %v957
  %v959 = vpop.f32.mrb[0].mxu0
  %v960 = vadd.f32 0.0, %v959
  %961 = vmatprep.mubr.bf16.mxu0 0
  %962 = vmatmul.mubr.bf16.gmra.mrb[0].mxu0 %v833
  %v963 = vpop.f32.mrb[0].mxu0
  %v964 = vadd.f32 0.0, %v963
  %v965 = vpop.f32.mrb[0].mxu0
  %v966 = vadd.f32 0.0, %v965
  %v967 = vpop.f32.mrb[0].mxu0
  %v968 = vadd.f32 0.0, %v967
  %v969 = vpop.f32.mrb[0].mxu0
  %v970 = vadd.f32 0.0, %v969
  %971 = vmatprep.mubr.bf16.mxu0 0
  %972 = vmatmul.mubr.bf16.gmra.mrb[0].mxu0 %v836
  %v973 = vpop.f32.mrb[0].mxu0
  %v974 = vadd.f32 0.0, %v973
  %v975 = vpop.f32.mrb[0].mxu0
  %v976 = vadd.f32 0.0, %v975
  %v977 = vpop.f32.mrb[0].mxu0
  %v978 = vadd.f32 0.0, %v977
  %v979 = vpop.f32.mrb[0].mxu0
  %v980 = vadd.f32 0.0, %v979
  %981 = vmatprep.mubr.bf16.mxu0 0
  %982 = vmatmul.mubr.bf16.gmra.mrb[0].mxu0 %v839
  %v983 = vpop.f32.mrb[0].mxu0
  %v984 = vadd.f32 0.0, %v983
  %v985 = vpop.f32.mrb[0].mxu0
  %v986 = vadd.f32 0.0, %v985
  %v987 = vpop.f32.mrb[0].mxu0
  %v988 = vadd.f32 0.0, %v987
  %v989 = vpop.f32.mrb[0].mxu0
  %v990 = vadd.f32 0.0, %v989
  %991 = vmatprep.mubr.bf16.mxu0 0
  %992 = vmatmul.mubr.bf16.gmra.mrb[0].mxu0 %v842
  %v993 = vpop.f32.mrb[0].mxu0
  %v994 = vadd.f32 0.0, %v993
  %v995 = vpop.f32.mrb[0].mxu0
  %v996 = vadd.f32 0.0, %v995
  %v997 = vpop.f32.mrb[0].mxu0
  %v998 = vadd.f32 0.0, %v997
  %v999 = vpop.f32.mrb[0].mxu0
  %v1000 = vadd.f32 0.0, %v999
  %1001 = vmatprep.mubr.bf16.mxu0 0
  %1002 = vmatmul.mubr.bf16.gmra.mrb[0].mxu0 %v845
  %v1003 = vpop.f32.mrb[0].mxu0
  %v1004 = vadd.f32 0.0, %v1003
  %v1005 = vpop.f32.mrb[0].mxu0
  %v1006 = vadd.f32 0.0, %v1005
  %v1007 = vpop.f32.mrb[0].mxu0
  %v1008 = vadd.f32 0.0, %v1007
  %v1009 = vpop.f32.mrb[0].mxu0
  %v1010 = vadd.f32 0.0, %v1009
  %1011 = vmatprep.mubr.bf16.mxu0 0
  %1012 = vmatmul.mubr.bf16.gmra.mrb[0].mxu0 %v848
  %v1013 = vpop.f32.mrb[0].mxu0
  %v1014 = vadd.f32 0.0, %v1013
  %v1015 = vpop.f32.mrb[0].mxu0
  %v1016 = vadd.f32 0.0, %v1015
  %v1017 = vpop.f32.mrb[0].mxu0
  %v1018 = vadd.f32 0.0, %v1017
  %v1019 = vpop.f32.mrb[0].mxu0
  %v1020 = vadd.f32 0.0, %v1019
  %1021 = vmatprep.mubr.bf16.mxu0 0
  %1022 = vmatmul.mubr.bf16.gmra.mrb[0].mxu0 %v851
  %v1023 = vpop.f32.mrb[0].mxu0
  %v1024 = vadd.f32 0.0, %v1023
  %v1025 = vpop.f32.mrb[0].mxu0
  %v1026 = vadd.f32 0.0, %v1025
  %v1027 = vpop.f32.mrb[0].mxu0
  %v1028 = vadd.f32 0.0, %v1027
  %v1029 = vpop.f32.mrb[0].mxu0
  %v1030 = vadd.f32 0.0, %v1029
  %1031 = vmatprep.mubr.bf16.mxu0 0
  %1032 = vmatmul.mubr.bf16.gmra.mrb[0].mxu0 %v854
  %v1033 = vpop.f32.mrb[0].mxu0
  %v1034 = vadd.f32 0.0, %v1033
  %v1035 = vpop.f32.mrb[0].mxu0
  %v1036 = vadd.f32 0.0, %v1035
  %v1037 = vpop.f32.mrb[0].mxu0
  %v1038 = vadd.f32 0.0, %v1037
  %v1039 = vpop.f32.mrb[0].mxu0
  %v1040 = vadd.f32 0.0, %v1039
  %1041 = vmatprep.mubr.bf16.mxu0 0
  %1042 = vmatmul.mubr.bf16.gmra.mrb[0].mxu0 %v857
  %v1043 = vpop.f32.mrb[0].mxu0
  %v1044 = vadd.f32 0.0, %v1043
  %v1045 = vpop.f32.mrb[0].mxu0
  %v1046 = vadd.f32 0.0, %v1045
  %v1047 = vpop.f32.mrb[0].mxu0
  %v1048 = vadd.f32 0.0, %v1047
  %v1049 = vpop.f32.mrb[0].mxu0
  %v1050 = vadd.f32 0.0, %v1049
  %1051 = vdwg.mxu0
  %v1052 = vadd.f32 %v580, %v894
  %v1053 = vadd.f32 %v582, %v896
  %v1054 = vadd.f32 %v584, %v898
  %v1055 = vadd.f32 %v586, %v900
  %v1056 = vadd.f32 %v590, %v904
  %v1057 = vadd.f32 %v592, %v906
  %v1058 = vadd.f32 %v594, %v908
  %v1059 = vadd.f32 %v596, %v910
  %v1060 = vadd.f32 %v600, %v914
  %v1061 = vadd.f32 %v602, %v916
  %v1062 = vadd.f32 %v604, %v918
  %v1063 = vadd.f32 %v606, %v920
  %v1064 = vadd.f32 %v610, %v924
  %v1065 = vadd.f32 %v612, %v926
  %v1066 = vadd.f32 %v614, %v928
  %v1067 = vadd.f32 %v616, %v930
  %v1068 = vadd.f32 %v620, %v934
  %v1069 = vadd.f32 %v622, %v936
  %v1070 = vadd.f32 %v624, %v938
  %v1071 = vadd.f32 %v626, %v940
  %v1072 = vadd.f32 %v630, %v944
  %v1073 = vadd.f32 %v632, %v946
  %v1074 = vadd.f32 %v634, %v948
  %v1075 = vadd.f32 %v636, %v950
  %v1076 = vadd.f32 %v640, %v954
  %v1077 = vadd.f32 %v642, %v956
  %v1078 = vadd.f32 %v644, %v958
  %v1079 = vadd.f32 %v646, %v960
  %v1080 = vadd.f32 %v650, %v964
  %v1081 = vadd.f32 %v652, %v966
  %v1082 = vadd.f32 %v654, %v968
  %v1083 = vadd.f32 %v656, %v970
  %v1084 = vadd.f32 %v660, %v974
  %v1085 = vadd.f32 %v662, %v976
  %v1086 = vadd.f32 %v664, %v978
  %v1087 = vadd.f32 %v666, %v980
  %v1088 = vadd.f32 %v670, %v984
  %v1089 = vadd.f32 %v672, %v986
  %v1090 = vadd.f32 %v674, %v988
  %v1091 = vadd.f32 %v676, %v990
  %v1092 = vadd.f32 %v680, %v994
  %v1093 = vadd.f32 %v682, %v996
  %v1094 = vadd.f32 %v684, %v998
  %v1095 = vadd.f32 %v686, %v1000
  %v1096 = vadd.f32 %v690, %v1004
  %v1097 = vadd.f32 %v692, %v1006
  %v1098 = vadd.f32 %v694, %v1008
  %v1099 = vadd.f32 %v696, %v1010
  %v1100 = vadd.f32 %v700, %v1014
  %v1101 = vadd.f32 %v702, %v1016
  %v1102 = vadd.f32 %v704, %v1018
  %v1103 = vadd.f32 %v706, %v1020
  %v1104 = vadd.f32 %v710, %v1024
  %v1105 = vadd.f32 %v712, %v1026
  %v1106 = vadd.f32 %v714, %v1028
  %v1107 = vadd.f32 %v716, %v1030
  %v1108 = vadd.f32 %v720, %v1034
  %v1109 = vadd.f32 %v722, %v1036
  %v1110 = vadd.f32 %v724, %v1038
  %v1111 = vadd.f32 %v726, %v1040
  %v1112 = vadd.f32 %v730, %v1044
  %v1113 = vadd.f32 %v732, %v1046
  %v1114 = vadd.f32 %v734, %v1048
  %v1115 = vadd.f32 %v736, %v1050
  %v1116 = vld [vmem:[#allocation2 + $0x3] sm:$0xff]
  %v1117 = vld [vmem:[#allocation2 + $0xb] sm:$0xff]
  %v1118 = vld [vmem:[#allocation2 + $0x13] sm:$0xff]
  %v1119 = vld [vmem:[#allocation2 + $0x1b] sm:$0xff]
  %v1120 = vld [vmem:[#allocation2 + $0x23] sm:$0xff]
  %v1121 = vld [vmem:[#allocation2 + $0x2b] sm:$0xff]
  %v1122 = vld [vmem:[#allocation2 + $0x33] sm:$0xff]
  %v1123 = vld [vmem:[#allocation2 + $0x3b] sm:$0xff]
  %v1124 = vld [vmem:[#allocation2 + $0x43] sm:$0xff]
  %v1125 = vld [vmem:[#allocation2 + $0x4b] sm:$0xff]
  %v1126 = vld [vmem:[#allocation2 + $0x53] sm:$0xff]
  %v1127 = vld [vmem:[#allocation2 + $0x5b] sm:$0xff]
  %v1128 = vld [vmem:[#allocation2 + $0x63] sm:$0xff]
  %v1129 = vld [vmem:[#allocation2 + $0x6b] sm:$0xff]
  %v1130 = vld [vmem:[#allocation2 + $0x73] sm:$0xff]
  %v1131 = vld [vmem:[#allocation2 + $0x7b] sm:$0xff]
  %v1132 = vld [vmem:[#allocation2 + $0x83] sm:$0xff]
  %v1133 = vld [vmem:[#allocation2 + $0x8b] sm:$0xff]
  %v1134 = vld [vmem:[#allocation2 + $0x93] sm:$0xff]
  %v1135 = vld [vmem:[#allocation2 + $0x9b] sm:$0xff]
  %v1136 = vld [vmem:[#allocation2 + $0xa3] sm:$0xff]
  %v1137 = vld [vmem:[#allocation2 + $0xab] sm:$0xff]
  %v1138 = vld [vmem:[#allocation2 + $0xb3] sm:$0xff]
  %v1139 = vld [vmem:[#allocation2 + $0xbb] sm:$0xff]
  %v1140 = vld [vmem:[#allocation2 + $0xc3] sm:$0xff]
  %v1141 = vld [vmem:[#allocation2 + $0xcb] sm:$0xff]
  %v1142 = vld [vmem:[#allocation2 + $0xd3] sm:$0xff]
  %v1143 = vld [vmem:[#allocation2 + $0xdb] sm:$0xff]
  %v1144 = vld [vmem:[#allocation2 + $0xe3] sm:$0xff]
  %v1145 = vld [vmem:[#allocation2 + $0xeb] sm:$0xff]
  %v1146 = vld [vmem:[#allocation2 + $0xf3] sm:$0xff]
  %v1147 = vld [vmem:[#allocation2 + $0xfb] sm:$0xff]
  %v1148 = vpack.c.bf16 %v1117, %v1116
  %v1149 = vpack.c.bf16 %v1119, %v1118
  %v1150 = vpack.c.bf16 %v1121, %v1120
  %v1151 = vpack.c.bf16 %v1123, %v1122
  %v1152 = vpack.c.bf16 %v1125, %v1124
  %v1153 = vpack.c.bf16 %v1127, %v1126
  %v1154 = vpack.c.bf16 %v1129, %v1128
  %v1155 = vpack.c.bf16 %v1131, %v1130
  %v1156 = vpack.c.bf16 %v1133, %v1132
  %v1157 = vpack.c.bf16 %v1135, %v1134
  %v1158 = vpack.c.bf16 %v1137, %v1136
  %v1159 = vpack.c.bf16 %v1139, %v1138
  %v1160 = vpack.c.bf16 %v1141, %v1140
  %v1161 = vpack.c.bf16 %v1143, %v1142
  %v1162 = vpack.c.bf16 %v1145, %v1144
  %v1163 = vpack.c.bf16 %v1147, %v1146
  %s1164 = scalar_lea.vmem %s1, 96
  %v1165 = vld [vmem:[%s1164] sm:$0xff]
  %v1166 = vld [vmem:[%s1164 + $0x8] sm:$0xff]
  %v1167 = vld [vmem:[%s1164 + $0x10] sm:$0xff]
  %v1168 = vld [vmem:[%s1164 + $0x18] sm:$0xff]
  %v1173 = vunpack.c.l.b16 %v1165
  %v1174 = vunpack.c.h.b16 %v1165
  %v1175 = vunpack.c.l.b16 %v1166
  %v1176 = vunpack.c.h.b16 %v1166
  %v1177 = vunpack.c.l.b16 %v1167
  %v1178 = vunpack.c.h.b16 %v1167
  %v1179 = vunpack.c.l.b16 %v1168
  %v1180 = vunpack.c.h.b16 %v1168
  %v1181 = vpack.c.b16 %v1175, %v1173
  %v1182 = vpack.c.b16 %v1176, %v1174
  %v1183 = vpack.c.b16 %v1179, %v1177
  %v1184 = vpack.c.b16 %v1180, %v1178
  %v1190 = vsel %vm77, %v1148, 0
  %v1193 = vsel %vm77, %v1149, 0
  %v1196 = vsel %vm77, %v1150, 0
  %v1199 = vsel %vm77, %v1151, 0
  %v1202 = vsel %vm77, %v1152, 0
  %v1205 = vsel %vm77, %v1153, 0
  %v1208 = vsel %vm77, %v1154, 0
  %v1211 = vsel %vm77, %v1155, 0
  %v1214 = vsel %vm77, %v1156, 0
  %v1217 = vsel %vm77, %v1157, 0
  %v1220 = vsel %vm77, %v1158, 0
  %v1223 = vsel %vm77, %v1159, 0
  %v1226 = vsel %vm77, %v1160, 0
  %v1229 = vsel %vm77, %v1161, 0
  %v1232 = vsel %vm77, %v1162, 0
  %v1235 = vsel %vm77, %v1163, 0
  %1237 = vmatprep.subr.bf16.mxu0 %v1182
  %1238 = vmatpush1.bf16.msra.mxu0 %v1181
  %1239 = vmatprep.subr.bf16.mxu0 %v1184
  %1240 = vmatpush1.bf16.msra.mxu0 %v1183
  %1241 = vmatprep.subr.bf16.mxu0 0
  %1242 = vmatpush1.bf16.msra.mxu0 0
  %1243 = vmatprep.subr.bf16.mxu0 0
  %1244 = vmatpush1.bf16.msra.mxu0 0
  %1245 = vmatprep.subr.bf16.mxu0 0
  %1246 = vmatpush1.bf16.msra.mxu0 0
  %1247 = vmatprep.subr.bf16.mxu0 0
  %1248 = vmatpush1.bf16.msra.mxu0 0
  %1249 = vmatprep.subr.bf16.mxu0 0
  %1250 = vmatpush1.bf16.msra.mxu0 0
  %1251 = vmatprep.subr.bf16.mxu0 0
  %1252 = vmatpush1.bf16.msra.mxu0 0
  %1253 = vmatprep.subr.bf16.mxu0 0
  %1254 = vmatpush1.bf16.msra.mxu0 0
  %1255 = vmatprep.subr.bf16.mxu0 0
  %1256 = vmatpush1.bf16.msra.mxu0 0
  %1257 = vmatprep.subr.bf16.mxu0 0
  %1258 = vmatpush1.bf16.msra.mxu0 0
  %1259 = vmatprep.subr.bf16.mxu0 0
  %1260 = vmatpush1.bf16.msra.mxu0 0
  %1261 = vmatprep.subr.bf16.mxu0 0
  %1262 = vmatpush1.bf16.msra.mxu0 0
  %1263 = vmatprep.subr.bf16.mxu0 0
  %1264 = vmatpush1.bf16.msra.mxu0 0
  %1265 = vmatprep.subr.bf16.mxu0 0
  %1266 = vmatpush1.bf16.msra.mxu0 0
  %1267 = vmatprep.subr.bf16.mxu0 0
  %1268 = vmatpush1.bf16.msra.mxu0 0
  %1269 = vmatprep.mubr.bf16.mxu0 0
  %1270 = vmatmul.mubr.bf16.gmra.mrb[0].mxu0 %v1190
  %v1271 = vpop.f32.mrb[0].mxu0
  %v1272 = vadd.f32 0.0, %v1271
  %v1273 = vpop.f32.mrb[0].mxu0
  %v1274 = vadd.f32 0.0, %v1273
  %v1275 = vpop.f32.mrb[0].mxu0
  %v1276 = vadd.f32 0.0, %v1275
  %v1277 = vpop.f32.mrb[0].mxu0
  %v1278 = vadd.f32 0.0, %v1277
  %1279 = vmatprep.mubr.bf16.mxu0 0
  %1280 = vmatmul.mubr.bf16.gmra.mrb[0].mxu0 %v1193
  %v1281 = vpop.f32.mrb[0].mxu0
  %v1282 = vadd.f32 0.0, %v1281
  %v1283 = vpop.f32.mrb[0].mxu0
  %v1284 = vadd.f32 0.0, %v1283
  %v1285 = vpop.f32.mrb[0].mxu0
  %v1286 = vadd.f32 0.0, %v1285
  %v1287 = vpop.f32.mrb[0].mxu0
  %v1288 = vadd.f32 0.0, %v1287
  %1289 = vmatprep.mubr.bf16.mxu0 0
  %1290 = vmatmul.mubr.bf16.gmra.mrb[0].mxu0 %v1196
  %v1291 = vpop.f32.mrb[0].mxu0
  %v1292 = vadd.f32 0.0, %v1291
  %v1293 = vpop.f32.mrb[0].mxu0
  %v1294 = vadd.f32 0.0, %v1293
  %v1295 = vpop.f32.mrb[0].mxu0
  %v1296 = vadd.f32 0.0, %v1295
  %v1297 = vpop.f32.mrb[0].mxu0
  %v1298 = vadd.f32 0.0, %v1297
  %1299 = vmatprep.mubr.bf16.mxu0 0
  %1300 = vmatmul.mubr.bf16.gmra.mrb[0].mxu0 %v1199
  %v1301 = vpop.f32.mrb[0].mxu0
  %v1302 = vadd.f32 0.0, %v1301
  %v1303 = vpop.f32.mrb[0].mxu0
  %v1304 = vadd.f32 0.0, %v1303
  %v1305 = vpop.f32.mrb[0].mxu0
  %v1306 = vadd.f32 0.0, %v1305
  %v1307 = vpop.f32.mrb[0].mxu0
  %v1308 = vadd.f32 0.0, %v1307
  %1309 = vmatprep.mubr.bf16.mxu0 0
  %1310 = vmatmul.mubr.bf16.gmra.mrb[0].mxu0 %v1202
  %v1311 = vpop.f32.mrb[0].mxu0
  %v1312 = vadd.f32 0.0, %v1311
  %v1313 = vpop.f32.mrb[0].mxu0
  %v1314 = vadd.f32 0.0, %v1313
  %v1315 = vpop.f32.mrb[0].mxu0
  %v1316 = vadd.f32 0.0, %v1315
  %v1317 = vpop.f32.mrb[0].mxu0
  %v1318 = vadd.f32 0.0, %v1317
  %1319 = vmatprep.mubr.bf16.mxu0 0
  %1320 = vmatmul.mubr.bf16.gmra.mrb[0].mxu0 %v1205
  %v1321 = vpop.f32.mrb[0].mxu0
  %v1322 = vadd.f32 0.0, %v1321
  %v1323 = vpop.f32.mrb[0].mxu0
  %v1324 = vadd.f32 0.0, %v1323
  %v1325 = vpop.f32.mrb[0].mxu0
  %v1326 = vadd.f32 0.0, %v1325
  %v1327 = vpop.f32.mrb[0].mxu0
  %v1328 = vadd.f32 0.0, %v1327
  %1329 = vmatprep.mubr.bf16.mxu0 0
  %1330 = vmatmul.mubr.bf16.gmra.mrb[0].mxu0 %v1208
  %v1331 = vpop.f32.mrb[0].mxu0
  %v1332 = vadd.f32 0.0, %v1331
  %v1333 = vpop.f32.mrb[0].mxu0
  %v1334 = vadd.f32 0.0, %v1333
  %v1335 = vpop.f32.mrb[0].mxu0
  %v1336 = vadd.f32 0.0, %v1335
  %v1337 = vpop.f32.mrb[0].mxu0
  %v1338 = vadd.f32 0.0, %v1337
  %1339 = vmatprep.mubr.bf16.mxu0 0
  %1340 = vmatmul.mubr.bf16.gmra.mrb[0].mxu0 %v1211
  %v1341 = vpop.f32.mrb[0].mxu0
  %v1342 = vadd.f32 0.0, %v1341
  %v1343 = vpop.f32.mrb[0].mxu0
  %v1344 = vadd.f32 0.0, %v1343
  %v1345 = vpop.f32.mrb[0].mxu0
  %v1346 = vadd.f32 0.0, %v1345
  %v1347 = vpop.f32.mrb[0].mxu0
  %v1348 = vadd.f32 0.0, %v1347
  %1349 = vmatprep.mubr.bf16.mxu0 0
  %1350 = vmatmul.mubr.bf16.gmra.mrb[0].mxu0 %v1214
  %v1351 = vpop.f32.mrb[0].mxu0
  %v1352 = vadd.f32 0.0, %v1351
  %v1353 = vpop.f32.mrb[0].mxu0
  %v1354 = vadd.f32 0.0, %v1353
  %v1355 = vpop.f32.mrb[0].mxu0
  %v1356 = vadd.f32 0.0, %v1355
  %v1357 = vpop.f32.mrb[0].mxu0
  %v1358 = vadd.f32 0.0, %v1357
  %1359 = vmatprep.mubr.bf16.mxu0 0
  %1360 = vmatmul.mubr.bf16.gmra.mrb[0].mxu0 %v1217
  %v1361 = vpop.f32.mrb[0].mxu0
  %v1362 = vadd.f32 0.0, %v1361
  %v1363 = vpop.f32.mrb[0].mxu0
  %v1364 = vadd.f32 0.0, %v1363
  %v1365 = vpop.f32.mrb[0].mxu0
  %v1366 = vadd.f32 0.0, %v1365
  %v1367 = vpop.f32.mrb[0].mxu0
  %v1368 = vadd.f32 0.0, %v1367
  %1369 = vmatprep.mubr.bf16.mxu0 0
  %1370 = vmatmul.mubr.bf16.gmra.mrb[0].mxu0 %v1220
  %v1371 = vpop.f32.mrb[0].mxu0
  %v1372 = vadd.f32 0.0, %v1371
  %v1373 = vpop.f32.mrb[0].mxu0
  %v1374 = vadd.f32 0.0, %v1373
  %v1375 = vpop.f32.mrb[0].mxu0
  %v1376 = vadd.f32 0.0, %v1375
  %v1377 = vpop.f32.mrb[0].mxu0
  %v1378 = vadd.f32 0.0, %v1377
  %1379 = vmatprep.mubr.bf16.mxu0 0
  %1380 = vmatmul.mubr.bf16.gmra.mrb[0].mxu0 %v1223
  %v1381 = vpop.f32.mrb[0].mxu0
  %v1382 = vadd.f32 0.0, %v1381
  %v1383 = vpop.f32.mrb[0].mxu0
  %v1384 = vadd.f32 0.0, %v1383
  %v1385 = vpop.f32.mrb[0].mxu0
  %v1386 = vadd.f32 0.0, %v1385
  %v1387 = vpop.f32.mrb[0].mxu0
  %v1388 = vadd.f32 0.0, %v1387
  %1389 = vmatprep.mubr.bf16.mxu0 0
  %1390 = vmatmul.mubr.bf16.gmra.mrb[0].mxu0 %v1226
  %v1391 = vpop.f32.mrb[0].mxu0
  %v1392 = vadd.f32 0.0, %v1391
  %v1393 = vpop.f32.mrb[0].mxu0
  %v1394 = vadd.f32 0.0, %v1393
  %v1395 = vpop.f32.mrb[0].mxu0
  %v1396 = vadd.f32 0.0, %v1395
  %v1397 = vpop.f32.mrb[0].mxu0
  %v1398 = vadd.f32 0.0, %v1397
  %1399 = vmatprep.mubr.bf16.mxu0 0
  %1400 = vmatmul.mubr.bf16.gmra.mrb[0].mxu0 %v1229
  %v1401 = vpop.f32.mrb[0].mxu0
  %v1402 = vadd.f32 0.0, %v1401
  %v1403 = vpop.f32.mrb[0].mxu0
  %v1404 = vadd.f32 0.0, %v1403
  %v1405 = vpop.f32.mrb[0].mxu0
  %v1406 = vadd.f32 0.0, %v1405
  %v1407 = vpop.f32.mrb[0].mxu0
  %v1408 = vadd.f32 0.0, %v1407
  %1409 = vmatprep.mubr.bf16.mxu0 0
  %1410 = vmatmul.mubr.bf16.gmra.mrb[0].mxu0 %v1232
  %v1411 = vpop.f32.mrb[0].mxu0
  %v1412 = vadd.f32 0.0, %v1411
  %v1413 = vpop.f32.mrb[0].mxu0
  %v1414 = vadd.f32 0.0, %v1413
  %v1415 = vpop.f32.mrb[0].mxu0
  %v1416 = vadd.f32 0.0, %v1415
  %v1417 = vpop.f32.mrb[0].mxu0
  %v1418 = vadd.f32 0.0, %v1417
  %1419 = vmatprep.mubr.bf16.mxu0 0
  %1420 = vmatmul.mubr.bf16.gmra.mrb[0].mxu0 %v1235
  %v1421 = vpop.f32.mrb[0].mxu0
  %v1422 = vadd.f32 0.0, %v1421
  %v1423 = vpop.f32.mrb[0].mxu0
  %v1424 = vadd.f32 0.0, %v1423
  %v1425 = vpop.f32.mrb[0].mxu0
  %v1426 = vadd.f32 0.0, %v1425
  %v1427 = vpop.f32.mrb[0].mxu0
  %v1428 = vadd.f32 0.0, %v1427
  %1429 = vdwg.mxu0
  %v1430 = vadd.f32 %v1052, %v1272
  %v1431 = vadd.f32 %v1053, %v1274
  %v1432 = vadd.f32 %v1054, %v1276
  %v1433 = vadd.f32 %v1055, %v1278
  %v1434 = vadd.f32 %v1056, %v1282
  %v1435 = vadd.f32 %v1057, %v1284
  %v1436 = vadd.f32 %v1058, %v1286
  %v1437 = vadd.f32 %v1059, %v1288
  %v1438 = vadd.f32 %v1060, %v1292
  %v1439 = vadd.f32 %v1061, %v1294
  %v1440 = vadd.f32 %v1062, %v1296
  %v1441 = vadd.f32 %v1063, %v1298
  %v1442 = vadd.f32 %v1064, %v1302
  %v1443 = vadd.f32 %v1065, %v1304
  %v1444 = vadd.f32 %v1066, %v1306
  %v1445 = vadd.f32 %v1067, %v1308
  %v1446 = vadd.f32 %v1068, %v1312
  %v1447 = vadd.f32 %v1069, %v1314
  %v1448 = vadd.f32 %v1070, %v1316
  %v1449 = vadd.f32 %v1071, %v1318
  %v1450 = vadd.f32 %v1072, %v1322
  %v1451 = vadd.f32 %v1073, %v1324
  %v1452 = vadd.f32 %v1074, %v1326
  %v1453 = vadd.f32 %v1075, %v1328
  %v1454 = vadd.f32 %v1076, %v1332
  %v1455 = vadd.f32 %v1077, %v1334
  %v1456 = vadd.f32 %v1078, %v1336
  %v1457 = vadd.f32 %v1079, %v1338
  %v1458 = vadd.f32 %v1080, %v1342
  %v1459 = vadd.f32 %v1081, %v1344
  %v1460 = vadd.f32 %v1082, %v1346
  %v1461 = vadd.f32 %v1083, %v1348
  %v1462 = vadd.f32 %v1084, %v1352
  %v1463 = vadd.f32 %v1085, %v1354
  %v1464 = vadd.f32 %v1086, %v1356
  %v1465 = vadd.f32 %v1087, %v1358
  %v1466 = vadd.f32 %v1088, %v1362
  %v1467 = vadd.f32 %v1089, %v1364
  %v1468 = vadd.f32 %v1090, %v1366
  %v1469 = vadd.f32 %v1091, %v1368
  %v1470 = vadd.f32 %v1092, %v1372
  %v1471 = vadd.f32 %v1093, %v1374
  %v1472 = vadd.f32 %v1094, %v1376
  %v1473 = vadd.f32 %v1095, %v1378
  %v1474 = vadd.f32 %v1096, %v1382
  %v1475 = vadd.f32 %v1097, %v1384
  %v1476 = vadd.f32 %v1098, %v1386
  %v1477 = vadd.f32 %v1099, %v1388
  %v1478 = vadd.f32 %v1100, %v1392
  %v1479 = vadd.f32 %v1101, %v1394
  %v1480 = vadd.f32 %v1102, %v1396
  %v1481 = vadd.f32 %v1103, %v1398
  %v1482 = vadd.f32 %v1104, %v1402
  %v1483 = vadd.f32 %v1105, %v1404
  %v1484 = vadd.f32 %v1106, %v1406
  %v1485 = vadd.f32 %v1107, %v1408
  %v1486 = vadd.f32 %v1108, %v1412
  %v1487 = vadd.f32 %v1109, %v1414
  %v1488 = vadd.f32 %v1110, %v1416
  %v1489 = vadd.f32 %v1111, %v1418
  %v1490 = vadd.f32 %v1112, %v1422
  %v1491 = vadd.f32 %v1113, %v1424
  %v1492 = vadd.f32 %v1114, %v1426
  %v1493 = vadd.f32 %v1115, %v1428
  %v1494 = vld [vmem:[#allocation2 + $0x4] sm:$0xff]
  %v1495 = vld [vmem:[#allocation2 + $0xc] sm:$0xff]
  %v1496 = vld [vmem:[#allocation2 + $0x14] sm:$0xff]
  %v1497 = vld [vmem:[#allocation2 + $0x1c] sm:$0xff]
  %v1498 = vld [vmem:[#allocation2 + $0x24] sm:$0xff]
  %v1499 = vld [vmem:[#allocation2 + $0x2c] sm:$0xff]
  %v1500 = vld [vmem:[#allocation2 + $0x34] sm:$0xff]
  %v1501 = vld [vmem:[#allocation2 + $0x3c] sm:$0xff]
  %v1502 = vld [vmem:[#allocation2 + $0x44] sm:$0xff]
  %v1503 = vld [vmem:[#allocation2 + $0x4c] sm:$0xff]
  %v1504 = vld [vmem:[#allocation2 + $0x54] sm:$0xff]
  %v1505 = vld [vmem:[#allocation2 + $0x5c] sm:$0xff]
  %v1506 = vld [vmem:[#allocation2 + $0x64] sm:$0xff]
  %v1507 = vld [vmem:[#allocation2 + $0x6c] sm:$0xff]
  %v1508 = vld [vmem:[#allocation2 + $0x74] sm:$0xff]
  %v1509 = vld [vmem:[#allocation2 + $0x7c] sm:$0xff]
  %v1510 = vld [vmem:[#allocation2 + $0x84] sm:$0xff]
  %v1511 = vld [vmem:[#allocation2 + $0x8c] sm:$0xff]
  %v1512 = vld [vmem:[#allocation2 + $0x94] sm:$0xff]
  %v1513 = vld [vmem:[#allocation2 + $0x9c] sm:$0xff]
  %v1514 = vld [vmem:[#allocation2 + $0xa4] sm:$0xff]
  %v1515 = vld [vmem:[#allocation2 + $0xac] sm:$0xff]
  %v1516 = vld [vmem:[#allocation2 + $0xb4] sm:$0xff]
  %v1517 = vld [vmem:[#allocation2 + $0xbc] sm:$0xff]
  %v1518 = vld [vmem:[#allocation2 + $0xc4] sm:$0xff]
  %v1519 = vld [vmem:[#allocation2 + $0xcc] sm:$0xff]
  %v1520 = vld [vmem:[#allocation2 + $0xd4] sm:$0xff]
  %v1521 = vld [vmem:[#allocation2 + $0xdc] sm:$0xff]
  %v1522 = vld [vmem:[#allocation2 + $0xe4] sm:$0xff]
  %v1523 = vld [vmem:[#allocation2 + $0xec] sm:$0xff]
  %v1524 = vld [vmem:[#allocation2 + $0xf4] sm:$0xff]
  %v1525 = vld [vmem:[#allocation2 + $0xfc] sm:$0xff]
  %v1526 = vpack.c.bf16 %v1495, %v1494
  %v1527 = vpack.c.bf16 %v1497, %v1496
  %v1528 = vpack.c.bf16 %v1499, %v1498
  %v1529 = vpack.c.bf16 %v1501, %v1500
  %v1530 = vpack.c.bf16 %v1503, %v1502
  %v1531 = vpack.c.bf16 %v1505, %v1504
  %v1532 = vpack.c.bf16 %v1507, %v1506
  %v1533 = vpack.c.bf16 %v1509, %v1508
  %v1534 = vpack.c.bf16 %v1511, %v1510
  %v1535 = vpack.c.bf16 %v1513, %v1512
  %v1536 = vpack.c.bf16 %v1515, %v1514
  %v1537 = vpack.c.bf16 %v1517, %v1516
  %v1538 = vpack.c.bf16 %v1519, %v1518
  %v1539 = vpack.c.bf16 %v1521, %v1520
  %v1540 = vpack.c.bf16 %v1523, %v1522
  %v1541 = vpack.c.bf16 %v1525, %v1524
  %s1542 = scalar_lea.vmem %s1, 128
  %v1543 = vld [vmem:[%s1542] sm:$0xff]
  %v1544 = vld [vmem:[%s1542 + $0x8] sm:$0xff]
  %v1545 = vld [vmem:[%s1542 + $0x10] sm:$0xff]
  %v1546 = vld [vmem:[%s1542 + $0x18] sm:$0xff]
  %v1551 = vunpack.c.l.b16 %v1543
  %v1552 = vunpack.c.h.b16 %v1543
  %v1553 = vunpack.c.l.b16 %v1544
  %v1554 = vunpack.c.h.b16 %v1544
  %v1555 = vunpack.c.l.b16 %v1545
  %v1556 = vunpack.c.h.b16 %v1545
  %v1557 = vunpack.c.l.b16 %v1546
  %v1558 = vunpack.c.h.b16 %v1546
  %v1559 = vpack.c.b16 %v1553, %v1551
  %v1560 = vpack.c.b16 %v1554, %v1552
  %v1561 = vpack.c.b16 %v1557, %v1555
  %v1562 = vpack.c.b16 %v1558, %v1556
  %v1568 = vsel %vm77, %v1526, 0
  %v1571 = vsel %vm77, %v1527, 0
  %v1574 = vsel %vm77, %v1528, 0
  %v1577 = vsel %vm77, %v1529, 0
  %v1580 = vsel %vm77, %v1530, 0
  %v1583 = vsel %vm77, %v1531, 0
  %v1586 = vsel %vm77, %v1532, 0
  %v1589 = vsel %vm77, %v1533, 0
  %v1592 = vsel %vm77, %v1534, 0
  %v1595 = vsel %vm77, %v1535, 0
  %v1598 = vsel %vm77, %v1536, 0
  %v1601 = vsel %vm77, %v1537, 0
  %v1604 = vsel %vm77, %v1538, 0
  %v1607 = vsel %vm77, %v1539, 0
  %v1610 = vsel %vm77, %v1540, 0
  %v1613 = vsel %vm77, %v1541, 0
  %1615 = vmatprep.subr.bf16.mxu0 %v1560
  %1616 = vmatpush1.bf16.msra.mxu0 %v1559
  %1617 = vmatprep.subr.bf16.mxu0 %v1562
  %1618 = vmatpush1.bf16.msra.mxu0 %v1561
  %1619 = vmatprep.subr.bf16.mxu0 0
  %1620 = vmatpush1.bf16.msra.mxu0 0
  %1621 = vmatprep.subr.bf16.mxu0 0
  %1622 = vmatpush1.bf16.msra.mxu0 0
  %1623 = vmatprep.subr.bf16.mxu0 0
  %1624 = vmatpush1.bf16.msra.mxu0 0
  %1625 = vmatprep.subr.bf16.mxu0 0
  %1626 = vmatpush1.bf16.msra.mxu0 0
  %1627 = vmatprep.subr.bf16.mxu0 0
  %1628 = vmatpush1.bf16.msra.mxu0 0
  %1629 = vmatprep.subr.bf16.mxu0 0
  %1630 = vmatpush1.bf16.msra.mxu0 0
  %1631 = vmatprep.subr.bf16.mxu0 0
  %1632 = vmatpush1.bf16.msra.mxu0 0
  %1633 = vmatprep.subr.bf16.mxu0 0
  %1634 = vmatpush1.bf16.msra.mxu0 0
  %1635 = vmatprep.subr.bf16.mxu0 0
  %1636 = vmatpush1.bf16.msra.mxu0 0
  %1637 = vmatprep.subr.bf16.mxu0 0
  %1638 = vmatpush1.bf16.msra.mxu0 0
  %1639 = vmatprep.subr.bf16.mxu0 0
  %1640 = vmatpush1.bf16.msra.mxu0 0
  %1641 = vmatprep.subr.bf16.mxu0 0
  %1642 = vmatpush1.bf16.msra.mxu0 0
  %1643 = vmatprep.subr.bf16.mxu0 0
  %1644 = vmatpush1.bf16.msra.mxu0 0
  %1645 = vmatprep.subr.bf16.mxu0 0
  %1646 = vmatpush1.bf16.msra.mxu0 0
  %1647 = vmatprep.mubr.bf16.mxu0 0
  %1648 = vmatmul.mubr.bf16.gmra.mrb[0].mxu0 %v1568
  %v1649 = vpop.f32.mrb[0].mxu0
  %v1650 = vadd.f32 0.0, %v1649
  %v1651 = vpop.f32.mrb[0].mxu0
  %v1652 = vadd.f32 0.0, %v1651
  %v1653 = vpop.f32.mrb[0].mxu0
  %v1654 = vadd.f32 0.0, %v1653
  %v1655 = vpop.f32.mrb[0].mxu0
  %v1656 = vadd.f32 0.0, %v1655
  %1657 = vmatprep.mubr.bf16.mxu0 0
  %1658 = vmatmul.mubr.bf16.gmra.mrb[0].mxu0 %v1571
  %v1659 = vpop.f32.mrb[0].mxu0
  %v1660 = vadd.f32 0.0, %v1659
  %v1661 = vpop.f32.mrb[0].mxu0
  %v1662 = vadd.f32 0.0, %v1661
  %v1663 = vpop.f32.mrb[0].mxu0
  %v1664 = vadd.f32 0.0, %v1663
  %v1665 = vpop.f32.mrb[0].mxu0
  %v1666 = vadd.f32 0.0, %v1665
  %1667 = vmatprep.mubr.bf16.mxu0 0
  %1668 = vmatmul.mubr.bf16.gmra.mrb[0].mxu0 %v1574
  %v1669 = vpop.f32.mrb[0].mxu0
  %v1670 = vadd.f32 0.0, %v1669
  %v1671 = vpop.f32.mrb[0].mxu0
  %v1672 = vadd.f32 0.0, %v1671
  %v1673 = vpop.f32.mrb[0].mxu0
  %v1674 = vadd.f32 0.0, %v1673
  %v1675 = vpop.f32.mrb[0].mxu0
  %v1676 = vadd.f32 0.0, %v1675
  %1677 = vmatprep.mubr.bf16.mxu0 0
  %1678 = vmatmul.mubr.bf16.gmra.mrb[0].mxu0 %v1577
  %v1679 = vpop.f32.mrb[0].mxu0
  %v1680 = vadd.f32 0.0, %v1679
  %v1681 = vpop.f32.mrb[0].mxu0
  %v1682 = vadd.f32 0.0, %v1681
  %v1683 = vpop.f32.mrb[0].mxu0
  %v1684 = vadd.f32 0.0, %v1683
  %v1685 = vpop.f32.mrb[0].mxu0
  %v1686 = vadd.f32 0.0, %v1685
  %1687 = vmatprep.mubr.bf16.mxu0 0
  %1688 = vmatmul.mubr.bf16.gmra.mrb[0].mxu0 %v1580
  %v1689 = vpop.f32.mrb[0].mxu0
  %v1690 = vadd.f32 0.0, %v1689
  %v1691 = vpop.f32.mrb[0].mxu0
  %v1692 = vadd.f32 0.0, %v1691
  %v1693 = vpop.f32.mrb[0].mxu0
  %v1694 = vadd.f32 0.0, %v1693
  %v1695 = vpop.f32.mrb[0].mxu0
  %v1696 = vadd.f32 0.0, %v1695
  %1697 = vmatprep.mubr.bf16.mxu0 0
  %1698 = vmatmul.mubr.bf16.gmra.mrb[0].mxu0 %v1583
  %v1699 = vpop.f32.mrb[0].mxu0
  %v1700 = vadd.f32 0.0, %v1699
  %v1701 = vpop.f32.mrb[0].mxu0
  %v1702 = vadd.f32 0.0, %v1701
  %v1703 = vpop.f32.mrb[0].mxu0
  %v1704 = vadd.f32 0.0, %v1703
  %v1705 = vpop.f32.mrb[0].mxu0
  %v1706 = vadd.f32 0.0, %v1705
  %1707 = vmatprep.mubr.bf16.mxu0 0
  %1708 = vmatmul.mubr.bf16.gmra.mrb[0].mxu0 %v1586
  %v1709 = vpop.f32.mrb[0].mxu0
  %v1710 = vadd.f32 0.0, %v1709
  %v1711 = vpop.f32.mrb[0].mxu0
  %v1712 = vadd.f32 0.0, %v1711
  %v1713 = vpop.f32.mrb[0].mxu0
  %v1714 = vadd.f32 0.0, %v1713
  %v1715 = vpop.f32.mrb[0].mxu0
  %v1716 = vadd.f32 0.0, %v1715
  %1717 = vmatprep.mubr.bf16.mxu0 0
  %1718 = vmatmul.mubr.bf16.gmra.mrb[0].mxu0 %v1589
  %v1719 = vpop.f32.mrb[0].mxu0
  %v1720 = vadd.f32 0.0, %v1719
  %v1721 = vpop.f32.mrb[0].mxu0
  %v1722 = vadd.f32 0.0, %v1721
  %v1723 = vpop.f32.mrb[0].mxu0
  %v1724 = vadd.f32 0.0, %v1723
  %v1725 = vpop.f32.mrb[0].mxu0
  %v1726 = vadd.f32 0.0, %v1725
  %1727 = vmatprep.mubr.bf16.mxu0 0
  %1728 = vmatmul.mubr.bf16.gmra.mrb[0].mxu0 %v1592
  %v1729 = vpop.f32.mrb[0].mxu0
  %v1730 = vadd.f32 0.0, %v1729
  %v1731 = vpop.f32.mrb[0].mxu0
  %v1732 = vadd.f32 0.0, %v1731
  %v1733 = vpop.f32.mrb[0].mxu0
  %v1734 = vadd.f32 0.0, %v1733
  %v1735 = vpop.f32.mrb[0].mxu0
  %v1736 = vadd.f32 0.0, %v1735
  %1737 = vmatprep.mubr.bf16.mxu0 0
  %1738 = vmatmul.mubr.bf16.gmra.mrb[0].mxu0 %v1595
  %v1739 = vpop.f32.mrb[0].mxu0
  %v1740 = vadd.f32 0.0, %v1739
  %v1741 = vpop.f32.mrb[0].mxu0
  %v1742 = vadd.f32 0.0, %v1741
  %v1743 = vpop.f32.mrb[0].mxu0
  %v1744 = vadd.f32 0.0, %v1743
  %v1745 = vpop.f32.mrb[0].mxu0
  %v1746 = vadd.f32 0.0, %v1745
  %1747 = vmatprep.mubr.bf16.mxu0 0
  %1748 = vmatmul.mubr.bf16.gmra.mrb[0].mxu0 %v1598
  %v1749 = vpop.f32.mrb[0].mxu0
  %v1750 = vadd.f32 0.0, %v1749
  %v1751 = vpop.f32.mrb[0].mxu0
  %v1752 = vadd.f32 0.0, %v1751
  %v1753 = vpop.f32.mrb[0].mxu0
  %v1754 = vadd.f32 0.0, %v1753
  %v1755 = vpop.f32.mrb[0].mxu0
  %v1756 = vadd.f32 0.0, %v1755
  %1757 = vmatprep.mubr.bf16.mxu0 0
  %1758 = vmatmul.mubr.bf16.gmra.mrb[0].mxu0 %v1601
  %v1759 = vpop.f32.mrb[0].mxu0
  %v1760 = vadd.f32 0.0, %v1759
  %v1761 = vpop.f32.mrb[0].mxu0
  %v1762 = vadd.f32 0.0, %v1761
  %v1763 = vpop.f32.mrb[0].mxu0
  %v1764 = vadd.f32 0.0, %v1763
  %v1765 = vpop.f32.mrb[0].mxu0
  %v1766 = vadd.f32 0.0, %v1765
  %1767 = vmatprep.mubr.bf16.mxu0 0
  %1768 = vmatmul.mubr.bf16.gmra.mrb[0].mxu0 %v1604
  %v1769 = vpop.f32.mrb[0].mxu0
  %v1770 = vadd.f32 0.0, %v1769
  %v1771 = vpop.f32.mrb[0].mxu0
  %v1772 = vadd.f32 0.0, %v1771
  %v1773 = vpop.f32.mrb[0].mxu0
  %v1774 = vadd.f32 0.0, %v1773
  %v1775 = vpop.f32.mrb[0].mxu0
  %v1776 = vadd.f32 0.0, %v1775
  %1777 = vmatprep.mubr.bf16.mxu0 0
  %1778 = vmatmul.mubr.bf16.gmra.mrb[0].mxu0 %v1607
  %v1779 = vpop.f32.mrb[0].mxu0
  %v1780 = vadd.f32 0.0, %v1779
  %v1781 = vpop.f32.mrb[0].mxu0
  %v1782 = vadd.f32 0.0, %v1781
  %v1783 = vpop.f32.mrb[0].mxu0
  %v1784 = vadd.f32 0.0, %v1783
  %v1785 = vpop.f32.mrb[0].mxu0
  %v1786 = vadd.f32 0.0, %v1785
  %1787 = vmatprep.mubr.bf16.mxu0 0
  %1788 = vmatmul.mubr.bf16.gmra.mrb[0].mxu0 %v1610
  %v1789 = vpop.f32.mrb[0].mxu0
  %v1790 = vadd.f32 0.0, %v1789
  %v1791 = vpop.f32.mrb[0].mxu0
  %v1792 = vadd.f32 0.0, %v1791
  %v1793 = vpop.f32.mrb[0].mxu0
  %v1794 = vadd.f32 0.0, %v1793
  %v1795 = vpop.f32.mrb[0].mxu0
  %v1796 = vadd.f32 0.0, %v1795
  %1797 = vmatprep.mubr.bf16.mxu0 0
  %1798 = vmatmul.mubr.bf16.gmra.mrb[0].mxu0 %v1613
  %v1799 = vpop.f32.mrb[0].mxu0
  %v1800 = vadd.f32 0.0, %v1799
  %v1801 = vpop.f32.mrb[0].mxu0
  %v1802 = vadd.f32 0.0, %v1801
  %v1803 = vpop.f32.mrb[0].mxu0
  %v1804 = vadd.f32 0.0, %v1803
  %v1805 = vpop.f32.mrb[0].mxu0
  %v1806 = vadd.f32 0.0, %v1805
  %1807 = vdwg.mxu0
  %v1808 = vadd.f32 %v1430, %v1650
  %v1809 = vadd.f32 %v1431, %v1652
  %v1810 = vadd.f32 %v1432, %v1654
  %v1811 = vadd.f32 %v1433, %v1656
  %v1812 = vadd.f32 %v1434, %v1660
  %v1813 = vadd.f32 %v1435, %v1662
  %v1814 = vadd.f32 %v1436, %v1664
  %v1815 = vadd.f32 %v1437, %v1666
  %v1816 = vadd.f32 %v1438, %v1670
  %v1817 = vadd.f32 %v1439, %v1672
  %v1818 = vadd.f32 %v1440, %v1674
  %v1819 = vadd.f32 %v1441, %v1676
  %v1820 = vadd.f32 %v1442, %v1680
  %v1821 = vadd.f32 %v1443, %v1682
  %v1822 = vadd.f32 %v1444, %v1684
  %v1823 = vadd.f32 %v1445, %v1686
  %v1824 = vadd.f32 %v1446, %v1690
  %v1825 = vadd.f32 %v1447, %v1692
  %v1826 = vadd.f32 %v1448, %v1694
  %v1827 = vadd.f32 %v1449, %v1696
  %v1828 = vadd.f32 %v1450, %v1700
  %v1829 = vadd.f32 %v1451, %v1702
  %v1830 = vadd.f32 %v1452, %v1704
  %v1831 = vadd.f32 %v1453, %v1706
  %v1832 = vadd.f32 %v1454, %v1710
  %v1833 = vadd.f32 %v1455, %v1712
  %v1834 = vadd.f32 %v1456, %v1714
  %v1835 = vadd.f32 %v1457, %v1716
  %v1836 = vadd.f32 %v1458, %v1720
  %v1837 = vadd.f32 %v1459, %v1722
  %v1838 = vadd.f32 %v1460, %v1724
  %v1839 = vadd.f32 %v1461, %v1726
  %v1840 = vadd.f32 %v1462, %v1730
  %v1841 = vadd.f32 %v1463, %v1732
  %v1842 = vadd.f32 %v1464, %v1734
  %v1843 = vadd.f32 %v1465, %v1736
  %v1844 = vadd.f32 %v1466, %v1740
  %v1845 = vadd.f32 %v1467, %v1742
  %v1846 = vadd.f32 %v1468, %v1744
  %v1847 = vadd.f32 %v1469, %v1746
  %v1848 = vadd.f32 %v1470, %v1750
  %v1849 = vadd.f32 %v1471, %v1752
  %v1850 = vadd.f32 %v1472, %v1754
  %v1851 = vadd.f32 %v1473, %v1756
  %v1852 = vadd.f32 %v1474, %v1760
  %v1853 = vadd.f32 %v1475, %v1762
  %v1854 = vadd.f32 %v1476, %v1764
  %v1855 = vadd.f32 %v1477, %v1766
  %v1856 = vadd.f32 %v1478, %v1770
  %v1857 = vadd.f32 %v1479, %v1772
  %v1858 = vadd.f32 %v1480, %v1774
  %v1859 = vadd.f32 %v1481, %v1776
  %v1860 = vadd.f32 %v1482, %v1780
  %v1861 = vadd.f32 %v1483, %v1782
  %v1862 = vadd.f32 %v1484, %v1784
  %v1863 = vadd.f32 %v1485, %v1786
  %v1864 = vadd.f32 %v1486, %v1790
  %v1865 = vadd.f32 %v1487, %v1792
  %v1866 = vadd.f32 %v1488, %v1794
  %v1867 = vadd.f32 %v1489, %v1796
  %v1868 = vadd.f32 %v1490, %v1800
  %v1869 = vadd.f32 %v1491, %v1802
  %v1870 = vadd.f32 %v1492, %v1804
  %v1871 = vadd.f32 %v1493, %v1806
  %v1872 = vld [vmem:[%s2] sm:$0x3]
  %v1874 = vlaneseq
  %v1875 = vshrl.u32 %v1874, 7
  %v1876 = vsub.s32 0, %v1875
  %v1877 = vrot.slane %v1872, %v1876
  %v1878 = vlaneseq
  %v1879 = vshrl.u32 %v1878, 7
  %v1880 = vsub.s32 1, %v1879
  %v1881 = vrot.slane %v1872, %v1880
  %v1884 = vadd.f32 %v1808, %v1877
  %v1885 = vadd.f32 %v1809, %v1881
  %v1886 = vadd.f32 %v1810, %v1877
  %v1887 = vadd.f32 %v1811, %v1881
  %v1888 = vadd.f32 %v1812, %v1877
  %v1889 = vadd.f32 %v1813, %v1881
  %v1890 = vadd.f32 %v1814, %v1877
  %v1891 = vadd.f32 %v1815, %v1881
  %v1892 = vadd.f32 %v1816, %v1877
  %v1893 = vadd.f32 %v1817, %v1881
  %v1894 = vadd.f32 %v1818, %v1877
  %v1895 = vadd.f32 %v1819, %v1881
  %v1896 = vadd.f32 %v1820, %v1877
  %v1897 = vadd.f32 %v1821, %v1881
  %v1898 = vadd.f32 %v1822, %v1877
  %v1899 = vadd.f32 %v1823, %v1881
  %v1900 = vadd.f32 %v1824, %v1877
  %v1901 = vadd.f32 %v1825, %v1881
  %v1902 = vadd.f32 %v1826, %v1877
  %v1903 = vadd.f32 %v1827, %v1881
  %v1904 = vadd.f32 %v1828, %v1877
  %v1905 = vadd.f32 %v1829, %v1881
  %v1906 = vadd.f32 %v1830, %v1877
  %v1907 = vadd.f32 %v1831, %v1881
  %v1908 = vadd.f32 %v1832, %v1877
  %v1909 = vadd.f32 %v1833, %v1881
  %v1910 = vadd.f32 %v1834, %v1877
  %v1911 = vadd.f32 %v1835, %v1881
  %v1912 = vadd.f32 %v1836, %v1877
  %v1913 = vadd.f32 %v1837, %v1881
  %v1914 = vadd.f32 %v1838, %v1877
  %v1915 = vadd.f32 %v1839, %v1881
  %v1916 = vadd.f32 %v1840, %v1877
  %v1917 = vadd.f32 %v1841, %v1881
  %v1918 = vadd.f32 %v1842, %v1877
  %v1919 = vadd.f32 %v1843, %v1881
  %v1920 = vadd.f32 %v1844, %v1877
  %v1921 = vadd.f32 %v1845, %v1881
  %v1922 = vadd.f32 %v1846, %v1877
  %v1923 = vadd.f32 %v1847, %v1881
  %v1924 = vadd.f32 %v1848, %v1877
  %v1925 = vadd.f32 %v1849, %v1881
  %v1926 = vadd.f32 %v1850, %v1877
  %v1927 = vadd.f32 %v1851, %v1881
  %v1928 = vadd.f32 %v1852, %v1877
  %v1929 = vadd.f32 %v1853, %v1881
  %v1930 = vadd.f32 %v1854, %v1877
  %v1931 = vadd.f32 %v1855, %v1881
  %v1932 = vadd.f32 %v1856, %v1877
  %v1933 = vadd.f32 %v1857, %v1881
  %v1934 = vadd.f32 %v1858, %v1877
  %v1935 = vadd.f32 %v1859, %v1881
  %v1936 = vadd.f32 %v1860, %v1877
  %v1937 = vadd.f32 %v1861, %v1881
  %v1938 = vadd.f32 %v1862, %v1877
  %v1939 = vadd.f32 %v1863, %v1881
  %v1940 = vadd.f32 %v1864, %v1877
  %v1941 = vadd.f32 %v1865, %v1881
  %v1942 = vadd.f32 %v1866, %v1877
  %v1943 = vadd.f32 %v1867, %v1881
  %v1944 = vadd.f32 %v1868, %v1877
  %v1945 = vadd.f32 %v1869, %v1881
  %v1946 = vadd.f32 %v1870, %v1877
  %v1947 = vadd.f32 %v1871, %v1881
  %v1948 = vmax.f32 %v1884, 0.0
  %v1949 = vmax.f32 %v1885, 0.0
  %v1950 = vmax.f32 %v1886, 0.0
  %v1951 = vmax.f32 %v1887, 0.0
  %v1952 = vmax.f32 %v1888, 0.0
  %v1953 = vmax.f32 %v1889, 0.0
  %v1954 = vmax.f32 %v1890, 0.0
  %v1955 = vmax.f32 %v1891, 0.0
  %v1956 = vmax.f32 %v1892, 0.0
  %v1957 = vmax.f32 %v1893, 0.0
  %v1958 = vmax.f32 %v1894, 0.0
  %v1959 = vmax.f32 %v1895, 0.0
  %v1960 = vmax.f32 %v1896, 0.0
  %v1961 = vmax.f32 %v1897, 0.0
  %v1962 = vmax.f32 %v1898, 0.0
  %v1963 = vmax.f32 %v1899, 0.0
  %v1964 = vmax.f32 %v1900, 0.0
  %v1965 = vmax.f32 %v1901, 0.0
  %v1966 = vmax.f32 %v1902, 0.0
  %v1967 = vmax.f32 %v1903, 0.0
  %v1968 = vmax.f32 %v1904, 0.0
  %v1969 = vmax.f32 %v1905, 0.0
  %v1970 = vmax.f32 %v1906, 0.0
  %v1971 = vmax.f32 %v1907, 0.0
  %v1972 = vmax.f32 %v1908, 0.0
  %v1973 = vmax.f32 %v1909, 0.0
  %v1974 = vmax.f32 %v1910, 0.0
  %v1975 = vmax.f32 %v1911, 0.0
  %v1976 = vmax.f32 %v1912, 0.0
  %v1977 = vmax.f32 %v1913, 0.0
  %v1978 = vmax.f32 %v1914, 0.0
  %v1979 = vmax.f32 %v1915, 0.0
  %v1980 = vmax.f32 %v1916, 0.0
  %v1981 = vmax.f32 %v1917, 0.0
  %v1982 = vmax.f32 %v1918, 0.0
  %v1983 = vmax.f32 %v1919, 0.0
  %v1984 = vmax.f32 %v1920, 0.0
  %v1985 = vmax.f32 %v1921, 0.0
  %v1986 = vmax.f32 %v1922, 0.0
  %v1987 = vmax.f32 %v1923, 0.0
  %v1988 = vmax.f32 %v1924, 0.0
  %v1989 = vmax.f32 %v1925, 0.0
  %v1990 = vmax.f32 %v1926, 0.0
  %v1991 = vmax.f32 %v1927, 0.0
  %v1992 = vmax.f32 %v1928, 0.0
  %v1993 = vmax.f32 %v1929, 0.0
  %v1994 = vmax.f32 %v1930, 0.0
  %v1995 = vmax.f32 %v1931, 0.0
  %v1996 = vmax.f32 %v1932, 0.0
  %v1997 = vmax.f32 %v1933, 0.0
  %v1998 = vmax.f32 %v1934, 0.0
  %v1999 = vmax.f32 %v1935, 0.0
  %v2000 = vmax.f32 %v1936, 0.0
  %v2001 = vmax.f32 %v1937, 0.0
  %v2002 = vmax.f32 %v1938, 0.0
  %v2003 = vmax.f32 %v1939, 0.0
  %v2004 = vmax.f32 %v1940, 0.0
  %v2005 = vmax.f32 %v1941, 0.0
  %v2006 = vmax.f32 %v1942, 0.0
  %v2007 = vmax.f32 %v1943, 0.0
  %v2008 = vmax.f32 %v1944, 0.0
  %v2009 = vmax.f32 %v1945, 0.0
  %v2010 = vmax.f32 %v1946, 0.0
  %v2011 = vmax.f32 %v1947, 0.0
  %v2012 = vpack.c.bf16 %v1950, %v1948
  %v2013 = vpack.c.bf16 %v1951, %v1949
  %v2014 = vpack.c.bf16 %v1954, %v1952
  %v2015 = vpack.c.bf16 %v1955, %v1953
  %v2016 = vpack.c.bf16 %v1958, %v1956
  %v2017 = vpack.c.bf16 %v1959, %v1957
  %v2018 = vpack.c.bf16 %v1962, %v1960
  %v2019 = vpack.c.bf16 %v1963, %v1961
  %v2020 = vpack.c.bf16 %v1966, %v1964
  %v2021 = vpack.c.bf16 %v1967, %v1965
  %v2022 = vpack.c.bf16 %v1970, %v1968
  %v2023 = vpack.c.bf16 %v1971, %v1969
  %v2024 = vpack.c.bf16 %v1974, %v1972
  %v2025 = vpack.c.bf16 %v1975, %v1973
  %v2026 = vpack.c.bf16 %v1978, %v1976
  %v2027 = vpack.c.bf16 %v1979, %v1977
  %v2028 = vpack.c.bf16 %v1982, %v1980
  %v2029 = vpack.c.bf16 %v1983, %v1981
  %v2030 = vpack.c.bf16 %v1986, %v1984
  %v2031 = vpack.c.bf16 %v1987, %v1985
  %v2032 = vpack.c.bf16 %v1990, %v1988
  %v2033 = vpack.c.bf16 %v1991, %v1989
  %v2034 = vpack.c.bf16 %v1994, %v1992
  %v2035 = vpack.c.bf16 %v1995, %v1993
  %v2036 = vpack.c.bf16 %v1998, %v1996
  %v2037 = vpack.c.bf16 %v1999, %v1997
  %v2038 = vpack.c.bf16 %v2002, %v2000
  %v2039 = vpack.c.bf16 %v2003, %v2001
  %v2040 = vpack.c.bf16 %v2006, %v2004
  %v2041 = vpack.c.bf16 %v2007, %v2005
  %v2042 = vpack.c.bf16 %v2010, %v2008
  %v2043 = vpack.c.bf16 %v2011, %v2009
  %v2044 = vld [vmem:[%s5] sm:$0xf]
  %v2045 = vld [vmem:[%s5 + $0x4] sm:$0xf]
  %v2046 = vld [vmem:[%s5 + $0x8] sm:$0xf]
  %v2047 = vld [vmem:[%s5 + $0xc] sm:$0xf]
  %v2048 = vld [vmem:[%s5 + $0x10] sm:$0xf]
  %v2049 = vld [vmem:[%s5 + $0x14] sm:$0xf]
  %v2050 = vld [vmem:[%s5 + $0x18] sm:$0xf]
  %v2051 = vld [vmem:[%s5 + $0x1c] sm:$0xf]
  %v2052 = vld [vmem:[%s5 + $0x20] sm:$0xf]
  %v2053 = vld [vmem:[%s5 + $0x24] sm:$0xf]
  %v2054 = vld [vmem:[%s5 + $0x28] sm:$0xf]
  %v2055 = vld [vmem:[%s5 + $0x2c] sm:$0xf]
  %v2056 = vld [vmem:[%s5 + $0x30] sm:$0xf]
  %v2057 = vld [vmem:[%s5 + $0x34] sm:$0xf]
  %v2058 = vld [vmem:[%s5 + $0x38] sm:$0xf]
  %v2059 = vld [vmem:[%s5 + $0x3c] sm:$0xf]
  %v2060 = vld [vmem:[%s5 + $0x40] sm:$0xf]
  %v2061 = vld [vmem:[%s5 + $0x44] sm:$0xf]
  %v2062 = vld [vmem:[%s5 + $0x48] sm:$0xf]
  %v2063 = vld [vmem:[%s5 + $0x4c] sm:$0xf]
  %v2064 = vld [vmem:[%s5 + $0x50] sm:$0xf]
  %v2086 = vunpack.c.l.b16 %v2044
  %v2087 = vunpack.c.l.b16 %v2045
  %v2088 = vunpack.c.l.b16 %v2046
  %v2089 = vunpack.c.l.b16 %v2047
  %v2090 = vunpack.c.l.b16 %v2048
  %v2091 = vunpack.c.l.b16 %v2049
  %v2092 = vunpack.c.l.b16 %v2050
  %v2093 = vunpack.c.l.b16 %v2051
  %v2094 = vunpack.c.l.b16 %v2052
  %v2095 = vunpack.c.l.b16 %v2053
  %v2096 = vunpack.c.l.b16 %v2054
  %v2097 = vunpack.c.l.b16 %v2055
  %v2098 = vunpack.c.l.b16 %v2056
  %v2099 = vunpack.c.l.b16 %v2057
  %v2100 = vunpack.c.l.b16 %v2058
  %v2101 = vunpack.c.l.b16 %v2059
  %v2102 = vunpack.c.l.b16 %v2060
  %v2103 = vunpack.c.l.b16 %v2061
  %v2104 = vunpack.c.l.b16 %v2062
  %v2105 = vunpack.c.l.b16 %v2063
  %v2106 = vunpack.c.l.b16 %v2064
  %v2107 = vpack.c.b16 %v2087, %v2086
  %v2108 = vpack.c.b16 %v2089, %v2088
  %v2109 = vpack.c.b16 %v2091, %v2090
  %v2110 = vpack.c.b16 %v2093, %v2092
  %v2111 = vpack.c.b16 %v2095, %v2094
  %v2112 = vpack.c.b16 %v2097, %v2096
  %v2113 = vpack.c.b16 %v2099, %v2098
  %v2114 = vpack.c.b16 %v2101, %v2100
  %v2115 = vpack.c.b16 %v2103, %v2102
  %v2116 = vpack.c.b16 %v2105, %v2104
  %v2117 = vpack.c.b16 %v2106, %v2106
  %vm2128 = vcmask 326656
  %v2130 = vsel %vm2128, %v2013, 0
  %v2133 = vsel %vm2128, %v2015, 0
  %v2136 = vsel %vm2128, %v2017, 0
  %v2139 = vsel %vm2128, %v2019, 0
  %v2142 = vsel %vm2128, %v2021, 0
  %v2145 = vsel %vm2128, %v2023, 0
  %v2148 = vsel %vm2128, %v2025, 0
  %v2151 = vsel %vm2128, %v2027, 0
  %v2154 = vsel %vm2128, %v2029, 0
  %v2157 = vsel %vm2128, %v2031, 0
  %v2160 = vsel %vm2128, %v2033, 0
  %v2163 = vsel %vm2128, %v2035, 0
  %v2166 = vsel %vm2128, %v2037, 0
  %v2169 = vsel %vm2128, %v2039, 0
  %v2172 = vsel %vm2128, %v2041, 0
  %v2175 = vsel %vm2128, %v2043, 0
  %vm2177 = vcmask 1043456
  %v2179 = vsel %vm2177, %v2117, 0
  %2181 = vmatprep.subr.bf16.mxu0 0
  %2182 = vmatpush1.bf16.msra.mxu0 %v2107
  %2183 = vmatprep.subr.bf16.mxu0 0
  %2184 = vmatpush1.bf16.msra.mxu0 %v2108
  %2185 = vmatprep.subr.bf16.mxu0 0
  %2186 = vmatpush1.bf16.msra.mxu0 %v2109
  %2187 = vmatprep.subr.bf16.mxu0 0
  %2188 = vmatpush1.bf16.msra.mxu0 %v2110
  %2189 = vmatprep.subr.bf16.mxu0 0
  %2190 = vmatpush1.bf16.msra.mxu0 %v2111
  %2191 = vmatprep.subr.bf16.mxu0 0
  %2192 = vmatpush1.bf16.msra.mxu0 %v2112
  %2193 = vmatprep.subr.bf16.mxu0 0
  %2194 = vmatpush1.bf16.msra.mxu0 %v2113
  %2195 = vmatprep.subr.bf16.mxu0 0
  %2196 = vmatpush1.bf16.msra.mxu0 %v2114
  %2197 = vmatprep.subr.bf16.mxu0 0
  %2198 = vmatpush1.bf16.msra.mxu0 %v2115
  %2199 = vmatprep.subr.bf16.mxu0 0
  %2200 = vmatpush1.bf16.msra.mxu0 %v2116
  %2201 = vmatprep.subr.bf16.mxu0 0
  %2202 = vmatpush1.bf16.msra.mxu0 %v2179
  %2203 = vmatprep.subr.bf16.mxu0 0
  %2204 = vmatpush1.bf16.msra.mxu0 0
  %2205 = vmatprep.subr.bf16.mxu0 0
  %2206 = vmatpush1.bf16.msra.mxu0 0
  %2207 = vmatprep.subr.bf16.mxu0 0
  %2208 = vmatpush1.bf16.msra.mxu0 0
  %2209 = vmatprep.subr.bf16.mxu0 0
  %2210 = vmatpush1.bf16.msra.mxu0 0
  %2211 = vmatprep.subr.bf16.mxu0 0
  %2212 = vmatpush1.bf16.msra.mxu0 0
  %2213 = vmatprep.mubr.bf16.mxu0 %v2130
  %2214 = vmatmul.mubr.bf16.gmra.mrb[0].mxu0 %v2012
  %v2215 = vpop.f32.mrb[0].mxu0
  %v2216 = vadd.f32 0.0, %v2215
  %v2217 = vpop.f32.mrb[0].mxu0
  %v2218 = vpop.f32.mrb[0].mxu0
  %v2219 = vadd.f32 0.0, %v2218
  %v2220 = vpop.f32.mrb[0].mxu0
  %2221 = vmatprep.mubr.bf16.mxu0 %v2133
  %2222 = vmatmul.mubr.bf16.gmra.mrb[0].mxu0 %v2014
  %v2223 = vpop.f32.mrb[0].mxu0
  %v2224 = vadd.f32 0.0, %v2223
  %v2225 = vpop.f32.mrb[0].mxu0
  %v2226 = vpop.f32.mrb[0].mxu0
  %v2227 = vadd.f32 0.0, %v2226
  %v2228 = vpop.f32.mrb[0].mxu0
  %2229 = vmatprep.mubr.bf16.mxu0 %v2136
  %2230 = vmatmul.mubr.bf16.gmra.mrb[0].mxu0 %v2016
  %v2231 = vpop.f32.mrb[0].mxu0
  %v2232 = vadd.f32 0.0, %v2231
  %v2233 = vpop.f32.mrb[0].mxu0
  %v2234 = vpop.f32.mrb[0].mxu0
  %v2235 = vadd.f32 0.0, %v2234
  %v2236 = vpop.f32.mrb[0].mxu0
  %2237 = vmatprep.mubr.bf16.mxu0 %v2139
  %2238 = vmatmul.mubr.bf16.gmra.mrb[0].mxu0 %v2018
  %v2239 = vpop.f32.mrb[0].mxu0
  %v2240 = vadd.f32 0.0, %v2239
  %v2241 = vpop.f32.mrb[0].mxu0
  %v2242 = vpop.f32.mrb[0].mxu0
  %v2243 = vadd.f32 0.0, %v2242
  %v2244 = vpop.f32.mrb[0].mxu0
  %2245 = vmatprep.mubr.bf16.mxu0 %v2142
  %2246 = vmatmul.mubr.bf16.gmra.mrb[0].mxu0 %v2020
  %v2247 = vpop.f32.mrb[0].mxu0
  %v2248 = vadd.f32 0.0, %v2247
  %v2249 = vpop.f32.mrb[0].mxu0
  %v2250 = vpop.f32.mrb[0].mxu0
  %v2251 = vadd.f32 0.0, %v2250
  %v2252 = vpop.f32.mrb[0].mxu0
  %2253 = vmatprep.mubr.bf16.mxu0 %v2145
  %2254 = vmatmul.mubr.bf16.gmra.mrb[0].mxu0 %v2022
  %v2255 = vpop.f32.mrb[0].mxu0
  %v2256 = vadd.f32 0.0, %v2255
  %v2257 = vpop.f32.mrb[0].mxu0
  %v2258 = vpop.f32.mrb[0].mxu0
  %v2259 = vadd.f32 0.0, %v2258
  %v2260 = vpop.f32.mrb[0].mxu0
  %2261 = vmatprep.mubr.bf16.mxu0 %v2148
  %2262 = vmatmul.mubr.bf16.gmra.mrb[0].mxu0 %v2024
  %v2263 = vpop.f32.mrb[0].mxu0
  %v2264 = vadd.f32 0.0, %v2263
  %v2265 = vpop.f32.mrb[0].mxu0
  %v2266 = vpop.f32.mrb[0].mxu0
  %v2267 = vadd.f32 0.0, %v2266
  %v2268 = vpop.f32.mrb[0].mxu0
  %2269 = vmatprep.mubr.bf16.mxu0 %v2151
  %2270 = vmatmul.mubr.bf16.gmra.mrb[0].mxu0 %v2026
  %v2271 = vpop.f32.mrb[0].mxu0
  %v2272 = vadd.f32 0.0, %v2271
  %v2273 = vpop.f32.mrb[0].mxu0
  %v2274 = vpop.f32.mrb[0].mxu0
  %v2275 = vadd.f32 0.0, %v2274
  %v2276 = vpop.f32.mrb[0].mxu0
  %2277 = vmatprep.mubr.bf16.mxu0 %v2154
  %2278 = vmatmul.mubr.bf16.gmra.mrb[0].mxu0 %v2028
  %v2279 = vpop.f32.mrb[0].mxu0
  %v2280 = vadd.f32 0.0, %v2279
  %v2281 = vpop.f32.mrb[0].mxu0
  %v2282 = vpop.f32.mrb[0].mxu0
  %v2283 = vadd.f32 0.0, %v2282
  %v2284 = vpop.f32.mrb[0].mxu0
  %2285 = vmatprep.mubr.bf16.mxu0 %v2157
  %2286 = vmatmul.mubr.bf16.gmra.mrb[0].mxu0 %v2030
  %v2287 = vpop.f32.mrb[0].mxu0
  %v2288 = vadd.f32 0.0, %v2287
  %v2289 = vpop.f32.mrb[0].mxu0
  %v2290 = vpop.f32.mrb[0].mxu0
  %v2291 = vadd.f32 0.0, %v2290
  %v2292 = vpop.f32.mrb[0].mxu0
  %2293 = vmatprep.mubr.bf16.mxu0 %v2160
  %2294 = vmatmul.mubr.bf16.gmra.mrb[0].mxu0 %v2032
  %v2295 = vpop.f32.mrb[0].mxu0
  %v2296 = vadd.f32 0.0, %v2295
  %v2297 = vpop.f32.mrb[0].mxu0
  %v2298 = vpop.f32.mrb[0].mxu0
  %v2299 = vadd.f32 0.0, %v2298
  %v2300 = vpop.f32.mrb[0].mxu0
  %2301 = vmatprep.mubr.bf16.mxu0 %v2163
  %2302 = vmatmul.mubr.bf16.gmra.mrb[0].mxu0 %v2034
  %v2303 = vpop.f32.mrb[0].mxu0
  %v2304 = vadd.f32 0.0, %v2303
  %v2305 = vpop.f32.mrb[0].mxu0
  %v2306 = vpop.f32.mrb[0].mxu0
  %v2307 = vadd.f32 0.0, %v2306
  %v2308 = vpop.f32.mrb[0].mxu0
  %2309 = vmatprep.mubr.bf16.mxu0 %v2166
  %2310 = vmatmul.mubr.bf16.gmra.mrb[0].mxu0 %v2036
  %v2311 = vpop.f32.mrb[0].mxu0
  %v2312 = vadd.f32 0.0, %v2311
  %v2313 = vpop.f32.mrb[0].mxu0
  %v2314 = vpop.f32.mrb[0].mxu0
  %v2315 = vadd.f32 0.0, %v2314
  %v2316 = vpop.f32.mrb[0].mxu0
  %2317 = vmatprep.mubr.bf16.mxu0 %v2169
  %2318 = vmatmul.mubr.bf16.gmra.mrb[0].mxu0 %v2038
  %v2319 = vpop.f32.mrb[0].mxu0
  %v2320 = vadd.f32 0.0, %v2319
  %v2321 = vpop.f32.mrb[0].mxu0
  %v2322 = vpop.f32.mrb[0].mxu0
  %v2323 = vadd.f32 0.0, %v2322
  %v2324 = vpop.f32.mrb[0].mxu0
  %2325 = vmatprep.mubr.bf16.mxu0 %v2172
  %2326 = vmatmul.mubr.bf16.gmra.mrb[0].mxu0 %v2040
  %v2327 = vpop.f32.mrb[0].mxu0
  %v2328 = vadd.f32 0.0, %v2327
  %v2329 = vpop.f32.mrb[0].mxu0
  %v2330 = vpop.f32.mrb[0].mxu0
  %v2331 = vadd.f32 0.0, %v2330
  %v2332 = vpop.f32.mrb[0].mxu0
  %2333 = vmatprep.mubr.bf16.mxu0 %v2175
  %2334 = vmatmul.mubr.bf16.gmra.mrb[0].mxu0 %v2042
  %v2335 = vpop.f32.mrb[0].mxu0
  %v2336 = vadd.f32 0.0, %v2335
  %v2337 = vpop.f32.mrb[0].mxu0
  %v2338 = vpop.f32.mrb[0].mxu0
  %v2339 = vadd.f32 0.0, %v2338
  %v2340 = vpop.f32.mrb[0].mxu0
  %2341 = vdwg.mxu0
  %s2342 = scalar_lea.vmem %s5, 84
  %v2343 = vld [vmem:[%s2342] sm:$0xf]
  %v2344 = vld [vmem:[%s2342 + $0x4] sm:$0xf]
  %v2345 = vld [vmem:[%s2342 + $0x8] sm:$0xf]
  %v2346 = vld [vmem:[%s2342 + $0xc] sm:$0xf]
  %v2347 = vld [vmem:[%s2342 + $0x10] sm:$0xf]
  %v2348 = vld [vmem:[%s2342 + $0x14] sm:$0xf]
  %v2349 = vld [vmem:[%s2342 + $0x18] sm:$0xf]
  %v2350 = vld [vmem:[%s2342 + $0x1c] sm:$0xf]
  %v2351 = vld [vmem:[%s2342 + $0x20] sm:$0xf]
  %v2352 = vld [vmem:[%s2342 + $0x24] sm:$0xf]
  %v2353 = vld [vmem:[%s2342 + $0x28] sm:$0xf]
  %v2354 = vld [vmem:[%s2342 + $0x2c] sm:$0xf]
  %v2355 = vld [vmem:[%s2342 + $0x30] sm:$0xf]
  %v2356 = vld [vmem:[%s2342 + $0x34] sm:$0xf]
  %v2357 = vld [vmem:[%s2342 + $0x38] sm:$0xf]
  %v2358 = vld [vmem:[%s2342 + $0x3c] sm:$0xf]
  %v2359 = vld [vmem:[%s2342 + $0x40] sm:$0xf]
  %v2360 = vld [vmem:[%s2342 + $0x44] sm:$0xf]
  %v2361 = vld [vmem:[%s2342 + $0x48] sm:$0xf]
  %v2362 = vld [vmem:[%s2342 + $0x4c] sm:$0xf]
  %v2363 = vld [vmem:[%s2342 + $0x50] sm:$0xf]
  %v2385 = vunpack.c.l.b16 %v2343
  %v2386 = vunpack.c.l.b16 %v2344
  %v2387 = vunpack.c.l.b16 %v2345
  %v2388 = vunpack.c.l.b16 %v2346
  %v2389 = vunpack.c.l.b16 %v2347
  %v2390 = vunpack.c.l.b16 %v2348
  %v2391 = vunpack.c.l.b16 %v2349
  %v2392 = vunpack.c.l.b16 %v2350
  %v2393 = vunpack.c.l.b16 %v2351
  %v2394 = vunpack.c.l.b16 %v2352
  %v2395 = vunpack.c.l.b16 %v2353
  %v2396 = vunpack.c.l.b16 %v2354
  %v2397 = vunpack.c.l.b16 %v2355
  %v2398 = vunpack.c.l.b16 %v2356
  %v2399 = vunpack.c.l.b16 %v2357
  %v2400 = vunpack.c.l.b16 %v2358
  %v2401 = vunpack.c.l.b16 %v2359
  %v2402 = vunpack.c.l.b16 %v2360
  %v2403 = vunpack.c.l.b16 %v2361
  %v2404 = vunpack.c.l.b16 %v2362
  %v2405 = vunpack.c.l.b16 %v2363
  %v2406 = vpack.c.b16 %v2386, %v2385
  %v2407 = vpack.c.b16 %v2388, %v2387
  %v2408 = vpack.c.b16 %v2390, %v2389
  %v2409 = vpack.c.b16 %v2392, %v2391
  %v2410 = vpack.c.b16 %v2394, %v2393
  %v2411 = vpack.c.b16 %v2396, %v2395
  %v2412 = vpack.c.b16 %v2398, %v2397
  %v2413 = vpack.c.b16 %v2400, %v2399
  %v2414 = vpack.c.b16 %v2402, %v2401
  %v2415 = vpack.c.b16 %v2404, %v2403
  %v2416 = vpack.c.b16 %v2405, %v2405
  %v2428 = vsel %vm2177, %v2416, 0
  %2430 = vmatprep.subr.bf16.mxu0 0
  %2431 = vmatpush1.bf16.msra.mxu0 %v2406
  %2432 = vmatprep.subr.bf16.mxu0 0
  %2433 = vmatpush1.bf16.msra.mxu0 %v2407
  %2434 = vmatprep.subr.bf16.mxu0 0
  %2435 = vmatpush1.bf16.msra.mxu0 %v2408
  %2436 = vmatprep.subr.bf16.mxu0 0
  %2437 = vmatpush1.bf16.msra.mxu0 %v2409
  %2438 = vmatprep.subr.bf16.mxu0 0
  %2439 = vmatpush1.bf16.msra.mxu0 %v2410
  %2440 = vmatprep.subr.bf16.mxu0 0
  %2441 = vmatpush1.bf16.msra.mxu0 %v2411
  %2442 = vmatprep.subr.bf16.mxu0 0
  %2443 = vmatpush1.bf16.msra.mxu0 %v2412
  %2444 = vmatprep.subr.bf16.mxu0 0
  %2445 = vmatpush1.bf16.msra.mxu0 %v2413
  %2446 = vmatprep.subr.bf16.mxu0 0
  %2447 = vmatpush1.bf16.msra.mxu0 %v2414
  %2448 = vmatprep.subr.bf16.mxu0 0
  %2449 = vmatpush1.bf16.msra.mxu0 %v2415
  %2450 = vmatprep.subr.bf16.mxu0 0
  %2451 = vmatpush1.bf16.msra.mxu0 %v2428
  %2452 = vmatprep.subr.bf16.mxu0 0
  %2453 = vmatpush1.bf16.msra.mxu0 0
  %2454 = vmatprep.subr.bf16.mxu0 0
  %2455 = vmatpush1.bf16.msra.mxu0 0
  %2456 = vmatprep.subr.bf16.mxu0 0
  %2457 = vmatpush1.bf16.msra.mxu0 0
  %2458 = vmatprep.subr.bf16.mxu0 0
  %2459 = vmatpush1.bf16.msra.mxu0 0
  %2460 = vmatprep.subr.bf16.mxu0 0
  %2461 = vmatpush1.bf16.msra.mxu0 0
  %2462 = vmatprep.mubr.bf16.mxu0 %v2130
  %2463 = vmatmul.mubr.bf16.gmra.mrb[0].mxu0 %v2012
  %v2464 = vpop.f32.mrb[0].mxu0
  %v2465 = vadd.f32 0.0, %v2464
  %v2466 = vpop.f32.mrb[0].mxu0
  %v2467 = vpop.f32.mrb[0].mxu0
  %v2468 = vadd.f32 0.0, %v2467
  %v2469 = vpop.f32.mrb[0].mxu0
  %2470 = vmatprep.mubr.bf16.mxu0 %v2133
  %2471 = vmatmul.mubr.bf16.gmra.mrb[0].mxu0 %v2014
  %v2472 = vpop.f32.mrb[0].mxu0
  %v2473 = vadd.f32 0.0, %v2472
  %v2474 = vpop.f32.mrb[0].mxu0
  %v2475 = vpop.f32.mrb[0].mxu0
  %v2476 = vadd.f32 0.0, %v2475
  %v2477 = vpop.f32.mrb[0].mxu0
  %2478 = vmatprep.mubr.bf16.mxu0 %v2136
  %2479 = vmatmul.mubr.bf16.gmra.mrb[0].mxu0 %v2016
  %v2480 = vpop.f32.mrb[0].mxu0
  %v2481 = vadd.f32 0.0, %v2480
  %v2482 = vpop.f32.mrb[0].mxu0
  %v2483 = vpop.f32.mrb[0].mxu0
  %v2484 = vadd.f32 0.0, %v2483
  %v2485 = vpop.f32.mrb[0].mxu0
  %2486 = vmatprep.mubr.bf16.mxu0 %v2139
  %2487 = vmatmul.mubr.bf16.gmra.mrb[0].mxu0 %v2018
  %v2488 = vpop.f32.mrb[0].mxu0
  %v2489 = vadd.f32 0.0, %v2488
  %v2490 = vpop.f32.mrb[0].mxu0
  %v2491 = vpop.f32.mrb[0].mxu0
  %v2492 = vadd.f32 0.0, %v2491
  %v2493 = vpop.f32.mrb[0].mxu0
  %2494 = vmatprep.mubr.bf16.mxu0 %v2142
  %2495 = vmatmul.mubr.bf16.gmra.mrb[0].mxu0 %v2020
  %v2496 = vpop.f32.mrb[0].mxu0
  %v2497 = vadd.f32 0.0, %v2496
  %v2498 = vpop.f32.mrb[0].mxu0
  %v2499 = vpop.f32.mrb[0].mxu0
  %v2500 = vadd.f32 0.0, %v2499
  %v2501 = vpop.f32.mrb[0].mxu0
  %2502 = vmatprep.mubr.bf16.mxu0 %v2145
  %2503 = vmatmul.mubr.bf16.gmra.mrb[0].mxu0 %v2022
  %v2504 = vpop.f32.mrb[0].mxu0
  %v2505 = vadd.f32 0.0, %v2504
  %v2506 = vpop.f32.mrb[0].mxu0
  %v2507 = vpop.f32.mrb[0].mxu0
  %v2508 = vadd.f32 0.0, %v2507
  %v2509 = vpop.f32.mrb[0].mxu0
  %2510 = vmatprep.mubr.bf16.mxu0 %v2148
  %2511 = vmatmul.mubr.bf16.gmra.mrb[0].mxu0 %v2024
  %v2512 = vpop.f32.mrb[0].mxu0
  %v2513 = vadd.f32 0.0, %v2512
  %v2514 = vpop.f32.mrb[0].mxu0
  %v2515 = vpop.f32.mrb[0].mxu0
  %v2516 = vadd.f32 0.0, %v2515
  %v2517 = vpop.f32.mrb[0].mxu0
  %2518 = vmatprep.mubr.bf16.mxu0 %v2151
  %2519 = vmatmul.mubr.bf16.gmra.mrb[0].mxu0 %v2026
  %v2520 = vpop.f32.mrb[0].mxu0
  %v2521 = vadd.f32 0.0, %v2520
  %v2522 = vpop.f32.mrb[0].mxu0
  %v2523 = vpop.f32.mrb[0].mxu0
  %v2524 = vadd.f32 0.0, %v2523
  %v2525 = vpop.f32.mrb[0].mxu0
  %2526 = vmatprep.mubr.bf16.mxu0 %v2154
  %2527 = vmatmul.mubr.bf16.gmra.mrb[0].mxu0 %v2028
  %v2528 = vpop.f32.mrb[0].mxu0
  %v2529 = vadd.f32 0.0, %v2528
  %v2530 = vpop.f32.mrb[0].mxu0
  %v2531 = vpop.f32.mrb[0].mxu0
  %v2532 = vadd.f32 0.0, %v2531
  %v2533 = vpop.f32.mrb[0].mxu0
  %2534 = vmatprep.mubr.bf16.mxu0 %v2157
  %2535 = vmatmul.mubr.bf16.gmra.mrb[0].mxu0 %v2030
  %v2536 = vpop.f32.mrb[0].mxu0
  %v2537 = vadd.f32 0.0, %v2536
  %v2538 = vpop.f32.mrb[0].mxu0
  %v2539 = vpop.f32.mrb[0].mxu0
  %v2540 = vadd.f32 0.0, %v2539
  %v2541 = vpop.f32.mrb[0].mxu0
  %2542 = vmatprep.mubr.bf16.mxu0 %v2160
  %2543 = vmatmul.mubr.bf16.gmra.mrb[0].mxu0 %v2032
  %v2544 = vpop.f32.mrb[0].mxu0
  %v2545 = vadd.f32 0.0, %v2544
  %v2546 = vpop.f32.mrb[0].mxu0
  %v2547 = vpop.f32.mrb[0].mxu0
  %v2548 = vadd.f32 0.0, %v2547
  %v2549 = vpop.f32.mrb[0].mxu0
  %2550 = vmatprep.mubr.bf16.mxu0 %v2163
  %2551 = vmatmul.mubr.bf16.gmra.mrb[0].mxu0 %v2034
  %v2552 = vpop.f32.mrb[0].mxu0
  %v2553 = vadd.f32 0.0, %v2552
  %v2554 = vpop.f32.mrb[0].mxu0
  %v2555 = vpop.f32.mrb[0].mxu0
  %v2556 = vadd.f32 0.0, %v2555
  %v2557 = vpop.f32.mrb[0].mxu0
  %2558 = vmatprep.mubr.bf16.mxu0 %v2166
  %2559 = vmatmul.mubr.bf16.gmra.mrb[0].mxu0 %v2036
  %v2560 = vpop.f32.mrb[0].mxu0
  %v2561 = vadd.f32 0.0, %v2560
  %v2562 = vpop.f32.mrb[0].mxu0
  %v2563 = vpop.f32.mrb[0].mxu0
  %v2564 = vadd.f32 0.0, %v2563
  %v2565 = vpop.f32.mrb[0].mxu0
  %2566 = vmatprep.mubr.bf16.mxu0 %v2169
  %2567 = vmatmul.mubr.bf16.gmra.mrb[0].mxu0 %v2038
  %v2568 = vpop.f32.mrb[0].mxu0
  %v2569 = vadd.f32 0.0, %v2568
  %v2570 = vpop.f32.mrb[0].mxu0
  %v2571 = vpop.f32.mrb[0].mxu0
  %v2572 = vadd.f32 0.0, %v2571
  %v2573 = vpop.f32.mrb[0].mxu0
  %2574 = vmatprep.mubr.bf16.mxu0 %v2172
  %2575 = vmatmul.mubr.bf16.gmra.mrb[0].mxu0 %v2040
  %v2576 = vpop.f32.mrb[0].mxu0
  %v2577 = vadd.f32 0.0, %v2576
  %v2578 = vpop.f32.mrb[0].mxu0
  %v2579 = vpop.f32.mrb[0].mxu0
  %v2580 = vadd.f32 0.0, %v2579
  %v2581 = vpop.f32.mrb[0].mxu0
  %2582 = vmatprep.mubr.bf16.mxu0 %v2175
  %2583 = vmatmul.mubr.bf16.gmra.mrb[0].mxu0 %v2042
  %v2584 = vpop.f32.mrb[0].mxu0
  %v2585 = vadd.f32 0.0, %v2584
  %v2586 = vpop.f32.mrb[0].mxu0
  %v2587 = vpop.f32.mrb[0].mxu0
  %v2588 = vadd.f32 0.0, %v2587
  %v2589 = vpop.f32.mrb[0].mxu0
  %2590 = vdwg.mxu0
  %v2591 = vmax.f32 %v2216, %v2465
  %v2592 = vmax.f32 %v2219, %v2468
  %v2593 = vmax.f32 %v2224, %v2473
  %v2594 = vmax.f32 %v2227, %v2476
  %v2595 = vmax.f32 %v2232, %v2481
  %v2596 = vmax.f32 %v2235, %v2484
  %v2597 = vmax.f32 %v2240, %v2489
  %v2598 = vmax.f32 %v2243, %v2492
  %v2599 = vmax.f32 %v2248, %v2497
  %v2600 = vmax.f32 %v2251, %v2500
  %v2601 = vmax.f32 %v2256, %v2505
  %v2602 = vmax.f32 %v2259, %v2508
  %v2603 = vmax.f32 %v2264, %v2513
  %v2604 = vmax.f32 %v2267, %v2516
  %v2605 = vmax.f32 %v2272, %v2521
  %v2606 = vmax.f32 %v2275, %v2524
  %v2607 = vmax.f32 %v2280, %v2529
  %v2608 = vmax.f32 %v2283, %v2532
  %v2609 = vmax.f32 %v2288, %v2537
  %v2610 = vmax.f32 %v2291, %v2540
  %v2611 = vmax.f32 %v2296, %v2545
  %v2612 = vmax.f32 %v2299, %v2548
  %v2613 = vmax.f32 %v2304, %v2553
  %v2614 = vmax.f32 %v2307, %v2556
  %v2615 = vmax.f32 %v2312, %v2561
  %v2616 = vmax.f32 %v2315, %v2564
  %v2617 = vmax.f32 %v2320, %v2569
  %v2618 = vmax.f32 %v2323, %v2572
  %v2619 = vmax.f32 %v2328, %v2577
  %v2620 = vmax.f32 %v2331, %v2580
  %v2621 = vmax.f32 %v2336, %v2585
  %v2622 = vmax.f32 %v2339, %v2588
  %vm2623 = vcmask 687104
  %2624 = vst.msk [vmem:[#allocation3] sm:$0xff] %vm2623, %v2591
  %2625 = vst.msk [vmem:[#allocation3 + $0x8] sm:$0xff] %vm2623, %v2592
  %2626 = vst.msk [vmem:[#allocation3 + $0x10] sm:$0xff] %vm2623, %v2593
  %2627 = vst.msk [vmem:[#allocation3 + $0x18] sm:$0xff] %vm2623, %v2594
  %2628 = vst.msk [vmem:[#allocation3 + $0x20] sm:$0xff] %vm2623, %v2595
  %2629 = vst.msk [vmem:[#allocation3 + $0x28] sm:$0xff] %vm2623, %v2596
  %2630 = vst.msk [vmem:[#allocation3 + $0x30] sm:$0xff] %vm2623, %v2597
  %2631 = vst.msk [vmem:[#allocation3 + $0x38] sm:$0xff] %vm2623, %v2598
  %2632 = vst.msk [vmem:[#allocation3 + $0x40] sm:$0xff] %vm2623, %v2599
  %2633 = vst.msk [vmem:[#allocation3 + $0x48] sm:$0xff] %vm2623, %v2600
  %2634 = vst.msk [vmem:[#allocation3 + $0x50] sm:$0xff] %vm2623, %v2601
  %2635 = vst.msk [vmem:[#allocation3 + $0x58] sm:$0xff] %vm2623, %v2602
  %2636 = vst.msk [vmem:[#allocation3 + $0x60] sm:$0xff] %vm2623, %v2603
  %2637 = vst.msk [vmem:[#allocation3 + $0x68] sm:$0xff] %vm2623, %v2604
  %2638 = vst.msk [vmem:[#allocation3 + $0x70] sm:$0xff] %vm2623, %v2605
  %2639 = vst.msk [vmem:[#allocation3 + $0x78] sm:$0xff] %vm2623, %v2606
  %2640 = vst.msk [vmem:[#allocation3 + $0x80] sm:$0xff] %vm2623, %v2607
  %2641 = vst.msk [vmem:[#allocation3 + $0x88] sm:$0xff] %vm2623, %v2608
  %2642 = vst.msk [vmem:[#allocation3 + $0x90] sm:$0xff] %vm2623, %v2609
  %2643 = vst.msk [vmem:[#allocation3 + $0x98] sm:$0xff] %vm2623, %v2610
  %2644 = vst.msk [vmem:[#allocation3 + $0xa0] sm:$0xff] %vm2623, %v2611
  %2645 = vst.msk [vmem:[#allocation3 + $0xa8] sm:$0xff] %vm2623, %v2612
  %2646 = vst.msk [vmem:[#allocation3 + $0xb0] sm:$0xff] %vm2623, %v2613
  %2647 = vst.msk [vmem:[#allocation3 + $0xb8] sm:$0xff] %vm2623, %v2614
  %2648 = vst.msk [vmem:[#allocation3 + $0xc0] sm:$0xff] %vm2623, %v2615
  %2649 = vst.msk [vmem:[#allocation3 + $0xc8] sm:$0xff] %vm2623, %v2616
  %2650 = vst.msk [vmem:[#allocation3 + $0xd0] sm:$0xff] %vm2623, %v2617
  %2651 = vst.msk [vmem:[#allocation3 + $0xd8] sm:$0xff] %vm2623, %v2618
  %2652 = vst.msk [vmem:[#allocation3 + $0xe0] sm:$0xff] %vm2623, %v2619
  %2653 = vst.msk [vmem:[#allocation3 + $0xe8] sm:$0xff] %vm2623, %v2620
  %2654 = vst.msk [vmem:[#allocation3 + $0xf0] sm:$0xff] %vm2623, %v2621
  %2655 = vst.msk [vmem:[#allocation3 + $0xf8] sm:$0xff] %vm2623, %v2622
  %2656 = vst.msk [vmem:[#allocation3 + $0x100] sm:$0xff] %vm2623, 0.0
  %v2657 = vld [vmem:[#allocation3] ss:$2 sm:$0xff]
  %s2658 = scalar_lea.vmem [#allocation3], 16
  %v2659 = vld [vmem:[%s2658] ss:$2 sm:$0xff]
  %s2660 = scalar_lea.vmem [#allocation3], 32
  %v2661 = vld [vmem:[%s2660] ss:$2 sm:$0xff]
  %s2662 = scalar_lea.vmem [#allocation3], 48
  %v2663 = vld [vmem:[%s2662] ss:$2 sm:$0xff]
  %s2664 = scalar_lea.vmem [#allocation3], 64
  %v2665 = vld [vmem:[%s2664] ss:$2 sm:$0xff]
  %s2666 = scalar_lea.vmem [#allocation3], 80
  %v2667 = vld [vmem:[%s2666] ss:$2 sm:$0xff]
  %s2668 = scalar_lea.vmem [#allocation3], 96
  %v2669 = vld [vmem:[%s2668] ss:$2 sm:$0xff]
  %s2670 = scalar_lea.vmem [#allocation3], 112
  %v2671 = vld [vmem:[%s2670] ss:$2 sm:$0xff]
  %s2672 = scalar_lea.vmem [#allocation3], 128
  %v2673 = vld [vmem:[%s2672] ss:$2 sm:$0xff]
  %s2674 = scalar_lea.vmem [#allocation3], 144
  %v2675 = vld [vmem:[%s2674] ss:$2 sm:$0xff]
  %s2676 = scalar_lea.vmem [#allocation3], 160
  %v2677 = vld [vmem:[%s2676] ss:$2 sm:$0xff]
  %s2678 = scalar_lea.vmem [#allocation3], 176
  %v2679 = vld [vmem:[%s2678] ss:$2 sm:$0xff]
  %s2680 = scalar_lea.vmem [#allocation3], 192
  %v2681 = vld [vmem:[%s2680] ss:$2 sm:$0xff]
  %s2682 = scalar_lea.vmem [#allocation3], 208
  %v2683 = vld [vmem:[%s2682] ss:$2 sm:$0xff]
  %s2684 = scalar_lea.vmem [#allocation3], 224
  %v2685 = vld [vmem:[%s2684] ss:$2 sm:$0xff]
  %s2686 = scalar_lea.vmem [#allocation3], 240
  %v2687 = vld [vmem:[%s2686] ss:$2 sm:$0xff]
  %s2688 = scalar_lea.vmem [#allocation3], 1
  %v2689 = vld [vmem:[%s2688] ss:$2 sm:$0xff]
  %s2690 = scalar_lea.vmem [#allocation3], 17
  %v2691 = vld [vmem:[%s2690] ss:$2 sm:$0xff]
  %s2692 = scalar_lea.vmem [#allocation3], 33
  %v2693 = vld [vmem:[%s2692] ss:$2 sm:$0xff]
  %s2694 = scalar_lea.vmem [#allocation3], 49
  %v2695 = vld [vmem:[%s2694] ss:$2 sm:$0xff]
  %s2696 = scalar_lea.vmem [#allocation3], 65
  %v2697 = vld [vmem:[%s2696] ss:$2 sm:$0xff]
  %s2698 = scalar_lea.vmem [#allocation3], 81
  %v2699 = vld [vmem:[%s2698] ss:$2 sm:$0xff]
  %s2700 = scalar_lea.vmem [#allocation3], 97
  %v2701 = vld [vmem:[%s2700] ss:$2 sm:$0xff]
  %s2702 = scalar_lea.vmem [#allocation3], 113
  %v2703 = vld [vmem:[%s2702] ss:$2 sm:$0xff]
  %s2704 = scalar_lea.vmem [#allocation3], 129
  %v2705 = vld [vmem:[%s2704] ss:$2 sm:$0xff]
  %s2706 = scalar_lea.vmem [#allocation3], 145
  %v2707 = vld [vmem:[%s2706] ss:$2 sm:$0xff]
  %s2708 = scalar_lea.vmem [#allocation3], 161
  %v2709 = vld [vmem:[%s2708] ss:$2 sm:$0xff]
  %s2710 = scalar_lea.vmem [#allocation3], 177
  %v2711 = vld [vmem:[%s2710] ss:$2 sm:$0xff]
  %s2712 = scalar_lea.vmem [#allocation3], 193
  %v2713 = vld [vmem:[%s2712] ss:$2 sm:$0xff]
  %s2714 = scalar_lea.vmem [#allocation3], 209
  %v2715 = vld [vmem:[%s2714] ss:$2 sm:$0xff]
  %s2716 = scalar_lea.vmem [#allocation3], 225
  %v2717 = vld [vmem:[%s2716] ss:$2 sm:$0xff]
  %s2718 = scalar_lea.vmem [#allocation3], 241
  %v2719 = vld [vmem:[%s2718] ss:$2 sm:$0xff]
  %v2720 = vmax.f32 %v2657, %v2689
  %v2721 = vmax.f32 %v2659, %v2691
  %v2722 = vmax.f32 %v2661, %v2693
  %v2723 = vmax.f32 %v2663, %v2695
  %v2724 = vmax.f32 %v2665, %v2697
  %v2725 = vmax.f32 %v2667, %v2699
  %v2726 = vmax.f32 %v2669, %v2701
  %v2727 = vmax.f32 %v2671, %v2703
  %v2728 = vmax.f32 %v2673, %v2705
  %v2729 = vmax.f32 %v2675, %v2707
  %v2730 = vmax.f32 %v2677, %v2709
  %v2731 = vmax.f32 %v2679, %v2711
  %v2732 = vmax.f32 %v2681, %v2713
  %v2733 = vmax.f32 %v2683, %v2715
  %v2734 = vmax.f32 %v2685, %v2717
  %v2735 = vmax.f32 %v2687, %v2719
  %v2736 = vpack.c.bf16 %v2721, %v2720
  %v2737 = vpack.c.bf16 %v2723, %v2722
  %v2738 = vpack.c.bf16 %v2725, %v2724
  %v2739 = vpack.c.bf16 %v2727, %v2726
  %v2740 = vpack.c.bf16 %v2729, %v2728
  %v2741 = vpack.c.bf16 %v2731, %v2730
  %v2742 = vpack.c.bf16 %v2733, %v2732
  %v2743 = vpack.c.bf16 %v2735, %v2734
  %v2744 = vld [vmem:[%s3] sm:$0xff]
  %v2745 = vld [vmem:[%s3 + $0x8] sm:$0xff]
  %v2746 = vld [vmem:[%s3 + $0x10] sm:$0xff]
  %v2747 = vld [vmem:[%s3 + $0x18] sm:$0xff]
  %v2748 = vld [vmem:[%s3 + $0x20] sm:$0xff]
  %v2749 = vld [vmem:[%s3 + $0x28] sm:$0xff]
  %v2750 = vld [vmem:[%s3 + $0x30] sm:$0xff]
  %v2751 = vld [vmem:[%s3 + $0x38] sm:$0xff]
  %v2752 = vld [vmem:[%s3 + $0x40] sm:$0xff]
  %v2753 = vld [vmem:[%s3 + $0x48] sm:$0xff]
  %v2754 = vld [vmem:[%s3 + $0x50] sm:$0x33]
  %s2755 = scalar_lea.vmem [#allocation3], 2
  %v2756 = vld [vmem:[%s2755] ss:$2 sm:$0xff]
  %s2757 = scalar_lea.vmem [#allocation3], 18
  %v2758 = vld [vmem:[%s2757] ss:$2 sm:$0xff]
  %s2759 = scalar_lea.vmem [#allocation3], 34
  %v2760 = vld [vmem:[%s2759] ss:$2 sm:$0xff]
  %s2761 = scalar_lea.vmem [#allocation3], 50
  %v2762 = vld [vmem:[%s2761] ss:$2 sm:$0xff]
  %s2763 = scalar_lea.vmem [#allocation3], 66
  %v2764 = vld [vmem:[%s2763] ss:$2 sm:$0xff]
  %s2765 = scalar_lea.vmem [#allocation3], 82
  %v2766 = vld [vmem:[%s2765] ss:$2 sm:$0xff]
  %s2767 = scalar_lea.vmem [#allocation3], 98
  %v2768 = vld [vmem:[%s2767] ss:$2 sm:$0xff]
  %s2769 = scalar_lea.vmem [#allocation3], 114
  %v2770 = vld [vmem:[%s2769] ss:$2 sm:$0xff]
  %s2771 = scalar_lea.vmem [#allocation3], 130
  %v2772 = vld [vmem:[%s2771] ss:$2 sm:$0xff]
  %s2773 = scalar_lea.vmem [#allocation3], 146
  %v2774 = vld [vmem:[%s2773] ss:$2 sm:$0xff]
  %s2775 = scalar_lea.vmem [#allocation3], 162
  %v2776 = vld [vmem:[%s2775] ss:$2 sm:$0xff]
  %s2777 = scalar_lea.vmem [#allocation3], 178
  %v2778 = vld [vmem:[%s2777] ss:$2 sm:$0xff]
  %s2779 = scalar_lea.vmem [#allocation3], 194
  %v2780 = vld [vmem:[%s2779] ss:$2 sm:$0xff]
  %s2781 = scalar_lea.vmem [#allocation3], 210
  %v2782 = vld [vmem:[%s2781] ss:$2 sm:$0xff]
  %s2783 = scalar_lea.vmem [#allocation3], 226
  %v2784 = vld [vmem:[%s2783] ss:$2 sm:$0xff]
  %s2785 = scalar_lea.vmem [#allocation3], 242
  %v2786 = vld [vmem:[%s2785] ss:$2 sm:$0xff]
  %s2787 = scalar_lea.vmem [#allocation3], 3
  %v2788 = vld [vmem:[%s2787] ss:$2 sm:$0xff]
  %s2789 = scalar_lea.vmem [#allocation3], 19
  %v2790 = vld [vmem:[%s2789] ss:$2 sm:$0xff]
  %s2791 = scalar_lea.vmem [#allocation3], 35
  %v2792 = vld [vmem:[%s2791] ss:$2 sm:$0xff]
  %s2793 = scalar_lea.vmem [#allocation3], 51
  %v2794 = vld [vmem:[%s2793] ss:$2 sm:$0xff]
  %s2795 = scalar_lea.vmem [#allocation3], 67
  %v2796 = vld [vmem:[%s2795] ss:$2 sm:$0xff]
  %s2797 = scalar_lea.vmem [#allocation3], 83
  %v2798 = vld [vmem:[%s2797] ss:$2 sm:$0xff]
  %s2799 = scalar_lea.vmem [#allocation3], 99
  %v2800 = vld [vmem:[%s2799] ss:$2 sm:$0xff]
  %s2801 = scalar_lea.vmem [#allocation3], 115
  %v2802 = vld [vmem:[%s2801] ss:$2 sm:$0xff]
  %s2803 = scalar_lea.vmem [#allocation3], 131
  %v2804 = vld [vmem:[%s2803] ss:$2 sm:$0xff]
  %s2805 = scalar_lea.vmem [#allocation3], 147
  %v2806 = vld [vmem:[%s2805] ss:$2 sm:$0xff]
  %s2807 = scalar_lea.vmem [#allocation3], 163
  %v2808 = vld [vmem:[%s2807] ss:$2 sm:$0xff]
  %s2809 = scalar_lea.vmem [#allocation3], 179
  %v2810 = vld [vmem:[%s2809] ss:$2 sm:$0xff]
  %s2811 = scalar_lea.vmem [#allocation3], 195
  %v2812 = vld [vmem:[%s2811] ss:$2 sm:$0xff]
  %s2813 = scalar_lea.vmem [#allocation3], 211
  %v2814 = vld [vmem:[%s2813] ss:$2 sm:$0xff]
  %s2815 = scalar_lea.vmem [#allocation3], 227
  %v2816 = vld [vmem:[%s2815] ss:$2 sm:$0xff]
  %s2817 = scalar_lea.vmem [#allocation3], 243
  %v2818 = vld [vmem:[%s2817] ss:$2 sm:$0xff]
  %v2819 = vmax.f32 %v2756, %v2788
  %v2820 = vmax.f32 %v2758, %v2790
  %v2821 = vmax.f32 %v2760, %v2792
  %v2822 = vmax.f32 %v2762, %v2794
  %v2823 = vmax.f32 %v2764, %v2796
  %v2824 = vmax.f32 %v2766, %v2798
  %v2825 = vmax.f32 %v2768, %v2800
  %v2826 = vmax.f32 %v2770, %v2802
  %v2827 = vmax.f32 %v2772, %v2804
  %v2828 = vmax.f32 %v2774, %v2806
  %v2829 = vmax.f32 %v2776, %v2808
  %v2830 = vmax.f32 %v2778, %v2810
  %v2831 = vmax.f32 %v2780, %v2812
  %v2832 = vmax.f32 %v2782, %v2814
  %v2833 = vmax.f32 %v2784, %v2816
  %v2834 = vmax.f32 %v2786, %v2818
  %v2835 = vpack.c.bf16 %v2820, %v2819
  %v2836 = vpack.c.bf16 %v2822, %v2821
  %v2837 = vpack.c.bf16 %v2824, %v2823
  %v2838 = vpack.c.bf16 %v2826, %v2825
  %v2839 = vpack.c.bf16 %v2828, %v2827
  %v2840 = vpack.c.bf16 %v2830, %v2829
  %v2841 = vpack.c.bf16 %v2832, %v2831
  %v2842 = vpack.c.bf16 %v2834, %v2833
  %s2843 = scalar_lea.vmem %s3, 88
  %v2844 = vld [vmem:[%s2843] sm:$0xff]
  %v2845 = vld [vmem:[%s2843 + $0x8] sm:$0xff]
  %v2846 = vld [vmem:[%s2843 + $0x10] sm:$0xff]
  %v2847 = vld [vmem:[%s2843 + $0x18] sm:$0xff]
  %v2848 = vld [vmem:[%s2843 + $0x20] sm:$0xff]
  %v2849 = vld [vmem:[%s2843 + $0x28] sm:$0xff]
  %v2850 = vld [vmem:[%s2843 + $0x30] sm:$0xff]
  %v2851 = vld [vmem:[%s2843 + $0x38] sm:$0xff]
  %v2852 = vld [vmem:[%s2843 + $0x40] sm:$0xff]
  %v2853 = vld [vmem:[%s2843 + $0x48] sm:$0xff]
  %v2854 = vld [vmem:[%s2843 + $0x50] sm:$0x33]
  %v2866 = vunpack.c.l.b16 %v2844
  %v2867 = vunpack.c.h.b16 %v2844
  %v2868 = vunpack.c.l.b16 %v2845
  %v2869 = vunpack.c.h.b16 %v2845
  %v2870 = vunpack.c.l.b16 %v2846
  %v2871 = vunpack.c.h.b16 %v2846
  %v2872 = vunpack.c.l.b16 %v2847
  %v2873 = vunpack.c.h.b16 %v2847
  %v2874 = vunpack.c.l.b16 %v2848
  %v2875 = vunpack.c.h.b16 %v2848
  %v2876 = vunpack.c.l.b16 %v2849
  %v2877 = vunpack.c.h.b16 %v2849
  %v2878 = vunpack.c.l.b16 %v2850
  %v2879 = vunpack.c.h.b16 %v2850
  %v2880 = vunpack.c.l.b16 %v2851
  %v2881 = vunpack.c.h.b16 %v2851
  %v2882 = vunpack.c.l.b16 %v2852
  %v2883 = vunpack.c.h.b16 %v2852
  %v2884 = vunpack.c.l.b16 %v2853
  %v2885 = vunpack.c.h.b16 %v2853
  %v2886 = vunpack.c.l.b16 %v2854
  %v2887 = vunpack.c.h.b16 %v2854
  %v2888 = vpack.c.b16 %v2868, %v2866
  %v2889 = vpack.c.b16 %v2869, %v2867
  %v2890 = vpack.c.b16 %v2872, %v2870
  %v2891 = vpack.c.b16 %v2873, %v2871
  %v2892 = vpack.c.b16 %v2876, %v2874
  %v2893 = vpack.c.b16 %v2877, %v2875
  %v2894 = vpack.c.b16 %v2880, %v2878
  %v2895 = vpack.c.b16 %v2881, %v2879
  %v2896 = vpack.c.b16 %v2884, %v2882
  %v2897 = vpack.c.b16 %v2885, %v2883
  %v2898 = vpack.c.b16 %v2886, %v2886
  %v2899 = vpack.c.b16 %v2887, %v2887
  %v2911 = vsel %vm2623, %v2835, 0
  %v2914 = vsel %vm2623, %v2836, 0
  %v2917 = vsel %vm2623, %v2837, 0
  %v2920 = vsel %vm2623, %v2838, 0
  %v2923 = vsel %vm2623, %v2839, 0
  %v2926 = vsel %vm2623, %v2840, 0
  %v2929 = vsel %vm2623, %v2841, 0
  %v2932 = vsel %vm2623, %v2842, 0
  %vm2934 = vcmask 1041408
  %v2936 = vsel %vm2934, %v2898, 0
  %v2939 = vsel %vm2934, %v2899, 0
  %2941 = vmatprep.subr.bf16.mxu0 %v2889
  %2942 = vmatpush1.bf16.msra.mxu0 %v2888
  %2943 = vmatprep.subr.bf16.mxu0 %v2891
  %2944 = vmatpush1.bf16.msra.mxu0 %v2890
  %2945 = vmatprep.subr.bf16.mxu0 %v2893
  %2946 = vmatpush1.bf16.msra.mxu0 %v2892
  %2947 = vmatprep.subr.bf16.mxu0 %v2895
  %2948 = vmatpush1.bf16.msra.mxu0 %v2894
  %2949 = vmatprep.subr.bf16.mxu0 %v2897
  %2950 = vmatpush1.bf16.msra.mxu0 %v2896
  %2951 = vmatprep.subr.bf16.mxu0 %v2939
  %2952 = vmatpush1.bf16.msra.mxu0 %v2936
  %2953 = vmatprep.subr.bf16.mxu0 0
  %2954 = vmatpush1.bf16.msra.mxu0 0
  %2955 = vmatprep.subr.bf16.mxu0 0
  %2956 = vmatpush1.bf16.msra.mxu0 0
  %2957 = vmatprep.subr.bf16.mxu0 0
  %2958 = vmatpush1.bf16.msra.mxu0 0
  %2959 = vmatprep.subr.bf16.mxu0 0
  %2960 = vmatpush1.bf16.msra.mxu0 0
  %2961 = vmatprep.subr.bf16.mxu0 0
  %2962 = vmatpush1.bf16.msra.mxu0 0
  %2963 = vmatprep.subr.bf16.mxu0 0
  %2964 = vmatpush1.bf16.msra.mxu0 0
  %2965 = vmatprep.subr.bf16.mxu0 0
  %2966 = vmatpush1.bf16.msra.mxu0 0
  %2967 = vmatprep.subr.bf16.mxu0 0
  %2968 = vmatpush1.bf16.msra.mxu0 0
  %2969 = vmatprep.subr.bf16.mxu0 0
  %2970 = vmatpush1.bf16.msra.mxu0 0
  %2971 = vmatprep.subr.bf16.mxu0 0
  %2972 = vmatpush1.bf16.msra.mxu0 0
  %2973 = vmatprep.mubr.bf16.mxu0 0
  %2974 = vmatmul.mubr.bf16.gmra.mrb[0].mxu0 %v2911
  %v2975 = vpop.f32.mrb[0].mxu0
  %v2976 = vadd.f32 0.0, %v2975
  %v2977 = vpop.f32.mrb[0].mxu0
  %v2978 = vadd.f32 0.0, %v2977
  %v2979 = vpop.f32.mrb[0].mxu0
  %v2980 = vadd.f32 0.0, %v2979
  %v2981 = vpop.f32.mrb[0].mxu0
  %v2982 = vadd.f32 0.0, %v2981
  %2983 = vmatprep.mubr.bf16.mxu0 0
  %2984 = vmatmul.mubr.bf16.gmra.mrb[0].mxu0 %v2914
  %v2985 = vpop.f32.mrb[0].mxu0
  %v2986 = vadd.f32 0.0, %v2985
  %v2987 = vpop.f32.mrb[0].mxu0
  %v2988 = vadd.f32 0.0, %v2987
  %v2989 = vpop.f32.mrb[0].mxu0
  %v2990 = vadd.f32 0.0, %v2989
  %v2991 = vpop.f32.mrb[0].mxu0
  %v2992 = vadd.f32 0.0, %v2991
  %2993 = vmatprep.mubr.bf16.mxu0 0
  %2994 = vmatmul.mubr.bf16.gmra.mrb[0].mxu0 %v2917
  %v2995 = vpop.f32.mrb[0].mxu0
  %v2996 = vadd.f32 0.0, %v2995
  %v2997 = vpop.f32.mrb[0].mxu0
  %v2998 = vadd.f32 0.0, %v2997
  %v2999 = vpop.f32.mrb[0].mxu0
  %v3000 = vadd.f32 0.0, %v2999
  %v3001 = vpop.f32.mrb[0].mxu0
  %v3002 = vadd.f32 0.0, %v3001
  %3003 = vmatprep.mubr.bf16.mxu0 0
  %3004 = vmatmul.mubr.bf16.gmra.mrb[0].mxu0 %v2920
  %v3005 = vpop.f32.mrb[0].mxu0
  %v3006 = vadd.f32 0.0, %v3005
  %v3007 = vpop.f32.mrb[0].mxu0
  %v3008 = vadd.f32 0.0, %v3007
  %v3009 = vpop.f32.mrb[0].mxu0
  %v3010 = vadd.f32 0.0, %v3009
  %v3011 = vpop.f32.mrb[0].mxu0
  %v3012 = vadd.f32 0.0, %v3011
  %3013 = vmatprep.mubr.bf16.mxu0 0
  %3014 = vmatmul.mubr.bf16.gmra.mrb[0].mxu0 %v2923
  %v3015 = vpop.f32.mrb[0].mxu0
  %v3016 = vadd.f32 0.0, %v3015
  %v3017 = vpop.f32.mrb[0].mxu0
  %v3018 = vadd.f32 0.0, %v3017
  %v3019 = vpop.f32.mrb[0].mxu0
  %v3020 = vadd.f32 0.0, %v3019
  %v3021 = vpop.f32.mrb[0].mxu0
  %v3022 = vadd.f32 0.0, %v3021
  %3023 = vmatprep.mubr.bf16.mxu0 0
  %3024 = vmatmul.mubr.bf16.gmra.mrb[0].mxu0 %v2926
  %v3025 = vpop.f32.mrb[0].mxu0
  %v3026 = vadd.f32 0.0, %v3025
  %v3027 = vpop.f32.mrb[0].mxu0
  %v3028 = vadd.f32 0.0, %v3027
  %v3029 = vpop.f32.mrb[0].mxu0
  %v3030 = vadd.f32 0.0, %v3029
  %v3031 = vpop.f32.mrb[0].mxu0
  %v3032 = vadd.f32 0.0, %v3031
  %3033 = vmatprep.mubr.bf16.mxu0 0
  %3034 = vmatmul.mubr.bf16.gmra.mrb[0].mxu0 %v2929
  %v3035 = vpop.f32.mrb[0].mxu0
  %v3036 = vadd.f32 0.0, %v3035
  %v3037 = vpop.f32.mrb[0].mxu0
  %v3038 = vadd.f32 0.0, %v3037
  %v3039 = vpop.f32.mrb[0].mxu0
  %v3040 = vadd.f32 0.0, %v3039
  %v3041 = vpop.f32.mrb[0].mxu0
  %v3042 = vadd.f32 0.0, %v3041
  %3043 = vmatprep.mubr.bf16.mxu0 0
  %3044 = vmatmul.mubr.bf16.gmra.mrb[0].mxu0 %v2932
  %v3045 = vpop.f32.mrb[0].mxu0
  %v3046 = vadd.f32 0.0, %v3045
  %v3047 = vpop.f32.mrb[0].mxu0
  %v3048 = vadd.f32 0.0, %v3047
  %v3049 = vpop.f32.mrb[0].mxu0
  %v3050 = vadd.f32 0.0, %v3049
  %v3051 = vpop.f32.mrb[0].mxu0
  %v3052 = vadd.f32 0.0, %v3051
  %3053 = vdwg.mxu0
  %v3065 = vunpack.c.l.b16 %v2744
  %v3066 = vunpack.c.h.b16 %v2744
  %v3067 = vunpack.c.l.b16 %v2745
  %v3068 = vunpack.c.h.b16 %v2745
  %v3069 = vunpack.c.l.b16 %v2746
  %v3070 = vunpack.c.h.b16 %v2746
  %v3071 = vunpack.c.l.b16 %v2747
  %v3072 = vunpack.c.h.b16 %v2747
  %v3073 = vunpack.c.l.b16 %v2748
  %v3074 = vunpack.c.h.b16 %v2748
  %v3075 = vunpack.c.l.b16 %v2749
  %v3076 = vunpack.c.h.b16 %v2749
  %v3077 = vunpack.c.l.b16 %v2750
  %v3078 = vunpack.c.h.b16 %v2750
  %v3079 = vunpack.c.l.b16 %v2751
  %v3080 = vunpack.c.h.b16 %v2751
  %v3081 = vunpack.c.l.b16 %v2752
  %v3082 = vunpack.c.h.b16 %v2752
  %v3083 = vunpack.c.l.b16 %v2753
  %v3084 = vunpack.c.h.b16 %v2753
  %v3085 = vunpack.c.l.b16 %v2754
  %v3086 = vunpack.c.h.b16 %v2754
  %v3087 = vpack.c.b16 %v3067, %v3065
  %v3088 = vpack.c.b16 %v3068, %v3066
  %v3089 = vpack.c.b16 %v3071, %v3069
  %v3090 = vpack.c.b16 %v3072, %v3070
  %v3091 = vpack.c.b16 %v3075, %v3073
  %v3092 = vpack.c.b16 %v3076, %v3074
  %v3093 = vpack.c.b16 %v3079, %v3077
  %v3094 = vpack.c.b16 %v3080, %v3078
  %v3095 = vpack.c.b16 %v3083, %v3081
  %v3096 = vpack.c.b16 %v3084, %v3082
  %v3097 = vpack.c.b16 %v3085, %v3085
  %v3098 = vpack.c.b16 %v3086, %v3086
  %v3110 = vsel %vm2623, %v2736, 0
  %v3113 = vsel %vm2623, %v2737, 0
  %v3116 = vsel %vm2623, %v2738, 0
  %v3119 = vsel %vm2623, %v2739, 0
  %v3122 = vsel %vm2623, %v2740, 0
  %v3125 = vsel %vm2623, %v2741, 0
  %v3128 = vsel %vm2623, %v2742, 0
  %v3131 = vsel %vm2623, %v2743, 0
  %v3134 = vsel %vm2934, %v3097, 0
  %v3137 = vsel %vm2934, %v3098, 0
  %3139 = vmatprep.subr.bf16.mxu0 %v3088
  %3140 = vmatpush1.bf16.msra.mxu0 %v3087
  %3141 = vmatprep.subr.bf16.mxu0 %v3090
  %3142 = vmatpush1.bf16.msra.mxu0 %v3089
  %3143 = vmatprep.subr.bf16.mxu0 %v3092
  %3144 = vmatpush1.bf16.msra.mxu0 %v3091
  %3145 = vmatprep.subr.bf16.mxu0 %v3094
  %3146 = vmatpush1.bf16.msra.mxu0 %v3093
  %3147 = vmatprep.subr.bf16.mxu0 %v3096
  %3148 = vmatpush1.bf16.msra.mxu0 %v3095
  %3149 = vmatprep.subr.bf16.mxu0 %v3137
  %3150 = vmatpush1.bf16.msra.mxu0 %v3134
  %3151 = vmatprep.subr.bf16.mxu0 0
  %3152 = vmatpush1.bf16.msra.mxu0 0
  %3153 = vmatprep.subr.bf16.mxu0 0
  %3154 = vmatpush1.bf16.msra.mxu0 0
  %3155 = vmatprep.subr.bf16.mxu0 0
  %3156 = vmatpush1.bf16.msra.mxu0 0
  %3157 = vmatprep.subr.bf16.mxu0 0
  %3158 = vmatpush1.bf16.msra.mxu0 0
  %3159 = vmatprep.subr.bf16.mxu0 0
  %3160 = vmatpush1.bf16.msra.mxu0 0
  %3161 = vmatprep.subr.bf16.mxu0 0
  %3162 = vmatpush1.bf16.msra.mxu0 0
  %3163 = vmatprep.subr.bf16.mxu0 0
  %3164 = vmatpush1.bf16.msra.mxu0 0
  %3165 = vmatprep.subr.bf16.mxu0 0
  %3166 = vmatpush1.bf16.msra.mxu0 0
  %3167 = vmatprep.subr.bf16.mxu0 0
  %3168 = vmatpush1.bf16.msra.mxu0 0
  %3169 = vmatprep.subr.bf16.mxu0 0
  %3170 = vmatpush1.bf16.msra.mxu0 0
  %3171 = vmatprep.mubr.bf16.mxu0 0
  %3172 = vmatmul.mubr.bf16.gmra.mrb[0].mxu0 %v3110
  %v3173 = vpop.f32.mrb[0].mxu0
  %v3174 = vadd.f32 %v2976, %v3173
  %v3175 = vpop.f32.mrb[0].mxu0
  %v3176 = vadd.f32 %v2978, %v3175
  %v3177 = vpop.f32.mrb[0].mxu0
  %v3178 = vadd.f32 %v2980, %v3177
  %v3179 = vpop.f32.mrb[0].mxu0
  %v3180 = vadd.f32 %v2982, %v3179
  %3181 = vmatprep.mubr.bf16.mxu0 0
  %3182 = vmatmul.mubr.bf16.gmra.mrb[0].mxu0 %v3113
  %v3183 = vpop.f32.mrb[0].mxu0
  %v3184 = vadd.f32 %v2986, %v3183
  %v3185 = vpop.f32.mrb[0].mxu0
  %v3186 = vadd.f32 %v2988, %v3185
  %v3187 = vpop.f32.mrb[0].mxu0
  %v3188 = vadd.f32 %v2990, %v3187
  %v3189 = vpop.f32.mrb[0].mxu0
  %v3190 = vadd.f32 %v2992, %v3189
  %3191 = vmatprep.mubr.bf16.mxu0 0
  %3192 = vmatmul.mubr.bf16.gmra.mrb[0].mxu0 %v3116
  %v3193 = vpop.f32.mrb[0].mxu0
  %v3194 = vadd.f32 %v2996, %v3193
  %v3195 = vpop.f32.mrb[0].mxu0
  %v3196 = vadd.f32 %v2998, %v3195
  %v3197 = vpop.f32.mrb[0].mxu0
  %v3198 = vadd.f32 %v3000, %v3197
  %v3199 = vpop.f32.mrb[0].mxu0
  %v3200 = vadd.f32 %v3002, %v3199
  %3201 = vmatprep.mubr.bf16.mxu0 0
  %3202 = vmatmul.mubr.bf16.gmra.mrb[0].mxu0 %v3119
  %v3203 = vpop.f32.mrb[0].mxu0
  %v3204 = vadd.f32 %v3006, %v3203
  %v3205 = vpop.f32.mrb[0].mxu0
  %v3206 = vadd.f32 %v3008, %v3205
  %v3207 = vpop.f32.mrb[0].mxu0
  %v3208 = vadd.f32 %v3010, %v3207
  %v3209 = vpop.f32.mrb[0].mxu0
  %v3210 = vadd.f32 %v3012, %v3209
  %3211 = vmatprep.mubr.bf16.mxu0 0
  %3212 = vmatmul.mubr.bf16.gmra.mrb[0].mxu0 %v3122
  %v3213 = vpop.f32.mrb[0].mxu0
  %v3214 = vadd.f32 %v3016, %v3213
  %v3215 = vpop.f32.mrb[0].mxu0
  %v3216 = vadd.f32 %v3018, %v3215
  %v3217 = vpop.f32.mrb[0].mxu0
  %v3218 = vadd.f32 %v3020, %v3217
  %v3219 = vpop.f32.mrb[0].mxu0
  %v3220 = vadd.f32 %v3022, %v3219
  %3221 = vmatprep.mubr.bf16.mxu0 0
  %3222 = vmatmul.mubr.bf16.gmra.mrb[0].mxu0 %v3125
  %v3223 = vpop.f32.mrb[0].mxu0
  %v3224 = vadd.f32 %v3026, %v3223
  %v3225 = vpop.f32.mrb[0].mxu0
  %v3226 = vadd.f32 %v3028, %v3225
  %v3227 = vpop.f32.mrb[0].mxu0
  %v3228 = vadd.f32 %v3030, %v3227
  %v3229 = vpop.f32.mrb[0].mxu0
  %v3230 = vadd.f32 %v3032, %v3229
  %3231 = vmatprep.mubr.bf16.mxu0 0
  %3232 = vmatmul.mubr.bf16.gmra.mrb[0].mxu0 %v3128
  %v3233 = vpop.f32.mrb[0].mxu0
  %v3234 = vadd.f32 %v3036, %v3233
  %v3235 = vpop.f32.mrb[0].mxu0
  %v3236 = vadd.f32 %v3038, %v3235
  %v3237 = vpop.f32.mrb[0].mxu0
  %v3238 = vadd.f32 %v3040, %v3237
  %v3239 = vpop.f32.mrb[0].mxu0
  %v3240 = vadd.f32 %v3042, %v3239
  %3241 = vmatprep.mubr.bf16.mxu0 0
  %3242 = vmatmul.mubr.bf16.gmra.mrb[0].mxu0 %v3131
  %v3243 = vpop.f32.mrb[0].mxu0
  %v3244 = vadd.f32 %v3046, %v3243
  %v3245 = vpop.f32.mrb[0].mxu0
  %v3246 = vadd.f32 %v3048, %v3245
  %v3247 = vpop.f32.mrb[0].mxu0
  %v3248 = vadd.f32 %v3050, %v3247
  %v3249 = vpop.f32.mrb[0].mxu0
  %v3250 = vadd.f32 %v3052, %v3249
  %3251 = vdwg.mxu0
  %s3252 = scalar_lea.vmem [#allocation3], 4
  %v3253 = vld [vmem:[%s3252] ss:$2 sm:$0xff]
  %s3254 = scalar_lea.vmem [#allocation3], 20
  %v3255 = vld [vmem:[%s3254] ss:$2 sm:$0xff]
  %s3256 = scalar_lea.vmem [#allocation3], 36
  %v3257 = vld [vmem:[%s3256] ss:$2 sm:$0xff]
  %s3258 = scalar_lea.vmem [#allocation3], 52
  %v3259 = vld [vmem:[%s3258] ss:$2 sm:$0xff]
  %s3260 = scalar_lea.vmem [#allocation3], 68
  %v3261 = vld [vmem:[%s3260] ss:$2 sm:$0xff]
  %s3262 = scalar_lea.vmem [#allocation3], 84
  %v3263 = vld [vmem:[%s3262] ss:$2 sm:$0xff]
  %s3264 = scalar_lea.vmem [#allocation3], 100
  %v3265 = vld [vmem:[%s3264] ss:$2 sm:$0xff]
  %s3266 = scalar_lea.vmem [#allocation3], 116
  %v3267 = vld [vmem:[%s3266] ss:$2 sm:$0xff]
  %s3268 = scalar_lea.vmem [#allocation3], 132
  %v3269 = vld [vmem:[%s3268] ss:$2 sm:$0xff]
  %s3270 = scalar_lea.vmem [#allocation3], 148
  %v3271 = vld [vmem:[%s3270] ss:$2 sm:$0xff]
  %s3272 = scalar_lea.vmem [#allocation3], 164
  %v3273 = vld [vmem:[%s3272] ss:$2 sm:$0xff]
  %s3274 = scalar_lea.vmem [#allocation3], 180
  %v3275 = vld [vmem:[%s3274] ss:$2 sm:$0xff]
  %s3276 = scalar_lea.vmem [#allocation3], 196
  %v3277 = vld [vmem:[%s3276] ss:$2 sm:$0xff]
  %s3278 = scalar_lea.vmem [#allocation3], 212
  %v3279 = vld [vmem:[%s3278] ss:$2 sm:$0xff]
  %s3280 = scalar_lea.vmem [#allocation3], 228
  %v3281 = vld [vmem:[%s3280] ss:$2 sm:$0xff]
  %s3282 = scalar_lea.vmem [#allocation3], 244
  %v3283 = vld [vmem:[%s3282] ss:$2 sm:$0xff]
  %s3284 = scalar_lea.vmem [#allocation3], 5
  %v3285 = vld [vmem:[%s3284] ss:$2 sm:$0xff]
  %s3286 = scalar_lea.vmem [#allocation3], 21
  %v3287 = vld [vmem:[%s3286] ss:$2 sm:$0xff]
  %s3288 = scalar_lea.vmem [#allocation3], 37
  %v3289 = vld [vmem:[%s3288] ss:$2 sm:$0xff]
  %s3290 = scalar_lea.vmem [#allocation3], 53
  %v3291 = vld [vmem:[%s3290] ss:$2 sm:$0xff]
  %s3292 = scalar_lea.vmem [#allocation3], 69
  %v3293 = vld [vmem:[%s3292] ss:$2 sm:$0xff]
  %s3294 = scalar_lea.vmem [#allocation3], 85
  %v3295 = vld [vmem:[%s3294] ss:$2 sm:$0xff]
  %s3296 = scalar_lea.vmem [#allocation3], 101
  %v3297 = vld [vmem:[%s3296] ss:$2 sm:$0xff]
  %s3298 = scalar_lea.vmem [#allocation3], 117
  %v3299 = vld [vmem:[%s3298] ss:$2 sm:$0xff]
  %s3300 = scalar_lea.vmem [#allocation3], 133
  %v3301 = vld [vmem:[%s3300] ss:$2 sm:$0xff]
  %s3302 = scalar_lea.vmem [#allocation3], 149
  %v3303 = vld [vmem:[%s3302] ss:$2 sm:$0xff]
  %s3304 = scalar_lea.vmem [#allocation3], 165
  %v3305 = vld [vmem:[%s3304] ss:$2 sm:$0xff]
  %s3306 = scalar_lea.vmem [#allocation3], 181
  %v3307 = vld [vmem:[%s3306] ss:$2 sm:$0xff]
  %s3308 = scalar_lea.vmem [#allocation3], 197
  %v3309 = vld [vmem:[%s3308] ss:$2 sm:$0xff]
  %s3310 = scalar_lea.vmem [#allocation3], 213
  %v3311 = vld [vmem:[%s3310] ss:$2 sm:$0xff]
  %s3312 = scalar_lea.vmem [#allocation3], 229
  %v3313 = vld [vmem:[%s3312] ss:$2 sm:$0xff]
  %s3314 = scalar_lea.vmem [#allocation3], 245
  %v3315 = vld [vmem:[%s3314] ss:$2 sm:$0xff]
  %v3316 = vmax.f32 %v3253, %v3285
  %v3317 = vmax.f32 %v3255, %v3287
  %v3318 = vmax.f32 %v3257, %v3289
  %v3319 = vmax.f32 %v3259, %v3291
  %v3320 = vmax.f32 %v3261, %v3293
  %v3321 = vmax.f32 %v3263, %v3295
  %v3322 = vmax.f32 %v3265, %v3297
  %v3323 = vmax.f32 %v3267, %v3299
  %v3324 = vmax.f32 %v3269, %v3301
  %v3325 = vmax.f32 %v3271, %v3303
  %v3326 = vmax.f32 %v3273, %v3305
  %v3327 = vmax.f32 %v3275, %v3307
  %v3328 = vmax.f32 %v3277, %v3309
  %v3329 = vmax.f32 %v3279, %v3311
  %v3330 = vmax.f32 %v3281, %v3313
  %v3331 = vmax.f32 %v3283, %v3315
  %v3332 = vpack.c.bf16 %v3317, %v3316
  %v3333 = vpack.c.bf16 %v3319, %v3318
  %v3334 = vpack.c.bf16 %v3321, %v3320
  %v3335 = vpack.c.bf16 %v3323, %v3322
  %v3336 = vpack.c.bf16 %v3325, %v3324
  %v3337 = vpack.c.bf16 %v3327, %v3326
  %v3338 = vpack.c.bf16 %v3329, %v3328
  %v3339 = vpack.c.bf16 %v3331, %v3330
  %s3340 = scalar_lea.vmem %s3, 176
  %v3341 = vld [vmem:[%s3340] sm:$0xff]
  %v3342 = vld [vmem:[%s3340 + $0x8] sm:$0xff]
  %v3343 = vld [vmem:[%s3340 + $0x10] sm:$0xff]
  %v3344 = vld [vmem:[%s3340 + $0x18] sm:$0xff]
  %v3345 = vld [vmem:[%s3340 + $0x20] sm:$0xff]
  %v3346 = vld [vmem:[%s3340 + $0x28] sm:$0xff]
  %v3347 = vld [vmem:[%s3340 + $0x30] sm:$0xff]
  %v3348 = vld [vmem:[%s3340 + $0x38] sm:$0xff]
  %v3349 = vld [vmem:[%s3340 + $0x40] sm:$0xff]
  %v3350 = vld [vmem:[%s3340 + $0x48] sm:$0xff]
  %v3351 = vld [vmem:[%s3340 + $0x50] sm:$0x33]
  %v3363 = vunpack.c.l.b16 %v3341
  %v3364 = vunpack.c.h.b16 %v3341
  %v3365 = vunpack.c.l.b16 %v3342
  %v3366 = vunpack.c.h.b16 %v3342
  %v3367 = vunpack.c.l.b16 %v3343
  %v3368 = vunpack.c.h.b16 %v3343
  %v3369 = vunpack.c.l.b16 %v3344
  %v3370 = vunpack.c.h.b16 %v3344
  %v3371 = vunpack.c.l.b16 %v3345
  %v3372 = vunpack.c.h.b16 %v3345
  %v3373 = vunpack.c.l.b16 %v3346
  %v3374 = vunpack.c.h.b16 %v3346
  %v3375 = vunpack.c.l.b16 %v3347
  %v3376 = vunpack.c.h.b16 %v3347
  %v3377 = vunpack.c.l.b16 %v3348
  %v3378 = vunpack.c.h.b16 %v3348
  %v3379 = vunpack.c.l.b16 %v3349
  %v3380 = vunpack.c.h.b16 %v3349
  %v3381 = vunpack.c.l.b16 %v3350
  %v3382 = vunpack.c.h.b16 %v3350
  %v3383 = vunpack.c.l.b16 %v3351
  %v3384 = vunpack.c.h.b16 %v3351
  %v3385 = vpack.c.b16 %v3365, %v3363
  %v3386 = vpack.c.b16 %v3366, %v3364
  %v3387 = vpack.c.b16 %v3369, %v3367
  %v3388 = vpack.c.b16 %v3370, %v3368
  %v3389 = vpack.c.b16 %v3373, %v3371
  %v3390 = vpack.c.b16 %v3374, %v3372
  %v3391 = vpack.c.b16 %v3377, %v3375
  %v3392 = vpack.c.b16 %v3378, %v3376
  %v3393 = vpack.c.b16 %v3381, %v3379
  %v3394 = vpack.c.b16 %v3382, %v3380
  %v3395 = vpack.c.b16 %v3383, %v3383
  %v3396 = vpack.c.b16 %v3384, %v3384
  %v3408 = vsel %vm2623, %v3332, 0
  %v3411 = vsel %vm2623, %v3333, 0
  %v3414 = vsel %vm2623, %v3334, 0
  %v3417 = vsel %vm2623, %v3335, 0
  %v3420 = vsel %vm2623, %v3336, 0
  %v3423 = vsel %vm2623, %v3337, 0
  %v3426 = vsel %vm2623, %v3338, 0
  %v3429 = vsel %vm2623, %v3339, 0
  %v3432 = vsel %vm2934, %v3395, 0
  %v3435 = vsel %vm2934, %v3396, 0
  %3437 = vmatprep.subr.bf16.mxu0 %v3386
  %3438 = vmatpush1.bf16.msra.mxu0 %v3385
  %3439 = vmatprep.subr.bf16.mxu0 %v3388
  %3440 = vmatpush1.bf16.msra.mxu0 %v3387
  %3441 = vmatprep.subr.bf16.mxu0 %v3390
  %3442 = vmatpush1.bf16.msra.mxu0 %v3389
  %3443 = vmatprep.subr.bf16.mxu0 %v3392
  %3444 = vmatpush1.bf16.msra.mxu0 %v3391
  %3445 = vmatprep.subr.bf16.mxu0 %v3394
  %3446 = vmatpush1.bf16.msra.mxu0 %v3393
  %3447 = vmatprep.subr.bf16.mxu0 %v3435
  %3448 = vmatpush1.bf16.msra.mxu0 %v3432
  %3449 = vmatprep.subr.bf16.mxu0 0
  %3450 = vmatpush1.bf16.msra.mxu0 0
  %3451 = vmatprep.subr.bf16.mxu0 0
  %3452 = vmatpush1.bf16.msra.mxu0 0
  %3453 = vmatprep.subr.bf16.mxu0 0
  %3454 = vmatpush1.bf16.msra.mxu0 0
  %3455 = vmatprep.subr.bf16.mxu0 0
  %3456 = vmatpush1.bf16.msra.mxu0 0
  %3457 = vmatprep.subr.bf16.mxu0 0
  %3458 = vmatpush1.bf16.msra.mxu0 0
  %3459 = vmatprep.subr.bf16.mxu0 0
  %3460 = vmatpush1.bf16.msra.mxu0 0
  %3461 = vmatprep.subr.bf16.mxu0 0
  %3462 = vmatpush1.bf16.msra.mxu0 0
  %3463 = vmatprep.subr.bf16.mxu0 0
  %3464 = vmatpush1.bf16.msra.mxu0 0
  %3465 = vmatprep.subr.bf16.mxu0 0
  %3466 = vmatpush1.bf16.msra.mxu0 0
  %3467 = vmatprep.subr.bf16.mxu0 0
  %3468 = vmatpush1.bf16.msra.mxu0 0
  %3469 = vmatprep.mubr.bf16.mxu0 0
  %3470 = vmatmul.mubr.bf16.gmra.mrb[0].mxu0 %v3408
  %v3471 = vpop.f32.mrb[0].mxu0
  %v3472 = vadd.f32 0.0, %v3471
  %v3473 = vpop.f32.mrb[0].mxu0
  %v3474 = vadd.f32 0.0, %v3473
  %v3475 = vpop.f32.mrb[0].mxu0
  %v3476 = vadd.f32 0.0, %v3475
  %v3477 = vpop.f32.mrb[0].mxu0
  %v3478 = vadd.f32 0.0, %v3477
  %3479 = vmatprep.mubr.bf16.mxu0 0
  %3480 = vmatmul.mubr.bf16.gmra.mrb[0].mxu0 %v3411
  %v3481 = vpop.f32.mrb[0].mxu0
  %v3482 = vadd.f32 0.0, %v3481
  %v3483 = vpop.f32.mrb[0].mxu0
  %v3484 = vadd.f32 0.0, %v3483
  %v3485 = vpop.f32.mrb[0].mxu0
  %v3486 = vadd.f32 0.0, %v3485
  %v3487 = vpop.f32.mrb[0].mxu0
  %v3488 = vadd.f32 0.0, %v3487
  %3489 = vmatprep.mubr.bf16.mxu0 0
  %3490 = vmatmul.mubr.bf16.gmra.mrb[0].mxu0 %v3414
  %v3491 = vpop.f32.mrb[0].mxu0
  %v3492 = vadd.f32 0.0, %v3491
  %v3493 = vpop.f32.mrb[0].mxu0
  %v3494 = vadd.f32 0.0, %v3493
  %v3495 = vpop.f32.mrb[0].mxu0
  %v3496 = vadd.f32 0.0, %v3495
  %v3497 = vpop.f32.mrb[0].mxu0
  %v3498 = vadd.f32 0.0, %v3497
  %3499 = vmatprep.mubr.bf16.mxu0 0
  %3500 = vmatmul.mubr.bf16.gmra.mrb[0].mxu0 %v3417
  %v3501 = vpop.f32.mrb[0].mxu0
  %v3502 = vadd.f32 0.0, %v3501
  %v3503 = vpop.f32.mrb[0].mxu0
  %v3504 = vadd.f32 0.0, %v3503
  %v3505 = vpop.f32.mrb[0].mxu0
  %v3506 = vadd.f32 0.0, %v3505
  %v3507 = vpop.f32.mrb[0].mxu0
  %v3508 = vadd.f32 0.0, %v3507
  %3509 = vmatprep.mubr.bf16.mxu0 0
  %3510 = vmatmul.mubr.bf16.gmra.mrb[0].mxu0 %v3420
  %v3511 = vpop.f32.mrb[0].mxu0
  %v3512 = vadd.f32 0.0, %v3511
  %v3513 = vpop.f32.mrb[0].mxu0
  %v3514 = vadd.f32 0.0, %v3513
  %v3515 = vpop.f32.mrb[0].mxu0
  %v3516 = vadd.f32 0.0, %v3515
  %v3517 = vpop.f32.mrb[0].mxu0
  %v3518 = vadd.f32 0.0, %v3517
  %3519 = vmatprep.mubr.bf16.mxu0 0
  %3520 = vmatmul.mubr.bf16.gmra.mrb[0].mxu0 %v3423
  %v3521 = vpop.f32.mrb[0].mxu0
  %v3522 = vadd.f32 0.0, %v3521
  %v3523 = vpop.f32.mrb[0].mxu0
  %v3524 = vadd.f32 0.0, %v3523
  %v3525 = vpop.f32.mrb[0].mxu0
  %v3526 = vadd.f32 0.0, %v3525
  %v3527 = vpop.f32.mrb[0].mxu0
  %v3528 = vadd.f32 0.0, %v3527
  %3529 = vmatprep.mubr.bf16.mxu0 0
  %3530 = vmatmul.mubr.bf16.gmra.mrb[0].mxu0 %v3426
  %v3531 = vpop.f32.mrb[0].mxu0
  %v3532 = vadd.f32 0.0, %v3531
  %v3533 = vpop.f32.mrb[0].mxu0
  %v3534 = vadd.f32 0.0, %v3533
  %v3535 = vpop.f32.mrb[0].mxu0
  %v3536 = vadd.f32 0.0, %v3535
  %v3537 = vpop.f32.mrb[0].mxu0
  %v3538 = vadd.f32 0.0, %v3537
  %3539 = vmatprep.mubr.bf16.mxu0 0
  %3540 = vmatmul.mubr.bf16.gmra.mrb[0].mxu0 %v3429
  %v3541 = vpop.f32.mrb[0].mxu0
  %v3542 = vadd.f32 0.0, %v3541
  %v3543 = vpop.f32.mrb[0].mxu0
  %v3544 = vadd.f32 0.0, %v3543
  %v3545 = vpop.f32.mrb[0].mxu0
  %v3546 = vadd.f32 0.0, %v3545
  %v3547 = vpop.f32.mrb[0].mxu0
  %v3548 = vadd.f32 0.0, %v3547
  %3549 = vdwg.mxu0
  %v3550 = vadd.f32 %v3174, %v3472
  %v3551 = vadd.f32 %v3176, %v3474
  %v3552 = vadd.f32 %v3178, %v3476
  %v3553 = vadd.f32 %v3180, %v3478
  %v3554 = vadd.f32 %v3184, %v3482
  %v3555 = vadd.f32 %v3186, %v3484
  %v3556 = vadd.f32 %v3188, %v3486
  %v3557 = vadd.f32 %v3190, %v3488
  %v3558 = vadd.f32 %v3194, %v3492
  %v3559 = vadd.f32 %v3196, %v3494
  %v3560 = vadd.f32 %v3198, %v3496
  %v3561 = vadd.f32 %v3200, %v3498
  %v3562 = vadd.f32 %v3204, %v3502
  %v3563 = vadd.f32 %v3206, %v3504
  %v3564 = vadd.f32 %v3208, %v3506
  %v3565 = vadd.f32 %v3210, %v3508
  %v3566 = vadd.f32 %v3214, %v3512
  %v3567 = vadd.f32 %v3216, %v3514
  %v3568 = vadd.f32 %v3218, %v3516
  %v3569 = vadd.f32 %v3220, %v3518
  %v3570 = vadd.f32 %v3224, %v3522
  %v3571 = vadd.f32 %v3226, %v3524
  %v3572 = vadd.f32 %v3228, %v3526
  %v3573 = vadd.f32 %v3230, %v3528
  %v3574 = vadd.f32 %v3234, %v3532
  %v3575 = vadd.f32 %v3236, %v3534
  %v3576 = vadd.f32 %v3238, %v3536
  %v3577 = vadd.f32 %v3240, %v3538
  %v3578 = vadd.f32 %v3244, %v3542
  %v3579 = vadd.f32 %v3246, %v3544
  %v3580 = vadd.f32 %v3248, %v3546
  %v3581 = vadd.f32 %v3250, %v3548
  %s3582 = scalar_lea.vmem [#allocation3], 6
  %v3583 = vld [vmem:[%s3582] ss:$2 sm:$0xff]
  %s3584 = scalar_lea.vmem [#allocation3], 22
  %v3585 = vld [vmem:[%s3584] ss:$2 sm:$0xff]
  %s3586 = scalar_lea.vmem [#allocation3], 38
  %v3587 = vld [vmem:[%s3586] ss:$2 sm:$0xff]
  %s3588 = scalar_lea.vmem [#allocation3], 54
  %v3589 = vld [vmem:[%s3588] ss:$2 sm:$0xff]
  %s3590 = scalar_lea.vmem [#allocation3], 70
  %v3591 = vld [vmem:[%s3590] ss:$2 sm:$0xff]
  %s3592 = scalar_lea.vmem [#allocation3], 86
  %v3593 = vld [vmem:[%s3592] ss:$2 sm:$0xff]
  %s3594 = scalar_lea.vmem [#allocation3], 102
  %v3595 = vld [vmem:[%s3594] ss:$2 sm:$0xff]
  %s3596 = scalar_lea.vmem [#allocation3], 118
  %v3597 = vld [vmem:[%s3596] ss:$2 sm:$0xff]
  %s3598 = scalar_lea.vmem [#allocation3], 134
  %v3599 = vld [vmem:[%s3598] ss:$2 sm:$0xff]
  %s3600 = scalar_lea.vmem [#allocation3], 150
  %v3601 = vld [vmem:[%s3600] ss:$2 sm:$0xff]
  %s3602 = scalar_lea.vmem [#allocation3], 166
  %v3603 = vld [vmem:[%s3602] ss:$2 sm:$0xff]
  %s3604 = scalar_lea.vmem [#allocation3], 182
  %v3605 = vld [vmem:[%s3604] ss:$2 sm:$0xff]
  %s3606 = scalar_lea.vmem [#allocation3], 198
  %v3607 = vld [vmem:[%s3606] ss:$2 sm:$0xff]
  %s3608 = scalar_lea.vmem [#allocation3], 214
  %v3609 = vld [vmem:[%s3608] ss:$2 sm:$0xff]
  %s3610 = scalar_lea.vmem [#allocation3], 230
  %v3611 = vld [vmem:[%s3610] ss:$2 sm:$0xff]
  %s3612 = scalar_lea.vmem [#allocation3], 246
  %v3613 = vld [vmem:[%s3612] ss:$2 sm:$0xff]
  %s3614 = scalar_lea.vmem [#allocation3], 7
  %v3615 = vld [vmem:[%s3614] ss:$2 sm:$0xff]
  %s3616 = scalar_lea.vmem [#allocation3], 23
  %v3617 = vld [vmem:[%s3616] ss:$2 sm:$0xff]
  %s3618 = scalar_lea.vmem [#allocation3], 39
  %v3619 = vld [vmem:[%s3618] ss:$2 sm:$0xff]
  %s3620 = scalar_lea.vmem [#allocation3], 55
  %v3621 = vld [vmem:[%s3620] ss:$2 sm:$0xff]
  %s3622 = scalar_lea.vmem [#allocation3], 71
  %v3623 = vld [vmem:[%s3622] ss:$2 sm:$0xff]
  %s3624 = scalar_lea.vmem [#allocation3], 87
  %v3625 = vld [vmem:[%s3624] ss:$2 sm:$0xff]
  %s3626 = scalar_lea.vmem [#allocation3], 103
  %v3627 = vld [vmem:[%s3626] ss:$2 sm:$0xff]
  %s3628 = scalar_lea.vmem [#allocation3], 119
  %v3629 = vld [vmem:[%s3628] ss:$2 sm:$0xff]
  %s3630 = scalar_lea.vmem [#allocation3], 135
  %v3631 = vld [vmem:[%s3630] ss:$2 sm:$0xff]
  %s3632 = scalar_lea.vmem [#allocation3], 151
  %v3633 = vld [vmem:[%s3632] ss:$2 sm:$0xff]
  %s3634 = scalar_lea.vmem [#allocation3], 167
  %v3635 = vld [vmem:[%s3634] ss:$2 sm:$0xff]
  %s3636 = scalar_lea.vmem [#allocation3], 183
  %v3637 = vld [vmem:[%s3636] ss:$2 sm:$0xff]
  %s3638 = scalar_lea.vmem [#allocation3], 199
  %v3639 = vld [vmem:[%s3638] ss:$2 sm:$0xff]
  %s3640 = scalar_lea.vmem [#allocation3], 215
  %v3641 = vld [vmem:[%s3640] ss:$2 sm:$0xff]
  %s3642 = scalar_lea.vmem [#allocation3], 231
  %v3643 = vld [vmem:[%s3642] ss:$2 sm:$0xff]
  %s3644 = scalar_lea.vmem [#allocation3], 247
  %v3645 = vld [vmem:[%s3644] ss:$2 sm:$0xff]
  %v3646 = vmax.f32 %v3583, %v3615
  %v3647 = vmax.f32 %v3585, %v3617
  %v3648 = vmax.f32 %v3587, %v3619
  %v3649 = vmax.f32 %v3589, %v3621
  %v3650 = vmax.f32 %v3591, %v3623
  %v3651 = vmax.f32 %v3593, %v3625
  %v3652 = vmax.f32 %v3595, %v3627
  %v3653 = vmax.f32 %v3597, %v3629
  %v3654 = vmax.f32 %v3599, %v3631
  %v3655 = vmax.f32 %v3601, %v3633
  %v3656 = vmax.f32 %v3603, %v3635
  %v3657 = vmax.f32 %v3605, %v3637
  %v3658 = vmax.f32 %v3607, %v3639
  %v3659 = vmax.f32 %v3609, %v3641
  %v3660 = vmax.f32 %v3611, %v3643
  %v3661 = vmax.f32 %v3613, %v3645
  %v3662 = vpack.c.bf16 %v3647, %v3646
  %v3663 = vpack.c.bf16 %v3649, %v3648
  %v3664 = vpack.c.bf16 %v3651, %v3650
  %v3665 = vpack.c.bf16 %v3653, %v3652
  %v3666 = vpack.c.bf16 %v3655, %v3654
  %v3667 = vpack.c.bf16 %v3657, %v3656
  %v3668 = vpack.c.bf16 %v3659, %v3658
  %v3669 = vpack.c.bf16 %v3661, %v3660
  %s3670 = scalar_lea.vmem %s3, 264
  %v3671 = vld [vmem:[%s3670] sm:$0xff]
  %v3672 = vld [vmem:[%s3670 + $0x8] sm:$0xff]
  %v3673 = vld [vmem:[%s3670 + $0x10] sm:$0xff]
  %v3674 = vld [vmem:[%s3670 + $0x18] sm:$0xff]
  %v3675 = vld [vmem:[%s3670 + $0x20] sm:$0xff]
  %v3676 = vld [vmem:[%s3670 + $0x28] sm:$0xff]
  %v3677 = vld [vmem:[%s3670 + $0x30] sm:$0xff]
  %v3678 = vld [vmem:[%s3670 + $0x38] sm:$0xff]
  %v3679 = vld [vmem:[%s3670 + $0x40] sm:$0xff]
  %v3680 = vld [vmem:[%s3670 + $0x48] sm:$0xff]
  %v3681 = vld [vmem:[%s3670 + $0x50] sm:$0x33]
  %v3693 = vunpack.c.l.b16 %v3671
  %v3694 = vunpack.c.h.b16 %v3671
  %v3695 = vunpack.c.l.b16 %v3672
  %v3696 = vunpack.c.h.b16 %v3672
  %v3697 = vunpack.c.l.b16 %v3673
  %v3698 = vunpack.c.h.b16 %v3673
  %v3699 = vunpack.c.l.b16 %v3674
  %v3700 = vunpack.c.h.b16 %v3674
  %v3701 = vunpack.c.l.b16 %v3675
  %v3702 = vunpack.c.h.b16 %v3675
  %v3703 = vunpack.c.l.b16 %v3676
  %v3704 = vunpack.c.h.b16 %v3676
  %v3705 = vunpack.c.l.b16 %v3677
  %v3706 = vunpack.c.h.b16 %v3677
  %v3707 = vunpack.c.l.b16 %v3678
  %v3708 = vunpack.c.h.b16 %v3678
  %v3709 = vunpack.c.l.b16 %v3679
  %v3710 = vunpack.c.h.b16 %v3679
  %v3711 = vunpack.c.l.b16 %v3680
  %v3712 = vunpack.c.h.b16 %v3680
  %v3713 = vunpack.c.l.b16 %v3681
  %v3714 = vunpack.c.h.b16 %v3681
  %v3715 = vpack.c.b16 %v3695, %v3693
  %v3716 = vpack.c.b16 %v3696, %v3694
  %v3717 = vpack.c.b16 %v3699, %v3697
  %v3718 = vpack.c.b16 %v3700, %v3698
  %v3719 = vpack.c.b16 %v3703, %v3701
  %v3720 = vpack.c.b16 %v3704, %v3702
  %v3721 = vpack.c.b16 %v3707, %v3705
  %v3722 = vpack.c.b16 %v3708, %v3706
  %v3723 = vpack.c.b16 %v3711, %v3709
  %v3724 = vpack.c.b16 %v3712, %v3710
  %v3725 = vpack.c.b16 %v3713, %v3713
  %v3726 = vpack.c.b16 %v3714, %v3714
  %v3738 = vsel %vm2623, %v3662, 0
  %v3741 = vsel %vm2623, %v3663, 0
  %v3744 = vsel %vm2623, %v3664, 0
  %v3747 = vsel %vm2623, %v3665, 0
  %v3750 = vsel %vm2623, %v3666, 0
  %v3753 = vsel %vm2623, %v3667, 0
  %v3756 = vsel %vm2623, %v3668, 0
  %v3759 = vsel %vm2623, %v3669, 0
  %v3762 = vsel %vm2934, %v3725, 0
  %v3765 = vsel %vm2934, %v3726, 0
  %3767 = vmatprep.subr.bf16.mxu0 %v3716
  %3768 = vmatpush1.bf16.msra.mxu0 %v3715
  %3769 = vmatprep.subr.bf16.mxu0 %v3718
  %3770 = vmatpush1.bf16.msra.mxu0 %v3717
  %3771 = vmatprep.subr.bf16.mxu0 %v3720
  %3772 = vmatpush1.bf16.msra.mxu0 %v3719
  %3773 = vmatprep.subr.bf16.mxu0 %v3722
  %3774 = vmatpush1.bf16.msra.mxu0 %v3721
  %3775 = vmatprep.subr.bf16.mxu0 %v3724
  %3776 = vmatpush1.bf16.msra.mxu0 %v3723
  %3777 = vmatprep.subr.bf16.mxu0 %v3765
  %3778 = vmatpush1.bf16.msra.mxu0 %v3762
  %3779 = vmatprep.subr.bf16.mxu0 0
  %3780 = vmatpush1.bf16.msra.mxu0 0
  %3781 = vmatprep.subr.bf16.mxu0 0
  %3782 = vmatpush1.bf16.msra.mxu0 0
  %3783 = vmatprep.subr.bf16.mxu0 0
  %3784 = vmatpush1.bf16.msra.mxu0 0
  %3785 = vmatprep.subr.bf16.mxu0 0
  %3786 = vmatpush1.bf16.msra.mxu0 0
  %3787 = vmatprep.subr.bf16.mxu0 0
  %3788 = vmatpush1.bf16.msra.mxu0 0
  %3789 = vmatprep.subr.bf16.mxu0 0
  %3790 = vmatpush1.bf16.msra.mxu0 0
  %3791 = vmatprep.subr.bf16.mxu0 0
  %3792 = vmatpush1.bf16.msra.mxu0 0
  %3793 = vmatprep.subr.bf16.mxu0 0
  %3794 = vmatpush1.bf16.msra.mxu0 0
  %3795 = vmatprep.subr.bf16.mxu0 0
  %3796 = vmatpush1.bf16.msra.mxu0 0
  %3797 = vmatprep.subr.bf16.mxu0 0
  %3798 = vmatpush1.bf16.msra.mxu0 0
  %3799 = vmatprep.mubr.bf16.mxu0 0
  %3800 = vmatmul.mubr.bf16.gmra.mrb[0].mxu0 %v3738
  %v3801 = vpop.f32.mrb[0].mxu0
  %v3802 = vadd.f32 0.0, %v3801
  %v3803 = vpop.f32.mrb[0].mxu0
  %v3804 = vadd.f32 0.0, %v3803
  %v3805 = vpop.f32.mrb[0].mxu0
  %v3806 = vadd.f32 0.0, %v3805
  %v3807 = vpop.f32.mrb[0].mxu0
  %v3808 = vadd.f32 0.0, %v3807
  %3809 = vmatprep.mubr.bf16.mxu0 0
  %3810 = vmatmul.mubr.bf16.gmra.mrb[0].mxu0 %v3741
  %v3811 = vpop.f32.mrb[0].mxu0
  %v3812 = vadd.f32 0.0, %v3811
  %v3813 = vpop.f32.mrb[0].mxu0
  %v3814 = vadd.f32 0.0, %v3813
  %v3815 = vpop.f32.mrb[0].mxu0
  %v3816 = vadd.f32 0.0, %v3815
  %v3817 = vpop.f32.mrb[0].mxu0
  %v3818 = vadd.f32 0.0, %v3817
  %3819 = vmatprep.mubr.bf16.mxu0 0
  %3820 = vmatmul.mubr.bf16.gmra.mrb[0].mxu0 %v3744
  %v3821 = vpop.f32.mrb[0].mxu0
  %v3822 = vadd.f32 0.0, %v3821
  %v3823 = vpop.f32.mrb[0].mxu0
  %v3824 = vadd.f32 0.0, %v3823
  %v3825 = vpop.f32.mrb[0].mxu0
  %v3826 = vadd.f32 0.0, %v3825
  %v3827 = vpop.f32.mrb[0].mxu0
  %v3828 = vadd.f32 0.0, %v3827
  %3829 = vmatprep.mubr.bf16.mxu0 0
  %3830 = vmatmul.mubr.bf16.gmra.mrb[0].mxu0 %v3747
  %v3831 = vpop.f32.mrb[0].mxu0
  %v3832 = vadd.f32 0.0, %v3831
  %v3833 = vpop.f32.mrb[0].mxu0
  %v3834 = vadd.f32 0.0, %v3833
  %v3835 = vpop.f32.mrb[0].mxu0
  %v3836 = vadd.f32 0.0, %v3835
  %v3837 = vpop.f32.mrb[0].mxu0
  %v3838 = vadd.f32 0.0, %v3837
  %3839 = vmatprep.mubr.bf16.mxu0 0
  %3840 = vmatmul.mubr.bf16.gmra.mrb[0].mxu0 %v3750
  %v3841 = vpop.f32.mrb[0].mxu0
  %v3842 = vadd.f32 0.0, %v3841
  %v3843 = vpop.f32.mrb[0].mxu0
  %v3844 = vadd.f32 0.0, %v3843
  %v3845 = vpop.f32.mrb[0].mxu0
  %v3846 = vadd.f32 0.0, %v3845
  %v3847 = vpop.f32.mrb[0].mxu0
  %v3848 = vadd.f32 0.0, %v3847
  %3849 = vmatprep.mubr.bf16.mxu0 0
  %3850 = vmatmul.mubr.bf16.gmra.mrb[0].mxu0 %v3753
  %v3851 = vpop.f32.mrb[0].mxu0
  %v3852 = vadd.f32 0.0, %v3851
  %v3853 = vpop.f32.mrb[0].mxu0
  %v3854 = vadd.f32 0.0, %v3853
  %v3855 = vpop.f32.mrb[0].mxu0
  %v3856 = vadd.f32 0.0, %v3855
  %v3857 = vpop.f32.mrb[0].mxu0
  %v3858 = vadd.f32 0.0, %v3857
  %3859 = vmatprep.mubr.bf16.mxu0 0
  %3860 = vmatmul.mubr.bf16.gmra.mrb[0].mxu0 %v3756
  %v3861 = vpop.f32.mrb[0].mxu0
  %v3862 = vadd.f32 0.0, %v3861
  %v3863 = vpop.f32.mrb[0].mxu0
  %v3864 = vadd.f32 0.0, %v3863
  %v3865 = vpop.f32.mrb[0].mxu0
  %v3866 = vadd.f32 0.0, %v3865
  %v3867 = vpop.f32.mrb[0].mxu0
  %v3868 = vadd.f32 0.0, %v3867
  %3869 = vmatprep.mubr.bf16.mxu0 0
  %3870 = vmatmul.mubr.bf16.gmra.mrb[0].mxu0 %v3759
  %v3871 = vpop.f32.mrb[0].mxu0
  %v3872 = vadd.f32 0.0, %v3871
  %v3873 = vpop.f32.mrb[0].mxu0
  %v3874 = vadd.f32 0.0, %v3873
  %v3875 = vpop.f32.mrb[0].mxu0
  %v3876 = vadd.f32 0.0, %v3875
  %v3877 = vpop.f32.mrb[0].mxu0
  %v3878 = vadd.f32 0.0, %v3877
  %3879 = vdwg.mxu0
  %v3880 = vadd.f32 %v3550, %v3802
  %v3881 = vadd.f32 %v3551, %v3804
  %v3882 = vadd.f32 %v3552, %v3806
  %v3883 = vadd.f32 %v3553, %v3808
  %v3884 = vadd.f32 %v3554, %v3812
  %v3885 = vadd.f32 %v3555, %v3814
  %v3886 = vadd.f32 %v3556, %v3816
  %v3887 = vadd.f32 %v3557, %v3818
  %v3888 = vadd.f32 %v3558, %v3822
  %v3889 = vadd.f32 %v3559, %v3824
  %v3890 = vadd.f32 %v3560, %v3826
  %v3891 = vadd.f32 %v3561, %v3828
  %v3892 = vadd.f32 %v3562, %v3832
  %v3893 = vadd.f32 %v3563, %v3834
  %v3894 = vadd.f32 %v3564, %v3836
  %v3895 = vadd.f32 %v3565, %v3838
  %v3896 = vadd.f32 %v3566, %v3842
  %v3897 = vadd.f32 %v3567, %v3844
  %v3898 = vadd.f32 %v3568, %v3846
  %v3899 = vadd.f32 %v3569, %v3848
  %v3900 = vadd.f32 %v3570, %v3852
  %v3901 = vadd.f32 %v3571, %v3854
  %v3902 = vadd.f32 %v3572, %v3856
  %v3903 = vadd.f32 %v3573, %v3858
  %v3904 = vadd.f32 %v3574, %v3862
  %v3905 = vadd.f32 %v3575, %v3864
  %v3906 = vadd.f32 %v3576, %v3866
  %v3907 = vadd.f32 %v3577, %v3868
  %v3908 = vadd.f32 %v3578, %v3872
  %v3909 = vadd.f32 %v3579, %v3874
  %v3910 = vadd.f32 %v3580, %v3876
  %v3911 = vadd.f32 %v3581, %v3878
  %s3912 = scalar_lea.vmem [#allocation3], 8
  %v3913 = vld [vmem:[%s3912] ss:$2 sm:$0xff]
  %s3914 = scalar_lea.vmem [#allocation3], 24
  %v3915 = vld [vmem:[%s3914] ss:$2 sm:$0xff]
  %s3916 = scalar_lea.vmem [#allocation3], 40
  %v3917 = vld [vmem:[%s3916] ss:$2 sm:$0xff]
  %s3918 = scalar_lea.vmem [#allocation3], 56
  %v3919 = vld [vmem:[%s3918] ss:$2 sm:$0xff]
  %s3920 = scalar_lea.vmem [#allocation3], 72
  %v3921 = vld [vmem:[%s3920] ss:$2 sm:$0xff]
  %s3922 = scalar_lea.vmem [#allocation3], 88
  %v3923 = vld [vmem:[%s3922] ss:$2 sm:$0xff]
  %s3924 = scalar_lea.vmem [#allocation3], 104
  %v3925 = vld [vmem:[%s3924] ss:$2 sm:$0xff]
  %s3926 = scalar_lea.vmem [#allocation3], 120
  %v3927 = vld [vmem:[%s3926] ss:$2 sm:$0xff]
  %s3928 = scalar_lea.vmem [#allocation3], 136
  %v3929 = vld [vmem:[%s3928] ss:$2 sm:$0xff]
  %s3930 = scalar_lea.vmem [#allocation3], 152
  %v3931 = vld [vmem:[%s3930] ss:$2 sm:$0xff]
  %s3932 = scalar_lea.vmem [#allocation3], 168
  %v3933 = vld [vmem:[%s3932] ss:$2 sm:$0xff]
  %s3934 = scalar_lea.vmem [#allocation3], 184
  %v3935 = vld [vmem:[%s3934] ss:$2 sm:$0xff]
  %s3936 = scalar_lea.vmem [#allocation3], 200
  %v3937 = vld [vmem:[%s3936] ss:$2 sm:$0xff]
  %s3938 = scalar_lea.vmem [#allocation3], 216
  %v3939 = vld [vmem:[%s3938] ss:$2 sm:$0xff]
  %s3940 = scalar_lea.vmem [#allocation3], 232
  %v3941 = vld [vmem:[%s3940] ss:$2 sm:$0xff]
  %s3942 = scalar_lea.vmem [#allocation3], 248
  %v3943 = vld [vmem:[%s3942] ss:$2 sm:$0xff]
  %s3944 = scalar_lea.vmem [#allocation3], 9
  %v3945 = vld [vmem:[%s3944] ss:$2 sm:$0xff]
  %s3946 = scalar_lea.vmem [#allocation3], 25
  %v3947 = vld [vmem:[%s3946] ss:$2 sm:$0xff]
  %s3948 = scalar_lea.vmem [#allocation3], 41
  %v3949 = vld [vmem:[%s3948] ss:$2 sm:$0xff]
  %s3950 = scalar_lea.vmem [#allocation3], 57
  %v3951 = vld [vmem:[%s3950] ss:$2 sm:$0xff]
  %s3952 = scalar_lea.vmem [#allocation3], 73
  %v3953 = vld [vmem:[%s3952] ss:$2 sm:$0xff]
  %s3954 = scalar_lea.vmem [#allocation3], 89
  %v3955 = vld [vmem:[%s3954] ss:$2 sm:$0xff]
  %s3956 = scalar_lea.vmem [#allocation3], 105
  %v3957 = vld [vmem:[%s3956] ss:$2 sm:$0xff]
  %s3958 = scalar_lea.vmem [#allocation3], 121
  %v3959 = vld [vmem:[%s3958] ss:$2 sm:$0xff]
  %s3960 = scalar_lea.vmem [#allocation3], 137
  %v3961 = vld [vmem:[%s3960] ss:$2 sm:$0xff]
  %s3962 = scalar_lea.vmem [#allocation3], 153
  %v3963 = vld [vmem:[%s3962] ss:$2 sm:$0xff]
  %s3964 = scalar_lea.vmem [#allocation3], 169
  %v3965 = vld [vmem:[%s3964] ss:$2 sm:$0xff]
  %s3966 = scalar_lea.vmem [#allocation3], 185
  %v3967 = vld [vmem:[%s3966] ss:$2 sm:$0xff]
  %s3968 = scalar_lea.vmem [#allocation3], 201
  %v3969 = vld [vmem:[%s3968] ss:$2 sm:$0xff]
  %s3970 = scalar_lea.vmem [#allocation3], 217
  %v3971 = vld [vmem:[%s3970] ss:$2 sm:$0xff]
  %s3972 = scalar_lea.vmem [#allocation3], 233
  %v3973 = vld [vmem:[%s3972] ss:$2 sm:$0xff]
  %s3974 = scalar_lea.vmem [#allocation3], 249
  %v3975 = vld [vmem:[%s3974] ss:$2 sm:$0xff]
  %v3976 = vmax.f32 %v3913, %v3945
  %v3977 = vmax.f32 %v3915, %v3947
  %v3978 = vmax.f32 %v3917, %v3949
  %v3979 = vmax.f32 %v3919, %v3951
  %v3980 = vmax.f32 %v3921, %v3953
  %v3981 = vmax.f32 %v3923, %v3955
  %v3982 = vmax.f32 %v3925, %v3957
  %v3983 = vmax.f32 %v3927, %v3959
  %v3984 = vmax.f32 %v3929, %v3961
  %v3985 = vmax.f32 %v3931, %v3963
  %v3986 = vmax.f32 %v3933, %v3965
  %v3987 = vmax.f32 %v3935, %v3967
  %v3988 = vmax.f32 %v3937, %v3969
  %v3989 = vmax.f32 %v3939, %v3971
  %v3990 = vmax.f32 %v3941, %v3973
  %v3991 = vmax.f32 %v3943, %v3975
  %v3992 = vpack.c.bf16 %v3977, %v3976
  %v3993 = vpack.c.bf16 %v3979, %v3978
  %v3994 = vpack.c.bf16 %v3981, %v3980
  %v3995 = vpack.c.bf16 %v3983, %v3982
  %v3996 = vpack.c.bf16 %v3985, %v3984
  %v3997 = vpack.c.bf16 %v3987, %v3986
  %v3998 = vpack.c.bf16 %v3989, %v3988
  %v3999 = vpack.c.bf16 %v3991, %v3990
  %s4000 = scalar_lea.vmem %s3, 352
  %v4001 = vld [vmem:[%s4000] sm:$0xff]
  %v4002 = vld [vmem:[%s4000 + $0x8] sm:$0xff]
  %v4003 = vld [vmem:[%s4000 + $0x10] sm:$0xff]
  %v4004 = vld [vmem:[%s4000 + $0x18] sm:$0xff]
  %v4005 = vld [vmem:[%s4000 + $0x20] sm:$0xff]
  %v4006 = vld [vmem:[%s4000 + $0x28] sm:$0xff]
  %v4007 = vld [vmem:[%s4000 + $0x30] sm:$0xff]
  %v4008 = vld [vmem:[%s4000 + $0x38] sm:$0xff]
  %v4009 = vld [vmem:[%s4000 + $0x40] sm:$0xff]
  %v4010 = vld [vmem:[%s4000 + $0x48] sm:$0xff]
  %v4011 = vld [vmem:[%s4000 + $0x50] sm:$0x33]
  %v4023 = vunpack.c.l.b16 %v4001
  %v4024 = vunpack.c.h.b16 %v4001
  %v4025 = vunpack.c.l.b16 %v4002
  %v4026 = vunpack.c.h.b16 %v4002
  %v4027 = vunpack.c.l.b16 %v4003
  %v4028 = vunpack.c.h.b16 %v4003
  %v4029 = vunpack.c.l.b16 %v4004
  %v4030 = vunpack.c.h.b16 %v4004
  %v4031 = vunpack.c.l.b16 %v4005
  %v4032 = vunpack.c.h.b16 %v4005
  %v4033 = vunpack.c.l.b16 %v4006
  %v4034 = vunpack.c.h.b16 %v4006
  %v4035 = vunpack.c.l.b16 %v4007
  %v4036 = vunpack.c.h.b16 %v4007
  %v4037 = vunpack.c.l.b16 %v4008
  %v4038 = vunpack.c.h.b16 %v4008
  %v4039 = vunpack.c.l.b16 %v4009
  %v4040 = vunpack.c.h.b16 %v4009
  %v4041 = vunpack.c.l.b16 %v4010
  %v4042 = vunpack.c.h.b16 %v4010
  %v4043 = vunpack.c.l.b16 %v4011
  %v4044 = vunpack.c.h.b16 %v4011
  %v4045 = vpack.c.b16 %v4025, %v4023
  %v4046 = vpack.c.b16 %v4026, %v4024
  %v4047 = vpack.c.b16 %v4029, %v4027
  %v4048 = vpack.c.b16 %v4030, %v4028
  %v4049 = vpack.c.b16 %v4033, %v4031
  %v4050 = vpack.c.b16 %v4034, %v4032
  %v4051 = vpack.c.b16 %v4037, %v4035
  %v4052 = vpack.c.b16 %v4038, %v4036
  %v4053 = vpack.c.b16 %v4041, %v4039
  %v4054 = vpack.c.b16 %v4042, %v4040
  %v4055 = vpack.c.b16 %v4043, %v4043
  %v4056 = vpack.c.b16 %v4044, %v4044
  %v4068 = vsel %vm2623, %v3992, 0
  %v4071 = vsel %vm2623, %v3993, 0
  %v4074 = vsel %vm2623, %v3994, 0
  %v4077 = vsel %vm2623, %v3995, 0
  %v4080 = vsel %vm2623, %v3996, 0
  %v4083 = vsel %vm2623, %v3997, 0
  %v4086 = vsel %vm2623, %v3998, 0
  %v4089 = vsel %vm2623, %v3999, 0
  %v4092 = vsel %vm2934, %v4055, 0
  %v4095 = vsel %vm2934, %v4056, 0
  %4097 = vmatprep.subr.bf16.mxu0 %v4046
  %4098 = vmatpush1.bf16.msra.mxu0 %v4045
  %4099 = vmatprep.subr.bf16.mxu0 %v4048
  %4100 = vmatpush1.bf16.msra.mxu0 %v4047
  %4101 = vmatprep.subr.bf16.mxu0 %v4050
  %4102 = vmatpush1.bf16.msra.mxu0 %v4049
  %4103 = vmatprep.subr.bf16.mxu0 %v4052
  %4104 = vmatpush1.bf16.msra.mxu0 %v4051
  %4105 = vmatprep.subr.bf16.mxu0 %v4054
  %4106 = vmatpush1.bf16.msra.mxu0 %v4053
  %4107 = vmatprep.subr.bf16.mxu0 %v4095
  %4108 = vmatpush1.bf16.msra.mxu0 %v4092
  %4109 = vmatprep.subr.bf16.mxu0 0
  %4110 = vmatpush1.bf16.msra.mxu0 0
  %4111 = vmatprep.subr.bf16.mxu0 0
  %4112 = vmatpush1.bf16.msra.mxu0 0
  %4113 = vmatprep.subr.bf16.mxu0 0
  %4114 = vmatpush1.bf16.msra.mxu0 0
  %4115 = vmatprep.subr.bf16.mxu0 0
  %4116 = vmatpush1.bf16.msra.mxu0 0
  %4117 = vmatprep.subr.bf16.mxu0 0
  %4118 = vmatpush1.bf16.msra.mxu0 0
  %4119 = vmatprep.subr.bf16.mxu0 0
  %4120 = vmatpush1.bf16.msra.mxu0 0
  %4121 = vmatprep.subr.bf16.mxu0 0
  %4122 = vmatpush1.bf16.msra.mxu0 0
  %4123 = vmatprep.subr.bf16.mxu0 0
  %4124 = vmatpush1.bf16.msra.mxu0 0
  %4125 = vmatprep.subr.bf16.mxu0 0
  %4126 = vmatpush1.bf16.msra.mxu0 0
  %4127 = vmatprep.subr.bf16.mxu0 0
  %4128 = vmatpush1.bf16.msra.mxu0 0
  %4129 = vmatprep.mubr.bf16.mxu0 0
  %4130 = vmatmul.mubr.bf16.gmra.mrb[0].mxu0 %v4068
  %v4131 = vpop.f32.mrb[0].mxu0
  %v4132 = vadd.f32 0.0, %v4131
  %v4133 = vpop.f32.mrb[0].mxu0
  %v4134 = vadd.f32 0.0, %v4133
  %v4135 = vpop.f32.mrb[0].mxu0
  %v4136 = vadd.f32 0.0, %v4135
  %v4137 = vpop.f32.mrb[0].mxu0
  %v4138 = vadd.f32 0.0, %v4137
  %4139 = vmatprep.mubr.bf16.mxu0 0
  %4140 = vmatmul.mubr.bf16.gmra.mrb[0].mxu0 %v4071
  %v4141 = vpop.f32.mrb[0].mxu0
  %v4142 = vadd.f32 0.0, %v4141
  %v4143 = vpop.f32.mrb[0].mxu0
  %v4144 = vadd.f32 0.0, %v4143
  %v4145 = vpop.f32.mrb[0].mxu0
  %v4146 = vadd.f32 0.0, %v4145
  %v4147 = vpop.f32.mrb[0].mxu0
  %v4148 = vadd.f32 0.0, %v4147
  %4149 = vmatprep.mubr.bf16.mxu0 0
  %4150 = vmatmul.mubr.bf16.gmra.mrb[0].mxu0 %v4074
  %v4151 = vpop.f32.mrb[0].mxu0
  %v4152 = vadd.f32 0.0, %v4151
  %v4153 = vpop.f32.mrb[0].mxu0
  %v4154 = vadd.f32 0.0, %v4153
  %v4155 = vpop.f32.mrb[0].mxu0
  %v4156 = vadd.f32 0.0, %v4155
  %v4157 = vpop.f32.mrb[0].mxu0
  %v4158 = vadd.f32 0.0, %v4157
  %4159 = vmatprep.mubr.bf16.mxu0 0
  %4160 = vmatmul.mubr.bf16.gmra.mrb[0].mxu0 %v4077
  %v4161 = vpop.f32.mrb[0].mxu0
  %v4162 = vadd.f32 0.0, %v4161
  %v4163 = vpop.f32.mrb[0].mxu0
  %v4164 = vadd.f32 0.0, %v4163
  %v4165 = vpop.f32.mrb[0].mxu0
  %v4166 = vadd.f32 0.0, %v4165
  %v4167 = vpop.f32.mrb[0].mxu0
  %v4168 = vadd.f32 0.0, %v4167
  %4169 = vmatprep.mubr.bf16.mxu0 0
  %4170 = vmatmul.mubr.bf16.gmra.mrb[0].mxu0 %v4080
  %v4171 = vpop.f32.mrb[0].mxu0
  %v4172 = vadd.f32 0.0, %v4171
  %v4173 = vpop.f32.mrb[0].mxu0
  %v4174 = vadd.f32 0.0, %v4173
  %v4175 = vpop.f32.mrb[0].mxu0
  %v4176 = vadd.f32 0.0, %v4175
  %v4177 = vpop.f32.mrb[0].mxu0
  %v4178 = vadd.f32 0.0, %v4177
  %4179 = vmatprep.mubr.bf16.mxu0 0
  %4180 = vmatmul.mubr.bf16.gmra.mrb[0].mxu0 %v4083
  %v4181 = vpop.f32.mrb[0].mxu0
  %v4182 = vadd.f32 0.0, %v4181
  %v4183 = vpop.f32.mrb[0].mxu0
  %v4184 = vadd.f32 0.0, %v4183
  %v4185 = vpop.f32.mrb[0].mxu0
  %v4186 = vadd.f32 0.0, %v4185
  %v4187 = vpop.f32.mrb[0].mxu0
  %v4188 = vadd.f32 0.0, %v4187
  %4189 = vmatprep.mubr.bf16.mxu0 0
  %4190 = vmatmul.mubr.bf16.gmra.mrb[0].mxu0 %v4086
  %v4191 = vpop.f32.mrb[0].mxu0
  %v4192 = vadd.f32 0.0, %v4191
  %v4193 = vpop.f32.mrb[0].mxu0
  %v4194 = vadd.f32 0.0, %v4193
  %v4195 = vpop.f32.mrb[0].mxu0
  %v4196 = vadd.f32 0.0, %v4195
  %v4197 = vpop.f32.mrb[0].mxu0
  %v4198 = vadd.f32 0.0, %v4197
  %4199 = vmatprep.mubr.bf16.mxu0 0
  %4200 = vmatmul.mubr.bf16.gmra.mrb[0].mxu0 %v4089
  %v4201 = vpop.f32.mrb[0].mxu0
  %v4202 = vadd.f32 0.0, %v4201
  %v4203 = vpop.f32.mrb[0].mxu0
  %v4204 = vadd.f32 0.0, %v4203
  %v4205 = vpop.f32.mrb[0].mxu0
  %v4206 = vadd.f32 0.0, %v4205
  %v4207 = vpop.f32.mrb[0].mxu0
  %v4208 = vadd.f32 0.0, %v4207
  %4209 = vdwg.mxu0
  %v4210 = vadd.f32 %v3880, %v4132
  %v4211 = vadd.f32 %v3881, %v4134
  %v4212 = vadd.f32 %v3882, %v4136
  %v4213 = vadd.f32 %v3883, %v4138
  %v4214 = vadd.f32 %v3884, %v4142
  %v4215 = vadd.f32 %v3885, %v4144
  %v4216 = vadd.f32 %v3886, %v4146
  %v4217 = vadd.f32 %v3887, %v4148
  %v4218 = vadd.f32 %v3888, %v4152
  %v4219 = vadd.f32 %v3889, %v4154
  %v4220 = vadd.f32 %v3890, %v4156
  %v4221 = vadd.f32 %v3891, %v4158
  %v4222 = vadd.f32 %v3892, %v4162
  %v4223 = vadd.f32 %v3893, %v4164
  %v4224 = vadd.f32 %v3894, %v4166
  %v4225 = vadd.f32 %v3895, %v4168
  %v4226 = vadd.f32 %v3896, %v4172
  %v4227 = vadd.f32 %v3897, %v4174
  %v4228 = vadd.f32 %v3898, %v4176
  %v4229 = vadd.f32 %v3899, %v4178
  %v4230 = vadd.f32 %v3900, %v4182
  %v4231 = vadd.f32 %v3901, %v4184
  %v4232 = vadd.f32 %v3902, %v4186
  %v4233 = vadd.f32 %v3903, %v4188
  %v4234 = vadd.f32 %v3904, %v4192
  %v4235 = vadd.f32 %v3905, %v4194
  %v4236 = vadd.f32 %v3906, %v4196
  %v4237 = vadd.f32 %v3907, %v4198
  %v4238 = vadd.f32 %v3908, %v4202
  %v4239 = vadd.f32 %v3909, %v4204
  %v4240 = vadd.f32 %v3910, %v4206
  %v4241 = vadd.f32 %v3911, %v4208
  %v4242 = vld [vmem:[%s4] sm:$0x3]
  %v4244 = vlaneseq
  %v4245 = vshrl.u32 %v4244, 7
  %v4246 = vsub.s32 0, %v4245
  %v4247 = vrot.slane %v4242, %v4246
  %v4248 = vlaneseq
  %v4249 = vshrl.u32 %v4248, 7
  %v4250 = vsub.s32 1, %v4249
  %v4251 = vrot.slane %v4242, %v4250
  %v4254 = vadd.f32 %v4210, %v4247
  %v4255 = vadd.f32 %v4211, %v4251
  %v4256 = vadd.f32 %v4212, %v4247
  %v4257 = vadd.f32 %v4213, %v4251
  %v4258 = vadd.f32 %v4214, %v4247
  %v4259 = vadd.f32 %v4215, %v4251
  %v4260 = vadd.f32 %v4216, %v4247
  %v4261 = vadd.f32 %v4217, %v4251
  %v4262 = vadd.f32 %v4218, %v4247
  %v4263 = vadd.f32 %v4219, %v4251
  %v4264 = vadd.f32 %v4220, %v4247
  %v4265 = vadd.f32 %v4221, %v4251
  %v4266 = vadd.f32 %v4222, %v4247
  %v4267 = vadd.f32 %v4223, %v4251
  %v4268 = vadd.f32 %v4224, %v4247
  %v4269 = vadd.f32 %v4225, %v4251
  %v4270 = vadd.f32 %v4226, %v4247
  %v4271 = vadd.f32 %v4227, %v4251
  %v4272 = vadd.f32 %v4228, %v4247
  %v4273 = vadd.f32 %v4229, %v4251
  %v4274 = vadd.f32 %v4230, %v4247
  %v4275 = vadd.f32 %v4231, %v4251
  %v4276 = vadd.f32 %v4232, %v4247
  %v4277 = vadd.f32 %v4233, %v4251
  %v4278 = vadd.f32 %v4234, %v4247
  %v4279 = vadd.f32 %v4235, %v4251
  %v4280 = vadd.f32 %v4236, %v4247
  %v4281 = vadd.f32 %v4237, %v4251
  %v4282 = vadd.f32 %v4238, %v4247
  %v4283 = vadd.f32 %v4239, %v4251
  %v4284 = vadd.f32 %v4240, %v4247
  %v4285 = vadd.f32 %v4241, %v4251
  %v4286 = vmax.f32 %v4254, 0.0
  %v4287 = vmax.f32 %v4255, 0.0
  %v4288 = vmax.f32 %v4256, 0.0
  %v4289 = vmax.f32 %v4257, 0.0
  %v4290 = vmax.f32 %v4258, 0.0
  %v4291 = vmax.f32 %v4259, 0.0
  %v4292 = vmax.f32 %v4260, 0.0
  %v4293 = vmax.f32 %v4261, 0.0
  %v4294 = vmax.f32 %v4262, 0.0
  %v4295 = vmax.f32 %v4263, 0.0
  %v4296 = vmax.f32 %v4264, 0.0
  %v4297 = vmax.f32 %v4265, 0.0
  %v4298 = vmax.f32 %v4266, 0.0
  %v4299 = vmax.f32 %v4267, 0.0
  %v4300 = vmax.f32 %v4268, 0.0
  %v4301 = vmax.f32 %v4269, 0.0
  %v4302 = vmax.f32 %v4270, 0.0
  %v4303 = vmax.f32 %v4271, 0.0
  %v4304 = vmax.f32 %v4272, 0.0
  %v4305 = vmax.f32 %v4273, 0.0
  %v4306 = vmax.f32 %v4274, 0.0
  %v4307 = vmax.f32 %v4275, 0.0
  %v4308 = vmax.f32 %v4276, 0.0
  %v4309 = vmax.f32 %v4277, 0.0
  %v4310 = vmax.f32 %v4278, 0.0
  %v4311 = vmax.f32 %v4279, 0.0
  %v4312 = vmax.f32 %v4280, 0.0
  %v4313 = vmax.f32 %v4281, 0.0
  %v4314 = vmax.f32 %v4282, 0.0
  %v4315 = vmax.f32 %v4283, 0.0
  %v4316 = vmax.f32 %v4284, 0.0
  %v4317 = vmax.f32 %v4285, 0.0
  %v4318 = vpack.c.bf16 %v4288, %v4286
  %v4319 = vpack.c.bf16 %v4289, %v4287
  %v4320 = vpack.c.bf16 %v4292, %v4290
  %v4321 = vpack.c.bf16 %v4293, %v4291
  %v4322 = vpack.c.bf16 %v4296, %v4294
  %v4323 = vpack.c.bf16 %v4297, %v4295
  %v4324 = vpack.c.bf16 %v4300, %v4298
  %v4325 = vpack.c.bf16 %v4301, %v4299
  %v4326 = vpack.c.bf16 %v4304, %v4302
  %v4327 = vpack.c.bf16 %v4305, %v4303
  %v4328 = vpack.c.bf16 %v4308, %v4306
  %v4329 = vpack.c.bf16 %v4309, %v4307
  %v4330 = vpack.c.bf16 %v4312, %v4310
  %v4331 = vpack.c.bf16 %v4313, %v4311
  %v4332 = vpack.c.bf16 %v4316, %v4314
  %v4333 = vpack.c.bf16 %v4317, %v4315
  %v4334 = vld [vmem:[%s6] sm:$0xf]
  %v4335 = vld [vmem:[%s6 + $0x4] sm:$0xf]
  %v4336 = vld [vmem:[%s6 + $0x8] sm:$0xf]
  %v4337 = vld [vmem:[%s6 + $0xc] sm:$0xf]
  %v4338 = vld [vmem:[%s6 + $0x10] sm:$0xf]
  %v4339 = vld [vmem:[%s6 + $0x14] sm:$0xf]
  %v4340 = vld [vmem:[%s6 + $0x18] sm:$0xf]
  %v4341 = vld [vmem:[%s6 + $0x1c] sm:$0xf]
  %v4342 = vld [vmem:[%s6 + $0x20] sm:$0xf]
  %v4343 = vld [vmem:[%s6 + $0x24] sm:$0xf]
  %v4344 = vld [vmem:[%s6 + $0x28] sm:$0xf]
  %v4345 = vld [vmem:[%s6 + $0x2c] sm:$0xf]
  %v4346 = vld [vmem:[%s6 + $0x30] sm:$0xf]
  %v4347 = vld [vmem:[%s6 + $0x34] sm:$0xf]
  %v4348 = vld [vmem:[%s6 + $0x38] sm:$0xf]
  %v4349 = vld [vmem:[%s6 + $0x3c] sm:$0xf]
  %v4350 = vld [vmem:[%s6 + $0x40] sm:$0xf]
  %v4351 = vld [vmem:[%s6 + $0x44] sm:$0xf]
  %v4352 = vld [vmem:[%s6 + $0x48] sm:$0xf]
  %v4353 = vld [vmem:[%s6 + $0x4c] sm:$0xf]
  %v4374 = vunpack.c.l.b16 %v4334
  %v4375 = vunpack.c.l.b16 %v4335
  %v4376 = vunpack.c.l.b16 %v4336
  %v4377 = vunpack.c.l.b16 %v4337
  %v4378 = vunpack.c.l.b16 %v4338
  %v4379 = vunpack.c.l.b16 %v4339
  %v4380 = vunpack.c.l.b16 %v4340
  %v4381 = vunpack.c.l.b16 %v4341
  %v4382 = vunpack.c.l.b16 %v4342
  %v4383 = vunpack.c.l.b16 %v4343
  %v4384 = vunpack.c.l.b16 %v4344
  %v4385 = vunpack.c.l.b16 %v4345
  %v4386 = vunpack.c.l.b16 %v4346
  %v4387 = vunpack.c.l.b16 %v4347
  %v4388 = vunpack.c.l.b16 %v4348
  %v4389 = vunpack.c.l.b16 %v4349
  %v4390 = vunpack.c.l.b16 %v4350
  %v4391 = vunpack.c.l.b16 %v4351
  %v4392 = vunpack.c.l.b16 %v4352
  %v4393 = vunpack.c.l.b16 %v4353
  %v4394 = vpack.c.b16 %v4375, %v4374
  %v4395 = vpack.c.b16 %v4377, %v4376
  %v4396 = vpack.c.b16 %v4379, %v4378
  %v4397 = vpack.c.b16 %v4381, %v4380
  %v4398 = vpack.c.b16 %v4383, %v4382
  %v4399 = vpack.c.b16 %v4385, %v4384
  %v4400 = vpack.c.b16 %v4387, %v4386
  %v4401 = vpack.c.b16 %v4389, %v4388
  %v4402 = vpack.c.b16 %v4391, %v4390
  %v4403 = vpack.c.b16 %v4393, %v4392
  %v4415 = vsel %vm77, %v4319, 0
  %v4418 = vsel %vm77, %v4321, 0
  %v4421 = vsel %vm77, %v4323, 0
  %v4424 = vsel %vm77, %v4325, 0
  %v4427 = vsel %vm77, %v4327, 0
  %v4430 = vsel %vm77, %v4329, 0
  %v4433 = vsel %vm77, %v4331, 0
  %v4436 = vsel %vm77, %v4333, 0
  %4438 = vmatprep.subr.bf16.mxu0 0
  %4439 = vmatpush1.bf16.msra.mxu0 %v4394
  %4440 = vmatprep.subr.bf16.mxu0 0
  %4441 = vmatpush1.bf16.msra.mxu0 %v4395
  %4442 = vmatprep.subr.bf16.mxu0 0
  %4443 = vmatpush1.bf16.msra.mxu0 %v4396
  %4444 = vmatprep.subr.bf16.mxu0 0
  %4445 = vmatpush1.bf16.msra.mxu0 %v4397
  %4446 = vmatprep.subr.bf16.mxu0 0
  %4447 = vmatpush1.bf16.msra.mxu0 %v4398
  %4448 = vmatprep.subr.bf16.mxu0 0
  %4449 = vmatpush1.bf16.msra.mxu0 %v4399
  %4450 = vmatprep.subr.bf16.mxu0 0
  %4451 = vmatpush1.bf16.msra.mxu0 %v4400
  %4452 = vmatprep.subr.bf16.mxu0 0
  %4453 = vmatpush1.bf16.msra.mxu0 %v4401
  %4454 = vmatprep.subr.bf16.mxu0 0
  %4455 = vmatpush1.bf16.msra.mxu0 %v4402
  %4456 = vmatprep.subr.bf16.mxu0 0
  %4457 = vmatpush1.bf16.msra.mxu0 %v4403
  %4458 = vmatprep.subr.bf16.mxu0 0
  %4459 = vmatpush1.bf16.msra.mxu0 0
  %4460 = vmatprep.subr.bf16.mxu0 0
  %4461 = vmatpush1.bf16.msra.mxu0 0
  %4462 = vmatprep.subr.bf16.mxu0 0
  %4463 = vmatpush1.bf16.msra.mxu0 0
  %4464 = vmatprep.subr.bf16.mxu0 0
  %4465 = vmatpush1.bf16.msra.mxu0 0
  %4466 = vmatprep.subr.bf16.mxu0 0
  %4467 = vmatpush1.bf16.msra.mxu0 0
  %4468 = vmatprep.subr.bf16.mxu0 0
  %4469 = vmatpush1.bf16.msra.mxu0 0
  %4470 = vmatprep.mubr.bf16.mxu0 %v4415
  %4471 = vmatmul.mubr.bf16.gmra.mrb[0].mxu0 %v4318
  %v4472 = vpop.f32.mrb[0].mxu0
  %v4473 = vadd.f32 0.0, %v4472
  %v4474 = vpop.f32.mrb[0].mxu0
  %v4475 = vpop.f32.mrb[0].mxu0
  %v4476 = vadd.f32 0.0, %v4475
  %v4477 = vpop.f32.mrb[0].mxu0
  %4478 = vmatprep.mubr.bf16.mxu0 %v4418
  %4479 = vmatmul.mubr.bf16.gmra.mrb[0].mxu0 %v4320
  %v4480 = vpop.f32.mrb[0].mxu0
  %v4481 = vadd.f32 0.0, %v4480
  %v4482 = vpop.f32.mrb[0].mxu0
  %v4483 = vpop.f32.mrb[0].mxu0
  %v4484 = vadd.f32 0.0, %v4483
  %v4485 = vpop.f32.mrb[0].mxu0
  %4486 = vmatprep.mubr.bf16.mxu0 %v4421
  %4487 = vmatmul.mubr.bf16.gmra.mrb[0].mxu0 %v4322
  %v4488 = vpop.f32.mrb[0].mxu0
  %v4489 = vadd.f32 0.0, %v4488
  %v4490 = vpop.f32.mrb[0].mxu0
  %v4491 = vpop.f32.mrb[0].mxu0
  %v4492 = vadd.f32 0.0, %v4491
  %v4493 = vpop.f32.mrb[0].mxu0
  %4494 = vmatprep.mubr.bf16.mxu0 %v4424
  %4495 = vmatmul.mubr.bf16.gmra.mrb[0].mxu0 %v4324
  %v4496 = vpop.f32.mrb[0].mxu0
  %v4497 = vadd.f32 0.0, %v4496
  %v4498 = vpop.f32.mrb[0].mxu0
  %v4499 = vpop.f32.mrb[0].mxu0
  %v4500 = vadd.f32 0.0, %v4499
  %v4501 = vpop.f32.mrb[0].mxu0
  %4502 = vmatprep.mubr.bf16.mxu0 %v4427
  %4503 = vmatmul.mubr.bf16.gmra.mrb[0].mxu0 %v4326
  %v4504 = vpop.f32.mrb[0].mxu0
  %v4505 = vadd.f32 0.0, %v4504
  %v4506 = vpop.f32.mrb[0].mxu0
  %v4507 = vpop.f32.mrb[0].mxu0
  %v4508 = vadd.f32 0.0, %v4507
  %v4509 = vpop.f32.mrb[0].mxu0
  %4510 = vmatprep.mubr.bf16.mxu0 %v4430
  %4511 = vmatmul.mubr.bf16.gmra.mrb[0].mxu0 %v4328
  %v4512 = vpop.f32.mrb[0].mxu0
  %v4513 = vadd.f32 0.0, %v4512
  %v4514 = vpop.f32.mrb[0].mxu0
  %v4515 = vpop.f32.mrb[0].mxu0
  %v4516 = vadd.f32 0.0, %v4515
  %v4517 = vpop.f32.mrb[0].mxu0
  %4518 = vmatprep.mubr.bf16.mxu0 %v4433
  %4519 = vmatmul.mubr.bf16.gmra.mrb[0].mxu0 %v4330
  %v4520 = vpop.f32.mrb[0].mxu0
  %v4521 = vadd.f32 0.0, %v4520
  %v4522 = vpop.f32.mrb[0].mxu0
  %v4523 = vpop.f32.mrb[0].mxu0
  %v4524 = vadd.f32 0.0, %v4523
  %v4525 = vpop.f32.mrb[0].mxu0
  %4526 = vmatprep.mubr.bf16.mxu0 %v4436
  %4527 = vmatmul.mubr.bf16.gmra.mrb[0].mxu0 %v4332
  %v4528 = vpop.f32.mrb[0].mxu0
  %v4529 = vadd.f32 0.0, %v4528
  %v4530 = vpop.f32.mrb[0].mxu0
  %v4531 = vpop.f32.mrb[0].mxu0
  %v4532 = vadd.f32 0.0, %v4531
  %v4533 = vpop.f32.mrb[0].mxu0
  %4534 = vdwg.mxu0
  %s4535 = scalar_lea.vmem %s6, 80
  %v4536 = vld [vmem:[%s4535] sm:$0xf]
  %v4537 = vld [vmem:[%s4535 + $0x4] sm:$0xf]
  %v4538 = vld [vmem:[%s4535 + $0x8] sm:$0xf]
  %v4539 = vld [vmem:[%s4535 + $0xc] sm:$0xf]
  %v4540 = vld [vmem:[%s4535 + $0x10] sm:$0xf]
  %v4541 = vld [vmem:[%s4535 + $0x14] sm:$0xf]
  %v4542 = vld [vmem:[%s4535 + $0x18] sm:$0xf]
  %v4543 = vld [vmem:[%s4535 + $0x1c] sm:$0xf]
  %v4544 = vld [vmem:[%s4535 + $0x20] sm:$0xf]
  %v4545 = vld [vmem:[%s4535 + $0x24] sm:$0xf]
  %v4546 = vld [vmem:[%s4535 + $0x28] sm:$0xf]
  %v4547 = vld [vmem:[%s4535 + $0x2c] sm:$0xf]
  %v4548 = vld [vmem:[%s4535 + $0x30] sm:$0xf]
  %v4549 = vld [vmem:[%s4535 + $0x34] sm:$0xf]
  %v4550 = vld [vmem:[%s4535 + $0x38] sm:$0xf]
  %v4551 = vld [vmem:[%s4535 + $0x3c] sm:$0xf]
  %v4552 = vld [vmem:[%s4535 + $0x40] sm:$0xf]
  %v4553 = vld [vmem:[%s4535 + $0x44] sm:$0xf]
  %v4554 = vld [vmem:[%s4535 + $0x48] sm:$0xf]
  %v4555 = vld [vmem:[%s4535 + $0x4c] sm:$0xf]
  %v4576 = vunpack.c.l.b16 %v4536
  %v4577 = vunpack.c.l.b16 %v4537
  %v4578 = vunpack.c.l.b16 %v4538
  %v4579 = vunpack.c.l.b16 %v4539
  %v4580 = vunpack.c.l.b16 %v4540
  %v4581 = vunpack.c.l.b16 %v4541
  %v4582 = vunpack.c.l.b16 %v4542
  %v4583 = vunpack.c.l.b16 %v4543
  %v4584 = vunpack.c.l.b16 %v4544
  %v4585 = vunpack.c.l.b16 %v4545
  %v4586 = vunpack.c.l.b16 %v4546
  %v4587 = vunpack.c.l.b16 %v4547
  %v4588 = vunpack.c.l.b16 %v4548
  %v4589 = vunpack.c.l.b16 %v4549
  %v4590 = vunpack.c.l.b16 %v4550
  %v4591 = vunpack.c.l.b16 %v4551
  %v4592 = vunpack.c.l.b16 %v4552
  %v4593 = vunpack.c.l.b16 %v4553
  %v4594 = vunpack.c.l.b16 %v4554
  %v4595 = vunpack.c.l.b16 %v4555
  %v4596 = vpack.c.b16 %v4577, %v4576
  %v4597 = vpack.c.b16 %v4579, %v4578
  %v4598 = vpack.c.b16 %v4581, %v4580
  %v4599 = vpack.c.b16 %v4583, %v4582
  %v4600 = vpack.c.b16 %v4585, %v4584
  %v4601 = vpack.c.b16 %v4587, %v4586
  %v4602 = vpack.c.b16 %v4589, %v4588
  %v4603 = vpack.c.b16 %v4591, %v4590
  %v4604 = vpack.c.b16 %v4593, %v4592
  %v4605 = vpack.c.b16 %v4595, %v4594
  %4616 = vmatprep.subr.bf16.mxu0 0
  %4617 = vmatpush1.bf16.msra.mxu0 %v4596
  %4618 = vmatprep.subr.bf16.mxu0 0
  %4619 = vmatpush1.bf16.msra.mxu0 %v4597
  %4620 = vmatprep.subr.bf16.mxu0 0
  %4621 = vmatpush1.bf16.msra.mxu0 %v4598
  %4622 = vmatprep.subr.bf16.mxu0 0
  %4623 = vmatpush1.bf16.msra.mxu0 %v4599
  %4624 = vmatprep.subr.bf16.mxu0 0
  %4625 = vmatpush1.bf16.msra.mxu0 %v4600
  %4626 = vmatprep.subr.bf16.mxu0 0
  %4627 = vmatpush1.bf16.msra.mxu0 %v4601
  %4628 = vmatprep.subr.bf16.mxu0 0
  %4629 = vmatpush1.bf16.msra.mxu0 %v4602
  %4630 = vmatprep.subr.bf16.mxu0 0
  %4631 = vmatpush1.bf16.msra.mxu0 %v4603
  %4632 = vmatprep.subr.bf16.mxu0 0
  %4633 = vmatpush1.bf16.msra.mxu0 %v4604
  %4634 = vmatprep.subr.bf16.mxu0 0
  %4635 = vmatpush1.bf16.msra.mxu0 %v4605
  %4636 = vmatprep.subr.bf16.mxu0 0
  %4637 = vmatpush1.bf16.msra.mxu0 0
  %4638 = vmatprep.subr.bf16.mxu0 0
  %4639 = vmatpush1.bf16.msra.mxu0 0
  %4640 = vmatprep.subr.bf16.mxu0 0
  %4641 = vmatpush1.bf16.msra.mxu0 0
  %4642 = vmatprep.subr.bf16.mxu0 0
  %4643 = vmatpush1.bf16.msra.mxu0 0
  %4644 = vmatprep.subr.bf16.mxu0 0
  %4645 = vmatpush1.bf16.msra.mxu0 0
  %4646 = vmatprep.subr.bf16.mxu0 0
  %4647 = vmatpush1.bf16.msra.mxu0 0
  %4648 = vmatprep.mubr.bf16.mxu0 %v4415
  %4649 = vmatmul.mubr.bf16.gmra.mrb[0].mxu0 %v4318
  %v4650 = vpop.f32.mrb[0].mxu0
  %v4651 = vadd.f32 0.0, %v4650
  %v4652 = vpop.f32.mrb[0].mxu0
  %v4653 = vpop.f32.mrb[0].mxu0
  %v4654 = vadd.f32 0.0, %v4653
  %v4655 = vpop.f32.mrb[0].mxu0
  %4656 = vmatprep.mubr.bf16.mxu0 %v4418
  %4657 = vmatmul.mubr.bf16.gmra.mrb[0].mxu0 %v4320
  %v4658 = vpop.f32.mrb[0].mxu0
  %v4659 = vadd.f32 0.0, %v4658
  %v4660 = vpop.f32.mrb[0].mxu0
  %v4661 = vpop.f32.mrb[0].mxu0
  %v4662 = vadd.f32 0.0, %v4661
  %v4663 = vpop.f32.mrb[0].mxu0
  %4664 = vmatprep.mubr.bf16.mxu0 %v4421
  %4665 = vmatmul.mubr.bf16.gmra.mrb[0].mxu0 %v4322
  %v4666 = vpop.f32.mrb[0].mxu0
  %v4667 = vadd.f32 0.0, %v4666
  %v4668 = vpop.f32.mrb[0].mxu0
  %v4669 = vpop.f32.mrb[0].mxu0
  %v4670 = vadd.f32 0.0, %v4669
  %v4671 = vpop.f32.mrb[0].mxu0
  %4672 = vmatprep.mubr.bf16.mxu0 %v4424
  %4673 = vmatmul.mubr.bf16.gmra.mrb[0].mxu0 %v4324
  %v4674 = vpop.f32.mrb[0].mxu0
  %v4675 = vadd.f32 0.0, %v4674
  %v4676 = vpop.f32.mrb[0].mxu0
  %v4677 = vpop.f32.mrb[0].mxu0
  %v4678 = vadd.f32 0.0, %v4677
  %v4679 = vpop.f32.mrb[0].mxu0
  %4680 = vmatprep.mubr.bf16.mxu0 %v4427
  %4681 = vmatmul.mubr.bf16.gmra.mrb[0].mxu0 %v4326
  %v4682 = vpop.f32.mrb[0].mxu0
  %v4683 = vadd.f32 0.0, %v4682
  %v4684 = vpop.f32.mrb[0].mxu0
  %v4685 = vpop.f32.mrb[0].mxu0
  %v4686 = vadd.f32 0.0, %v4685
  %v4687 = vpop.f32.mrb[0].mxu0
  %4688 = vmatprep.mubr.bf16.mxu0 %v4430
  %4689 = vmatmul.mubr.bf16.gmra.mrb[0].mxu0 %v4328
  %v4690 = vpop.f32.mrb[0].mxu0
  %v4691 = vadd.f32 0.0, %v4690
  %v4692 = vpop.f32.mrb[0].mxu0
  %v4693 = vpop.f32.mrb[0].mxu0
  %v4694 = vadd.f32 0.0, %v4693
  %v4695 = vpop.f32.mrb[0].mxu0
  %4696 = vmatprep.mubr.bf16.mxu0 %v4433
  %4697 = vmatmul.mubr.bf16.gmra.mrb[0].mxu0 %v4330
  %v4698 = vpop.f32.mrb[0].mxu0
  %v4699 = vadd.f32 0.0, %v4698
  %v4700 = vpop.f32.mrb[0].mxu0
  %v4701 = vpop.f32.mrb[0].mxu0
  %v4702 = vadd.f32 0.0, %v4701
  %v4703 = vpop.f32.mrb[0].mxu0
  %4704 = vmatprep.mubr.bf16.mxu0 %v4436
  %4705 = vmatmul.mubr.bf16.gmra.mrb[0].mxu0 %v4332
  %v4706 = vpop.f32.mrb[0].mxu0
  %v4707 = vadd.f32 0.0, %v4706
  %v4708 = vpop.f32.mrb[0].mxu0
  %v4709 = vpop.f32.mrb[0].mxu0
  %v4710 = vadd.f32 0.0, %v4709
  %v4711 = vpop.f32.mrb[0].mxu0
  %4712 = vdwg.mxu0
  %v4713 = vmax.f32 %v4473, %v4651
  %v4714 = vmax.f32 %v4476, %v4654
  %v4715 = vmax.f32 %v4481, %v4659
  %v4716 = vmax.f32 %v4484, %v4662
  %v4717 = vmax.f32 %v4489, %v4667
  %v4718 = vmax.f32 %v4492, %v4670
  %v4719 = vmax.f32 %v4497, %v4675
  %v4720 = vmax.f32 %v4500, %v4678
  %v4721 = vmax.f32 %v4505, %v4683
  %v4722 = vmax.f32 %v4508, %v4686
  %v4723 = vmax.f32 %v4513, %v4691
  %v4724 = vmax.f32 %v4516, %v4694
  %v4725 = vmax.f32 %v4521, %v4699
  %v4726 = vmax.f32 %v4524, %v4702
  %v4727 = vmax.f32 %v4529, %v4707
  %v4728 = vmax.f32 %v4532, %v4710
  %vm4729 = vcmask 654336
  %4730 = vst.msk [vmem:[#allocation4] sm:$0xff] %vm4729, %v4713
  %4731 = vst.msk [vmem:[#allocation4 + $0x8] sm:$0xff] %vm4729, %v4714
  %4732 = vst.msk [vmem:[#allocation4 + $0x10] sm:$0xff] %vm4729, %v4715
  %4733 = vst.msk [vmem:[#allocation4 + $0x18] sm:$0xff] %vm4729, %v4716
  %4734 = vst.msk [vmem:[#allocation4 + $0x20] sm:$0xff] %vm4729, %v4717
  %4735 = vst.msk [vmem:[#allocation4 + $0x28] sm:$0xff] %vm4729, %v4718
  %4736 = vst.msk [vmem:[#allocation4 + $0x30] sm:$0xff] %vm4729, %v4719
  %4737 = vst.msk [vmem:[#allocation4 + $0x38] sm:$0xff] %vm4729, %v4720
  %4738 = vst.msk [vmem:[#allocation4 + $0x40] sm:$0xff] %vm4729, %v4721
  %4739 = vst.msk [vmem:[#allocation4 + $0x48] sm:$0xff] %vm4729, %v4722
  %4740 = vst.msk [vmem:[#allocation4 + $0x50] sm:$0xff] %vm4729, %v4723
  %4741 = vst.msk [vmem:[#allocation4 + $0x58] sm:$0xff] %vm4729, %v4724
  %4742 = vst.msk [vmem:[#allocation4 + $0x60] sm:$0xff] %vm4729, %v4725
  %4743 = vst.msk [vmem:[#allocation4 + $0x68] sm:$0xff] %vm4729, %v4726
  %4744 = vst.msk [vmem:[#allocation4 + $0x70] sm:$0xff] %vm4729, %v4727
  %4745 = vst.msk [vmem:[#allocation4 + $0x78] sm:$0xff] %vm4729, %v4728
  %v4746 = vld [vmem:[#allocation4] ss:$16 sm:$0x3]
  %v4747 = vld [vmem:[#allocation4] ss:$16 sm:$0xc]
  %v4748 = vor.u32 %v4746, %v4747
  %v4749 = vld [vmem:[#allocation4] ss:$16 sm:$0x30]
  %v4750 = vor.u32 %v4748, %v4749
  %v4751 = vld [vmem:[#allocation4] ss:$16 sm:$0xc0]
  %v4752 = vor.u32 %v4750, %v4751
  %s4753 = scalar_lea.vmem [#allocation4], 1
  %v4754 = vld [vmem:[%s4753] ss:$16 sm:$0x3]
  %v4755 = vld [vmem:[%s4753] ss:$16 sm:$0xc]
  %v4756 = vor.u32 %v4754, %v4755
  %v4757 = vld [vmem:[%s4753] ss:$16 sm:$0x30]
  %v4758 = vor.u32 %v4756, %v4757
  %v4759 = vld [vmem:[%s4753] ss:$16 sm:$0xc0]
  %v4760 = vor.u32 %v4758, %v4759
  %v4761 = vmax.f32 %v4752, %v4760
  %v4762 = vpack.c.bf16 %v4761, %v4761
  %v4763 = vld [vmem:[%s7] sm:$0xf]
  %v4764 = vld [vmem:[%s7 + $0x4] sm:$0xf]
  %v4765 = vld [vmem:[%s7 + $0x8] sm:$0xf]
  %v4766 = vld [vmem:[%s7 + $0xc] sm:$0xf]
  %v4767 = vld [vmem:[%s7 + $0x10] sm:$0xf]
  %v4768 = vld [vmem:[%s7 + $0x14] sm:$0xf]
  %v4769 = vld [vmem:[%s7 + $0x18] sm:$0xf]
  %v4770 = vld [vmem:[%s7 + $0x1c] sm:$0xf]
  %v4771 = vld [vmem:[%s7 + $0x20] sm:$0xf]
  %v4772 = vld [vmem:[%s7 + $0x24] sm:$0xf]
  %s4773 = scalar_lea.vmem [#allocation4], 2
  %v4774 = vld [vmem:[%s4773] ss:$16 sm:$0x3]
  %v4775 = vld [vmem:[%s4773] ss:$16 sm:$0xc]
  %v4776 = vor.u32 %v4774, %v4775
  %v4777 = vld [vmem:[%s4773] ss:$16 sm:$0x30]
  %v4778 = vor.u32 %v4776, %v4777
  %v4779 = vld [vmem:[%s4773] ss:$16 sm:$0xc0]
  %v4780 = vor.u32 %v4778, %v4779
  %s4781 = scalar_lea.vmem [#allocation4], 3
  %v4782 = vld [vmem:[%s4781] ss:$16 sm:$0x3]
  %v4783 = vld [vmem:[%s4781] ss:$16 sm:$0xc]
  %v4784 = vor.u32 %v4782, %v4783
  %v4785 = vld [vmem:[%s4781] ss:$16 sm:$0x30]
  %v4786 = vor.u32 %v4784, %v4785
  %v4787 = vld [vmem:[%s4781] ss:$16 sm:$0xc0]
  %v4788 = vor.u32 %v4786, %v4787
  %v4789 = vmax.f32 %v4780, %v4788
  %v4790 = vpack.c.bf16 %v4789, %v4789
  %s4791 = scalar_lea.vmem %s7, 40
  %v4792 = vld [vmem:[%s4791] sm:$0xf]
  %v4793 = vld [vmem:[%s4791 + $0x4] sm:$0xf]
  %v4794 = vld [vmem:[%s4791 + $0x8] sm:$0xf]
  %v4795 = vld [vmem:[%s4791 + $0xc] sm:$0xf]
  %v4796 = vld [vmem:[%s4791 + $0x10] sm:$0xf]
  %v4797 = vld [vmem:[%s4791 + $0x14] sm:$0xf]
  %v4798 = vld [vmem:[%s4791 + $0x18] sm:$0xf]
  %v4799 = vld [vmem:[%s4791 + $0x1c] sm:$0xf]
  %v4800 = vld [vmem:[%s4791 + $0x20] sm:$0xf]
  %v4801 = vld [vmem:[%s4791 + $0x24] sm:$0xf]
  %v4812 = vunpack.c.l.b16 %v4792
  %v4813 = vunpack.c.l.b16 %v4793
  %v4814 = vunpack.c.l.b16 %v4794
  %v4815 = vunpack.c.l.b16 %v4795
  %v4816 = vunpack.c.l.b16 %v4796
  %v4817 = vunpack.c.l.b16 %v4797
  %v4818 = vunpack.c.l.b16 %v4798
  %v4819 = vunpack.c.l.b16 %v4799
  %v4820 = vunpack.c.l.b16 %v4800
  %v4821 = vunpack.c.l.b16 %v4801
  %v4822 = vpack.c.b16 %v4813, %v4812
  %v4823 = vpack.c.b16 %v4815, %v4814
  %v4824 = vpack.c.b16 %v4817, %v4816
  %v4825 = vpack.c.b16 %v4819, %v4818
  %v4826 = vpack.c.b16 %v4821, %v4820
  %v4833 = vsel %vm4729, %v4790, 0
  %4835 = vmatprep.subr.bf16.mxu0 0
  %4836 = vmatpush1.bf16.msra.mxu0 %v4822
  %4837 = vmatprep.subr.bf16.mxu0 0
  %4838 = vmatpush1.bf16.msra.mxu0 %v4823
  %4839 = vmatprep.subr.bf16.mxu0 0
  %4840 = vmatpush1.bf16.msra.mxu0 %v4824
  %4841 = vmatprep.subr.bf16.mxu0 0
  %4842 = vmatpush1.bf16.msra.mxu0 %v4825
  %4843 = vmatprep.subr.bf16.mxu0 0
  %4844 = vmatpush1.bf16.msra.mxu0 %v4826
  %4845 = vmatprep.subr.bf16.mxu0 0
  %4846 = vmatpush1.bf16.msra.mxu0 0
  %4847 = vmatprep.subr.bf16.mxu0 0
  %4848 = vmatpush1.bf16.msra.mxu0 0
  %4849 = vmatprep.subr.bf16.mxu0 0
  %4850 = vmatpush1.bf16.msra.mxu0 0
  %4851 = vmatprep.subr.bf16.mxu0 0
  %4852 = vmatpush1.bf16.msra.mxu0 0
  %4853 = vmatprep.subr.bf16.mxu0 0
  %4854 = vmatpush1.bf16.msra.mxu0 0
  %4855 = vmatprep.subr.bf16.mxu0 0
  %4856 = vmatpush1.bf16.msra.mxu0 0
  %4857 = vmatprep.subr.bf16.mxu0 0
  %4858 = vmatpush1.bf16.msra.mxu0 0
  %4859 = vmatprep.subr.bf16.mxu0 0
  %4860 = vmatpush1.bf16.msra.mxu0 0
  %4861 = vmatprep.subr.bf16.mxu0 0
  %4862 = vmatpush1.bf16.msra.mxu0 0
  %4863 = vmatprep.subr.bf16.mxu0 0
  %4864 = vmatpush1.bf16.msra.mxu0 0
  %4865 = vmatprep.subr.bf16.mxu0 0
  %4866 = vmatpush1.bf16.msra.mxu0 0
  %4867 = vmatprep.mubr.bf16.mxu0 0
  %4868 = vmatmul.mubr.bf16.gmra.mrb[0].mxu0 %v4833
  %v4869 = vpop.f32.mrb[0].mxu0
  %v4870 = vadd.f32 0.0, %v4869
  %v4871 = vpop.f32.mrb[0].mxu0
  %v4872 = vpop.f32.mrb[0].mxu0
  %v4873 = vpop.f32.mrb[0].mxu0
  %4874 = vdwg.mxu0
  %v4885 = vunpack.c.l.b16 %v4763
  %v4886 = vunpack.c.l.b16 %v4764
  %v4887 = vunpack.c.l.b16 %v4765
  %v4888 = vunpack.c.l.b16 %v4766
  %v4889 = vunpack.c.l.b16 %v4767
  %v4890 = vunpack.c.l.b16 %v4768
  %v4891 = vunpack.c.l.b16 %v4769
  %v4892 = vunpack.c.l.b16 %v4770
  %v4893 = vunpack.c.l.b16 %v4771
  %v4894 = vunpack.c.l.b16 %v4772
  %v4895 = vpack.c.b16 %v4886, %v4885
  %v4896 = vpack.c.b16 %v4888, %v4887
  %v4897 = vpack.c.b16 %v4890, %v4889
  %v4898 = vpack.c.b16 %v4892, %v4891
  %v4899 = vpack.c.b16 %v4894, %v4893
  %v4906 = vsel %vm4729, %v4762, 0
  %4908 = vmatprep.subr.bf16.mxu0 0
  %4909 = vmatpush1.bf16.msra.mxu0 %v4895
  %4910 = vmatprep.subr.bf16.mxu0 0
  %4911 = vmatpush1.bf16.msra.mxu0 %v4896
  %4912 = vmatprep.subr.bf16.mxu0 0
  %4913 = vmatpush1.bf16.msra.mxu0 %v4897
  %4914 = vmatprep.subr.bf16.mxu0 0
  %4915 = vmatpush1.bf16.msra.mxu0 %v4898
  %4916 = vmatprep.subr.bf16.mxu0 0
  %4917 = vmatpush1.bf16.msra.mxu0 %v4899
  %4918 = vmatprep.subr.bf16.mxu0 0
  %4919 = vmatpush1.bf16.msra.mxu0 0
  %4920 = vmatprep.subr.bf16.mxu0 0
  %4921 = vmatpush1.bf16.msra.mxu0 0
  %4922 = vmatprep.subr.bf16.mxu0 0
  %4923 = vmatpush1.bf16.msra.mxu0 0
  %4924 = vmatprep.subr.bf16.mxu0 0
  %4925 = vmatpush1.bf16.msra.mxu0 0
  %4926 = vmatprep.subr.bf16.mxu0 0
  %4927 = vmatpush1.bf16.msra.mxu0 0
  %4928 = vmatprep.subr.bf16.mxu0 0
  %4929 = vmatpush1.bf16.msra.mxu0 0
  %4930 = vmatprep.subr.bf16.mxu0 0
  %4931 = vmatpush1.bf16.msra.mxu0 0
  %4932 = vmatprep.subr.bf16.mxu0 0
  %4933 = vmatpush1.bf16.msra.mxu0 0
  %4934 = vmatprep.subr.bf16.mxu0 0
  %4935 = vmatpush1.bf16.msra.mxu0 0
  %4936 = vmatprep.subr.bf16.mxu0 0
  %4937 = vmatpush1.bf16.msra.mxu0 0
  %4938 = vmatprep.subr.bf16.mxu0 0
  %4939 = vmatpush1.bf16.msra.mxu0 0
  %4940 = vmatprep.mubr.bf16.mxu0 0
  %4941 = vmatmul.mubr.bf16.gmra.mrb[0].mxu0 %v4906
  %v4942 = vpop.f32.mrb[0].mxu0
  %v4943 = vadd.f32 %v4870, %v4942
  %v4944 = vpop.f32.mrb[0].mxu0
  %v4945 = vpop.f32.mrb[0].mxu0
  %v4946 = vpop.f32.mrb[0].mxu0
  %4947 = vdwg.mxu0
  %s4948 = scalar_lea.vmem [#allocation4], 4
  %v4949 = vld [vmem:[%s4948] ss:$16 sm:$0x3]
  %v4950 = vld [vmem:[%s4948] ss:$16 sm:$0xc]
  %v4951 = vor.u32 %v4949, %v4950
  %v4952 = vld [vmem:[%s4948] ss:$16 sm:$0x30]
  %v4953 = vor.u32 %v4951, %v4952
  %v4954 = vld [vmem:[%s4948] ss:$16 sm:$0xc0]
  %v4955 = vor.u32 %v4953, %v4954
  %s4956 = scalar_lea.vmem [#allocation4], 5
  %v4957 = vld [vmem:[%s4956] ss:$16 sm:$0x3]
  %v4958 = vld [vmem:[%s4956] ss:$16 sm:$0xc]
  %v4959 = vor.u32 %v4957, %v4958
  %v4960 = vld [vmem:[%s4956] ss:$16 sm:$0x30]
  %v4961 = vor.u32 %v4959, %v4960
  %v4962 = vld [vmem:[%s4956] ss:$16 sm:$0xc0]
  %v4963 = vor.u32 %v4961, %v4962
  %v4964 = vmax.f32 %v4955, %v4963
  %v4965 = vpack.c.bf16 %v4964, %v4964
  %s4966 = scalar_lea.vmem %s7, 80
  %v4967 = vld [vmem:[%s4966] sm:$0xf]
  %v4968 = vld [vmem:[%s4966 + $0x4] sm:$0xf]
  %v4969 = vld [vmem:[%s4966 + $0x8] sm:$0xf]
  %v4970 = vld [vmem:[%s4966 + $0xc] sm:$0xf]
  %v4971 = vld [vmem:[%s4966 + $0x10] sm:$0xf]
  %v4972 = vld [vmem:[%s4966 + $0x14] sm:$0xf]
  %v4973 = vld [vmem:[%s4966 + $0x18] sm:$0xf]
  %v4974 = vld [vmem:[%s4966 + $0x1c] sm:$0xf]
  %v4975 = vld [vmem:[%s4966 + $0x20] sm:$0xf]
  %v4976 = vld [vmem:[%s4966 + $0x24] sm:$0xf]
  %v4987 = vunpack.c.l.b16 %v4967
  %v4988 = vunpack.c.l.b16 %v4968
  %v4989 = vunpack.c.l.b16 %v4969
  %v4990 = vunpack.c.l.b16 %v4970
  %v4991 = vunpack.c.l.b16 %v4971
  %v4992 = vunpack.c.l.b16 %v4972
  %v4993 = vunpack.c.l.b16 %v4973
  %v4994 = vunpack.c.l.b16 %v4974
  %v4995 = vunpack.c.l.b16 %v4975
  %v4996 = vunpack.c.l.b16 %v4976
  %v4997 = vpack.c.b16 %v4988, %v4987
  %v4998 = vpack.c.b16 %v4990, %v4989
  %v4999 = vpack.c.b16 %v4992, %v4991
  %v5000 = vpack.c.b16 %v4994, %v4993
  %v5001 = vpack.c.b16 %v4996, %v4995
  %v5008 = vsel %vm4729, %v4965, 0
  %5010 = vmatprep.subr.bf16.mxu0 0
  %5011 = vmatpush1.bf16.msra.mxu0 %v4997
  %5012 = vmatprep.subr.bf16.mxu0 0
  %5013 = vmatpush1.bf16.msra.mxu0 %v4998
  %5014 = vmatprep.subr.bf16.mxu0 0
  %5015 = vmatpush1.bf16.msra.mxu0 %v4999
  %5016 = vmatprep.subr.bf16.mxu0 0
  %5017 = vmatpush1.bf16.msra.mxu0 %v5000
  %5018 = vmatprep.subr.bf16.mxu0 0
  %5019 = vmatpush1.bf16.msra.mxu0 %v5001
  %5020 = vmatprep.subr.bf16.mxu0 0
  %5021 = vmatpush1.bf16.msra.mxu0 0
  %5022 = vmatprep.subr.bf16.mxu0 0
  %5023 = vmatpush1.bf16.msra.mxu0 0
  %5024 = vmatprep.subr.bf16.mxu0 0
  %5025 = vmatpush1.bf16.msra.mxu0 0
  %5026 = vmatprep.subr.bf16.mxu0 0
  %5027 = vmatpush1.bf16.msra.mxu0 0
  %5028 = vmatprep.subr.bf16.mxu0 0
  %5029 = vmatpush1.bf16.msra.mxu0 0
  %5030 = vmatprep.subr.bf16.mxu0 0
  %5031 = vmatpush1.bf16.msra.mxu0 0
  %5032 = vmatprep.subr.bf16.mxu0 0
  %5033 = vmatpush1.bf16.msra.mxu0 0
  %5034 = vmatprep.subr.bf16.mxu0 0
  %5035 = vmatpush1.bf16.msra.mxu0 0
  %5036 = vmatprep.subr.bf16.mxu0 0
  %5037 = vmatpush1.bf16.msra.mxu0 0
  %5038 = vmatprep.subr.bf16.mxu0 0
  %5039 = vmatpush1.bf16.msra.mxu0 0
  %5040 = vmatprep.subr.bf16.mxu0 0
  %5041 = vmatpush1.bf16.msra.mxu0 0
  %5042 = vmatprep.mubr.bf16.mxu0 0
  %5043 = vmatmul.mubr.bf16.gmra.mrb[0].mxu0 %v5008
  %v5044 = vpop.f32.mrb[0].mxu0
  %v5045 = vadd.f32 0.0, %v5044
  %v5046 = vpop.f32.mrb[0].mxu0
  %v5047 = vpop.f32.mrb[0].mxu0
  %v5048 = vpop.f32.mrb[0].mxu0
  %5049 = vdwg.mxu0
  %v5050 = vadd.f32 %v4943, %v5045
  %s5051 = scalar_lea.vmem [#allocation4], 6
  %v5052 = vld [vmem:[%s5051] ss:$16 sm:$0x3]
  %v5053 = vld [vmem:[%s5051] ss:$16 sm:$0xc]
  %v5054 = vor.u32 %v5052, %v5053
  %v5055 = vld [vmem:[%s5051] ss:$16 sm:$0x30]
  %v5056 = vor.u32 %v5054, %v5055
  %v5057 = vld [vmem:[%s5051] ss:$16 sm:$0xc0]
  %v5058 = vor.u32 %v5056, %v5057
  %s5059 = scalar_lea.vmem [#allocation4], 7
  %v5060 = vld [vmem:[%s5059] ss:$16 sm:$0x3]
  %v5061 = vld [vmem:[%s5059] ss:$16 sm:$0xc]
  %v5062 = vor.u32 %v5060, %v5061
  %v5063 = vld [vmem:[%s5059] ss:$16 sm:$0x30]
  %v5064 = vor.u32 %v5062, %v5063
  %v5065 = vld [vmem:[%s5059] ss:$16 sm:$0xc0]
  %v5066 = vor.u32 %v5064, %v5065
  %v5067 = vmax.f32 %v5058, %v5066
  %v5068 = vpack.c.bf16 %v5067, %v5067
  %s5069 = scalar_lea.vmem %s7, 120
  %v5070 = vld [vmem:[%s5069] sm:$0xf]
  %v5071 = vld [vmem:[%s5069 + $0x4] sm:$0xf]
  %v5072 = vld [vmem:[%s5069 + $0x8] sm:$0xf]
  %v5073 = vld [vmem:[%s5069 + $0xc] sm:$0xf]
  %v5074 = vld [vmem:[%s5069 + $0x10] sm:$0xf]
  %v5075 = vld [vmem:[%s5069 + $0x14] sm:$0xf]
  %v5076 = vld [vmem:[%s5069 + $0x18] sm:$0xf]
  %v5077 = vld [vmem:[%s5069 + $0x1c] sm:$0xf]
  %v5078 = vld [vmem:[%s5069 + $0x20] sm:$0xf]
  %v5079 = vld [vmem:[%s5069 + $0x24] sm:$0xf]
  %v5090 = vunpack.c.l.b16 %v5070
  %v5091 = vunpack.c.l.b16 %v5071
  %v5092 = vunpack.c.l.b16 %v5072
  %v5093 = vunpack.c.l.b16 %v5073
  %v5094 = vunpack.c.l.b16 %v5074
  %v5095 = vunpack.c.l.b16 %v5075
  %v5096 = vunpack.c.l.b16 %v5076
  %v5097 = vunpack.c.l.b16 %v5077
  %v5098 = vunpack.c.l.b16 %v5078
  %v5099 = vunpack.c.l.b16 %v5079
  %v5100 = vpack.c.b16 %v5091, %v5090
  %v5101 = vpack.c.b16 %v5093, %v5092
  %v5102 = vpack.c.b16 %v5095, %v5094
  %v5103 = vpack.c.b16 %v5097, %v5096
  %v5104 = vpack.c.b16 %v5099, %v5098
  %v5111 = vsel %vm4729, %v5068, 0
  %5113 = vmatprep.subr.bf16.mxu0 0
  %5114 = vmatpush1.bf16.msra.mxu0 %v5100
  %5115 = vmatprep.subr.bf16.mxu0 0
  %5116 = vmatpush1.bf16.msra.mxu0 %v5101
  %5117 = vmatprep.subr.bf16.mxu0 0
  %5118 = vmatpush1.bf16.msra.mxu0 %v5102
  %5119 = vmatprep.subr.bf16.mxu0 0
  %5120 = vmatpush1.bf16.msra.mxu0 %v5103
  %5121 = vmatprep.subr.bf16.mxu0 0
  %5122 = vmatpush1.bf16.msra.mxu0 %v5104
  %5123 = vmatprep.subr.bf16.mxu0 0
  %5124 = vmatpush1.bf16.msra.mxu0 0
  %5125 = vmatprep.subr.bf16.mxu0 0
  %5126 = vmatpush1.bf16.msra.mxu0 0
  %5127 = vmatprep.subr.bf16.mxu0 0
  %5128 = vmatpush1.bf16.msra.mxu0 0
  %5129 = vmatprep.subr.bf16.mxu0 0
  %5130 = vmatpush1.bf16.msra.mxu0 0
  %5131 = vmatprep.subr.bf16.mxu0 0
  %5132 = vmatpush1.bf16.msra.mxu0 0
  %5133 = vmatprep.subr.bf16.mxu0 0
  %5134 = vmatpush1.bf16.msra.mxu0 0
  %5135 = vmatprep.subr.bf16.mxu0 0
  %5136 = vmatpush1.bf16.msra.mxu0 0
  %5137 = vmatprep.subr.bf16.mxu0 0
  %5138 = vmatpush1.bf16.msra.mxu0 0
  %5139 = vmatprep.subr.bf16.mxu0 0
  %5140 = vmatpush1.bf16.msra.mxu0 0
  %5141 = vmatprep.subr.bf16.mxu0 0
  %5142 = vmatpush1.bf16.msra.mxu0 0
  %5143 = vmatprep.subr.bf16.mxu0 0
  %5144 = vmatpush1.bf16.msra.mxu0 0
  %5145 = vmatprep.mubr.bf16.mxu0 0
  %5146 = vmatmul.mubr.bf16.gmra.mrb[0].mxu0 %v5111
  %v5147 = vpop.f32.mrb[0].mxu0
  %v5148 = vadd.f32 0.0, %v5147
  %v5149 = vpop.f32.mrb[0].mxu0
  %v5150 = vpop.f32.mrb[0].mxu0
  %v5151 = vpop.f32.mrb[0].mxu0
  %5152 = vdwg.mxu0
  %v5153 = vadd.f32 %v5050, %v5148
  %s5154 = scalar_lea.vmem [#allocation4], 8
  %v5155 = vld [vmem:[%s5154] ss:$16 sm:$0x3]
  %v5156 = vld [vmem:[%s5154] ss:$16 sm:$0xc]
  %v5157 = vor.u32 %v5155, %v5156
  %v5158 = vld [vmem:[%s5154] ss:$16 sm:$0x30]
  %v5159 = vor.u32 %v5157, %v5158
  %v5160 = vld [vmem:[%s5154] ss:$16 sm:$0xc0]
  %v5161 = vor.u32 %v5159, %v5160
  %s5162 = scalar_lea.vmem [#allocation4], 9
  %v5163 = vld [vmem:[%s5162] ss:$16 sm:$0x3]
  %v5164 = vld [vmem:[%s5162] ss:$16 sm:$0xc]
  %v5165 = vor.u32 %v5163, %v5164
  %v5166 = vld [vmem:[%s5162] ss:$16 sm:$0x30]
  %v5167 = vor.u32 %v5165, %v5166
  %v5168 = vld [vmem:[%s5162] ss:$16 sm:$0xc0]
  %v5169 = vor.u32 %v5167, %v5168
  %v5170 = vmax.f32 %v5161, %v5169
  %v5171 = vpack.c.bf16 %v5170, %v5170
  %s5172 = scalar_lea.vmem %s7, 160
  %v5173 = vld [vmem:[%s5172] sm:$0xf]
  %v5174 = vld [vmem:[%s5172 + $0x4] sm:$0xf]
  %v5175 = vld [vmem:[%s5172 + $0x8] sm:$0xf]
  %v5176 = vld [vmem:[%s5172 + $0xc] sm:$0xf]
  %v5177 = vld [vmem:[%s5172 + $0x10] sm:$0xf]
  %v5178 = vld [vmem:[%s5172 + $0x14] sm:$0xf]
  %v5179 = vld [vmem:[%s5172 + $0x18] sm:$0xf]
  %v5180 = vld [vmem:[%s5172 + $0x1c] sm:$0xf]
  %v5181 = vld [vmem:[%s5172 + $0x20] sm:$0xf]
  %v5182 = vld [vmem:[%s5172 + $0x24] sm:$0xf]
  %v5193 = vunpack.c.l.b16 %v5173
  %v5194 = vunpack.c.l.b16 %v5174
  %v5195 = vunpack.c.l.b16 %v5175
  %v5196 = vunpack.c.l.b16 %v5176
  %v5197 = vunpack.c.l.b16 %v5177
  %v5198 = vunpack.c.l.b16 %v5178
  %v5199 = vunpack.c.l.b16 %v5179
  %v5200 = vunpack.c.l.b16 %v5180
  %v5201 = vunpack.c.l.b16 %v5181
  %v5202 = vunpack.c.l.b16 %v5182
  %v5203 = vpack.c.b16 %v5194, %v5193
  %v5204 = vpack.c.b16 %v5196, %v5195
  %v5205 = vpack.c.b16 %v5198, %v5197
  %v5206 = vpack.c.b16 %v5200, %v5199
  %v5207 = vpack.c.b16 %v5202, %v5201
  %v5214 = vsel %vm4729, %v5171, 0
  %5216 = vmatprep.subr.bf16.mxu0 0
  %5217 = vmatpush1.bf16.msra.mxu0 %v5203
  %5218 = vmatprep.subr.bf16.mxu0 0
  %5219 = vmatpush1.bf16.msra.mxu0 %v5204
  %5220 = vmatprep.subr.bf16.mxu0 0
  %5221 = vmatpush1.bf16.msra.mxu0 %v5205
  %5222 = vmatprep.subr.bf16.mxu0 0
  %5223 = vmatpush1.bf16.msra.mxu0 %v5206
  %5224 = vmatprep.subr.bf16.mxu0 0
  %5225 = vmatpush1.bf16.msra.mxu0 %v5207
  %5226 = vmatprep.subr.bf16.mxu0 0
  %5227 = vmatpush1.bf16.msra.mxu0 0
  %5228 = vmatprep.subr.bf16.mxu0 0
  %5229 = vmatpush1.bf16.msra.mxu0 0
  %5230 = vmatprep.subr.bf16.mxu0 0
  %5231 = vmatpush1.bf16.msra.mxu0 0
  %5232 = vmatprep.subr.bf16.mxu0 0
  %5233 = vmatpush1.bf16.msra.mxu0 0
  %5234 = vmatprep.subr.bf16.mxu0 0
  %5235 = vmatpush1.bf16.msra.mxu0 0
  %5236 = vmatprep.subr.bf16.mxu0 0
  %5237 = vmatpush1.bf16.msra.mxu0 0
  %5238 = vmatprep.subr.bf16.mxu0 0
  %5239 = vmatpush1.bf16.msra.mxu0 0
  %5240 = vmatprep.subr.bf16.mxu0 0
  %5241 = vmatpush1.bf16.msra.mxu0 0
  %5242 = vmatprep.subr.bf16.mxu0 0
  %5243 = vmatpush1.bf16.msra.mxu0 0
  %5244 = vmatprep.subr.bf16.mxu0 0
  %5245 = vmatpush1.bf16.msra.mxu0 0
  %5246 = vmatprep.subr.bf16.mxu0 0
  %5247 = vmatpush1.bf16.msra.mxu0 0
  %5248 = vmatprep.mubr.bf16.mxu0 0
  %5249 = vmatmul.mubr.bf16.gmra.mrb[0].mxu0 %v5214
  %v5250 = vpop.f32.mrb[0].mxu0
  %v5251 = vadd.f32 0.0, %v5250
  %v5252 = vpop.f32.mrb[0].mxu0
  %v5253 = vpop.f32.mrb[0].mxu0
  %v5254 = vpop.f32.mrb[0].mxu0
  %5255 = vdwg.mxu0
  %v5256 = vadd.f32 %v5153, %v5251
  %v5257 = vld [vmem:[%s8] sm:$0x1]
  %v5259 = vlaneseq
  %v5260 = vshrl.u32 %v5259, 7
  %v5261 = vsub.s32 0, %v5260
  %v5262 = vrot.slane %v5257, %v5261
  %v5264 = vadd.f32 %v5256, %v5262
  %v5265 = vmax.f32 %v5264, 0.0
  %v5266 = vpack.c.bf16 %v5265, %v5265
  %v5267 = vld [vmem:[%s9] sm:$0xf]
  %v5268 = vld [vmem:[%s9 + $0x4] sm:$0xf]
  %v5269 = vld [vmem:[%s9 + $0x8] sm:$0xf]
  %v5270 = vld [vmem:[%s9 + $0xc] sm:$0xf]
  %v5271 = vld [vmem:[%s9 + $0x10] sm:$0xf]
  %v5272 = vld [vmem:[%s9 + $0x14] sm:$0xf]
  %v5273 = vld [vmem:[%s9 + $0x18] sm:$0xf]
  %v5274 = vld [vmem:[%s9 + $0x1c] sm:$0xf]
  %v5275 = vld [vmem:[%s9 + $0x20] sm:$0xf]
  %v5276 = vld [vmem:[%s9 + $0x24] sm:$0xf]
  %v5277 = vld [vmem:[%s9 + $0x28] sm:$0xf]
  %v5278 = vld [vmem:[%s9 + $0x2c] sm:$0xf]
  %v5279 = vld [vmem:[%s9 + $0x30] sm:$0xf]
  %v5280 = vld [vmem:[%s9 + $0x34] sm:$0xf]
  %v5281 = vld [vmem:[%s9 + $0x38] sm:$0xf]
  %v5282 = vld [vmem:[%s9 + $0x3c] sm:$0xf]
  %v5283 = vld [vmem:[%s10] sm:$0x1]
  %v5285 = vlaneseq
  %v5286 = vshrl.u32 %v5285, 7
  %v5287 = vsub.s32 0, %v5286
  %v5288 = vrot.slane %v5283, %v5287
  %v5306 = vunpack.c.l.b16 %v5267
  %v5307 = vunpack.c.l.b16 %v5268
  %v5308 = vunpack.c.l.b16 %v5269
  %v5309 = vunpack.c.l.b16 %v5270
  %v5310 = vunpack.c.l.b16 %v5271
  %v5311 = vunpack.c.l.b16 %v5272
  %v5312 = vunpack.c.l.b16 %v5273
  %v5313 = vunpack.c.l.b16 %v5274
  %v5314 = vunpack.c.l.b16 %v5275
  %v5315 = vunpack.c.l.b16 %v5276
  %v5316 = vunpack.c.l.b16 %v5277
  %v5317 = vunpack.c.l.b16 %v5278
  %v5318 = vunpack.c.l.b16 %v5279
  %v5319 = vunpack.c.l.b16 %v5280
  %v5320 = vunpack.c.l.b16 %v5281
  %v5321 = vunpack.c.l.b16 %v5282
  %v5322 = vpack.c.b16 %v5307, %v5306
  %v5323 = vpack.c.b16 %v5309, %v5308
  %v5324 = vpack.c.b16 %v5311, %v5310
  %v5325 = vpack.c.b16 %v5313, %v5312
  %v5326 = vpack.c.b16 %v5315, %v5314
  %v5327 = vpack.c.b16 %v5317, %v5316
  %v5328 = vpack.c.b16 %v5319, %v5318
  %v5329 = vpack.c.b16 %v5321, %v5320
  %5338 = vmatprep.subr.bf16.mxu0 0
  %5339 = vmatpush1.bf16.msra.mxu0 %v5322
  %5340 = vmatprep.subr.bf16.mxu0 0
  %5341 = vmatpush1.bf16.msra.mxu0 %v5323
  %5342 = vmatprep.subr.bf16.mxu0 0
  %5343 = vmatpush1.bf16.msra.mxu0 %v5324
  %5344 = vmatprep.subr.bf16.mxu0 0
  %5345 = vmatpush1.bf16.msra.mxu0 %v5325
  %5346 = vmatprep.subr.bf16.mxu0 0
  %5347 = vmatpush1.bf16.msra.mxu0 %v5326
  %5348 = vmatprep.subr.bf16.mxu0 0
  %5349 = vmatpush1.bf16.msra.mxu0 %v5327
  %5350 = vmatprep.subr.bf16.mxu0 0
  %5351 = vmatpush1.bf16.msra.mxu0 %v5328
  %5352 = vmatprep.subr.bf16.mxu0 0
  %5353 = vmatpush1.bf16.msra.mxu0 %v5329
  %5354 = vmatprep.subr.bf16.mxu0 0
  %5355 = vmatpush1.bf16.msra.mxu0 0
  %5356 = vmatprep.subr.bf16.mxu0 0
  %5357 = vmatpush1.bf16.msra.mxu0 0
  %5358 = vmatprep.subr.bf16.mxu0 0
  %5359 = vmatpush1.bf16.msra.mxu0 0
  %5360 = vmatprep.subr.bf16.mxu0 0
  %5361 = vmatpush1.bf16.msra.mxu0 0
  %5362 = vmatprep.subr.bf16.mxu0 0
  %5363 = vmatpush1.bf16.msra.mxu0 0
  %5364 = vmatprep.subr.bf16.mxu0 0
  %5365 = vmatpush1.bf16.msra.mxu0 0
  %5366 = vmatprep.subr.bf16.mxu0 0
  %5367 = vmatpush1.bf16.msra.mxu0 0
  %5368 = vmatprep.subr.bf16.mxu0 0
  %5369 = vmatpush1.bf16.msra.mxu0 0
  %5370 = vmatprep.mubr.bf16.mxu0 0
  %5371 = vmatmul.mubr.bf16.gmra.mrb[0].mxu0 %v5266
  %v5372 = vpop.f32.mrb[0].mxu0
  %v5373 = vadd.f32 %v5288, %v5372
  %v5374 = vpop.f32.mrb[0].mxu0
  %v5375 = vpop.f32.mrb[0].mxu0
  %v5376 = vpop.f32.mrb[0].mxu0
  %5377 = vdwg.mxu0
  %v5378 = vmax.f32 %v5373, 0.0
  %v5379 = vpack.c.bf16 %v5378, %v5378
  %v5380 = vld [vmem:[%s11] sm:$0xf]
  %v5381 = vld [vmem:[%s11 + $0x4] sm:$0xf]
  %v5382 = vld [vmem:[%s11 + $0x8] sm:$0xf]
  %v5383 = vld [vmem:[%s11 + $0xc] sm:$0xf]
  %v5384 = vld [vmem:[%s11 + $0x10] sm:$0xf]
  %v5385 = vld [vmem:[%s11 + $0x14] sm:$0xf]
  %v5386 = vld [vmem:[%s11 + $0x18] sm:$0xf]
  %v5387 = vld [vmem:[%s11 + $0x1c] sm:$0xf]
  %v5388 = vld [vmem:[%s11 + $0x20] sm:$0xf]
  %v5389 = vld [vmem:[%s11 + $0x24] sm:$0xf]
  %v5390 = vld [vmem:[%s11 + $0x28] sm:$0xf]
  %v5391 = vld [vmem:[%s11 + $0x2c] sm:$0xf]
  %v5392 = vld [vmem:[%s11 + $0x30] sm:$0xf]
  %v5393 = vld [vmem:[%s11 + $0x34] sm:$0xf]
  %v5394 = vld [vmem:[%s11 + $0x38] sm:$0xf]
  %v5395 = vld [vmem:[%s11 + $0x3c] sm:$0xf]
  %v5396 = vld [vmem:[%s12] sm:$0x1]
  %v5398 = vlaneseq
  %v5399 = vshrl.u32 %v5398, 7
  %v5400 = vsub.s32 0, %v5399
  %v5401 = vrot.slane %v5396, %v5400
  %v5419 = vunpack.c.l.b16 %v5380
  %v5420 = vunpack.c.l.b16 %v5381
  %v5421 = vunpack.c.l.b16 %v5382
  %v5422 = vunpack.c.l.b16 %v5383
  %v5423 = vunpack.c.l.b16 %v5384
  %v5424 = vunpack.c.l.b16 %v5385
  %v5425 = vunpack.c.l.b16 %v5386
  %v5426 = vunpack.c.l.b16 %v5387
  %v5427 = vunpack.c.l.b16 %v5388
  %v5428 = vunpack.c.l.b16 %v5389
  %v5429 = vunpack.c.l.b16 %v5390
  %v5430 = vunpack.c.l.b16 %v5391
  %v5431 = vunpack.c.l.b16 %v5392
  %v5432 = vunpack.c.l.b16 %v5393
  %v5433 = vunpack.c.l.b16 %v5394
  %v5434 = vunpack.c.l.b16 %v5395
  %v5435 = vpack.c.b16 %v5420, %v5419
  %v5436 = vpack.c.b16 %v5422, %v5421
  %v5437 = vpack.c.b16 %v5424, %v5423
  %v5438 = vpack.c.b16 %v5426, %v5425
  %v5439 = vpack.c.b16 %v5428, %v5427
  %v5440 = vpack.c.b16 %v5430, %v5429
  %v5441 = vpack.c.b16 %v5432, %v5431
  %v5442 = vpack.c.b16 %v5434, %v5433
  %5451 = vmatprep.subr.bf16.mxu0 0
  %5452 = vmatpush1.bf16.msra.mxu0 %v5435
  %5453 = vmatprep.subr.bf16.mxu0 0
  %5454 = vmatpush1.bf16.msra.mxu0 %v5436
  %5455 = vmatprep.subr.bf16.mxu0 0
  %5456 = vmatpush1.bf16.msra.mxu0 %v5437
  %5457 = vmatprep.subr.bf16.mxu0 0
  %5458 = vmatpush1.bf16.msra.mxu0 %v5438
  %5459 = vmatprep.subr.bf16.mxu0 0
  %5460 = vmatpush1.bf16.msra.mxu0 %v5439
  %5461 = vmatprep.subr.bf16.mxu0 0
  %5462 = vmatpush1.bf16.msra.mxu0 %v5440
  %5463 = vmatprep.subr.bf16.mxu0 0
  %5464 = vmatpush1.bf16.msra.mxu0 %v5441
  %5465 = vmatprep.subr.bf16.mxu0 0
  %5466 = vmatpush1.bf16.msra.mxu0 %v5442
  %5467 = vmatprep.subr.bf16.mxu0 0
  %5468 = vmatpush1.bf16.msra.mxu0 0
  %5469 = vmatprep.subr.bf16.mxu0 0
  %5470 = vmatpush1.bf16.msra.mxu0 0
  %5471 = vmatprep.subr.bf16.mxu0 0
  %5472 = vmatpush1.bf16.msra.mxu0 0
  %5473 = vmatprep.subr.bf16.mxu0 0
  %5474 = vmatpush1.bf16.msra.mxu0 0
  %5475 = vmatprep.subr.bf16.mxu0 0
  %5476 = vmatpush1.bf16.msra.mxu0 0
  %5477 = vmatprep.subr.bf16.mxu0 0
  %5478 = vmatpush1.bf16.msra.mxu0 0
  %5479 = vmatprep.subr.bf16.mxu0 0
  %5480 = vmatpush1.bf16.msra.mxu0 0
  %5481 = vmatprep.subr.bf16.mxu0 0
  %5482 = vmatpush1.bf16.msra.mxu0 0
  %5483 = vmatprep.mubr.bf16.mxu0 0
  %5484 = vmatmul.mubr.bf16.gmra.mrb[0].mxu0 %v5379
  %v5485 = vpop.f32.mrb[0].mxu0
  %v5486 = vadd.f32 %v5401, %v5485
  %v5487 = vpop.f32.mrb[0].mxu0
  %v5488 = vpop.f32.mrb[0].mxu0
  %v5489 = vpop.f32.mrb[0].mxu0
  %5490 = vdwg.mxu0
  %5491 = vst [vmem:[%s13] sm:$0xff] %v5486
  // Predicated region
  $region54: #{cnn_forward.1} parent=0 // pred_check
    _
  $region55: #{cnn_forward.1} parent=0 // pred_check_branch
    %5493 = sbr.rel (0) target = $region57
  $region56: #{cnn_forward.1} parent=0 // pred_region
    _
  $region57: #{cnn_forward.1} parent=0 // pred_fallthru
    _
  // Predicated region
  $region58: #{cnn_forward.1} parent=0 // pred_check
    _
  $region59: #{cnn_forward.1} parent=0 // pred_check_branch
    %5495 = sbr.rel (0) target = $region61
  $region60: #{cnn_forward.1} parent=0 // pred_region
    _
  $region61: #{cnn_forward.1} parent=0 // pred_fallthru
    _

</llo_original>
